<compile_context>
chip_gen: v5e
topology: v5e:2x2
jax: 0.10.0
libtpu: 0.0.40
codegen_flags: <defaults>
</compile_context>

<pallas_src>
import functools

import jax
import jax.numpy as jnp
from jax.experimental import pallas as pl
from jax.experimental.pallas import tpu as pltpu

NUM_HEADS = 4
EPS = 1e-5


def _attention_block_kernel(x_ref, gnw_ref, gnb_ref, win_ref, bin_ref,
                            wout_ref, bout_ref, o_ref, o_all_ref,
                            *, num_heads, q_tile):
    C, S = o_all_ref.shape
    hs = C // num_heads
    inv_n = 1.0 / float(C * S)
    scale = 1.0 / float(hs) ** 0.5
    mm_dtype = win_ref.dtype            # bf16 MXU operands, f32 accumulation

    x = x_ref[0]                        # (C, S), native channels-first layout

    # ---- GroupNorm(num_groups=1): two-pass stats (mean, then centered var)
    # over the whole (C, S) slab, all in f32 (avoids E[x^2]-E[x]^2 cancellation).
    mean = jnp.sum(x) * inv_n
    xc = x - mean
    var = jnp.sum(xc * xc) * inv_n                      # biased (unbiased=False)
    inv_std = jax.lax.rsqrt(var + EPS)
    xn = xc * inv_std * gnw_ref[...] + gnb_ref[...]     # (C, S)

    # ---- in_proj in channels-first layout: (3C, C) @ (C, S) -> (3C, S).
    # PyTorch (out, in) weight layout is already the stationary-LHS orientation,
    # so no slab or weight transpose is needed and S stays lane-dense.
    qkv = jax.lax.dot_general(
        win_ref[...], xn.astype(mm_dtype),
        (((1,), (0,)), ((), ())),
        preferred_element_type=jnp.float32) + bin_ref[...]       # (3C, S) f32

    n_q = S // q_tile
    for h in range(num_heads):                # heads are sublane-aligned slices
        q_h = qkv[h * hs:(h + 1) * hs, :].astype(mm_dtype)           # (hs, S)
        k_h = qkv[C + h * hs:C + (h + 1) * hs, :].astype(mm_dtype)   # (hs, S)
        v_h = qkv[2 * C + h * hs:2 * C + (h + 1) * hs, :].astype(mm_dtype)

        # Query tiling keeps the score slab at (S, q_tile) instead of (S, S).
        # TODO(synk): add kv tiling with online softmax (flash-style) + a
        # parallel q-tile grid axis for production S.
        for qt in range(n_q):
            q_blk = q_h[:, qt * q_tile:(qt + 1) * q_tile]            # (hs, tq)
            # scores^T: (S_k, tq) -- q index on lanes so the softmax stats are
            # (1, tq) and the deferred normalization is a cheap lane-broadcast,
            # and the p@v matmul below is in standard MXU orientation.
            s_t = jax.lax.dot_general(
                k_h, q_blk, (((0,), (0,)), ((), ())),
                preferred_element_type=jnp.float32) * scale          # (S, tq)
            m = jnp.max(s_t, axis=0, keepdims=True)                  # (1, tq)
            p_t = jnp.exp(s_t - m)                                   # f32 (EUP)
            l = jnp.sum(p_t, axis=0, keepdims=True)                  # (1, tq)
            # unnormalized head output, channels-first orientation
            o_blk = jax.lax.dot_general(
                v_h, p_t.astype(mm_dtype), (((1,), (0,)), ((), ())),
                preferred_element_type=jnp.float32)                  # (hs, tq)
            o_blk = o_blk * pl.reciprocal(l, approx=True)
            o_all_ref[h * hs:(h + 1) * hs,
                      qt * q_tile:(qt + 1) * q_tile] = o_blk

    # ---- single fused out_proj over all heads: (C, C) @ (C, S) -> (C, S);
    # residual and bias folded in; the store stays lane-dense in (C, S).
    out = jax.lax.dot_general(
        wout_ref[...], o_all_ref[...].astype(mm_dtype),
        (((1,), (0,)), ((), ())),
        preferred_element_type=jnp.float32)                          # (C, S)
    o_ref[0] = x + out + bout_ref[...]


def attention_block(x_nchw, gn_w, gn_b, w_in, b_in, w_out, b_out,
                    *, num_heads=NUM_HEADS, q_tile=256,
                    matmul_dtype=jnp.bfloat16):
    """x_nchw: (B, C, H, W) f32. Linear weights in PyTorch (out, in) layout."""
    B, C, H, W = x_nchw.shape
    assert C % num_heads == 0, "channels must be divisible by num_heads"
    S = H * W
    hs = C // num_heads
    if S % q_tile != 0:
        q_tile = S                       # fall back to a single query tile
    x_nat = x_nchw.reshape(B, C, S)      # layout-only reshape, no transpose

    # One-time (free, wrapper-side) casts of the MXU weight operands to bf16;
    # biases / GroupNorm affine params stay f32 (added after f32 accumulation).
    w_in_mm = w_in.astype(matmul_dtype)       # (3C, C)
    w_out_mm = w_out.astype(matmul_dtype)     # (C, C)

    kernel = functools.partial(_attention_block_kernel,
                               num_heads=num_heads, q_tile=q_tile)

    flops = 2 * B * (3 * C * C * S + C * C * S) + 4 * B * num_heads * S * S * hs
    transcendentals = B * num_heads * S * S
    bytes_accessed = 2 * B * C * S * 4 + (3 * C * C + C * C) * 2 + 6 * C * 4

    # Per-step VMEM: double-buffered x/out blocks + qkv + score tile + o_all
    # scratch + weights (2x headroom); clamp into [32, 64] MiB so the scoped
    # limit is valid on every generation (v7x physical VMEM is 64 MiB).
    vmem_est = 4 * (2 * 2 * C * S + 3 * C * S + 2 * q_tile * S + C * S) \
        + 2 * (3 * C * C + C * C) + 4 * 8 * C
    vmem_limit = int(min(max(2 * vmem_est, 32 * 1024 * 1024), 64 * 1024 * 1024))

    out = pl.pallas_call(
        kernel,
        out_shape=jax.ShapeDtypeStruct((B, C, S), jnp.float32),
        grid_spec=pltpu.PrefetchScalarGridSpec(
            num_scalar_prefetch=0,
            grid=(B,),                                   # pipelined over batch
            in_specs=[
                pl.BlockSpec((1, C, S), lambda b: (b, 0, 0)),   # x (per batch)
                pl.BlockSpec((C, 1), lambda b: (0, 0)),         # gn weight
                pl.BlockSpec((C, 1), lambda b: (0, 0)),         # gn bias
                pl.BlockSpec((3 * C, C), lambda b: (0, 0)),     # W_in (out,in)
                pl.BlockSpec((3 * C, 1), lambda b: (0, 0)),     # b_in
                pl.BlockSpec((C, C), lambda b: (0, 0)),         # W_out (out,in)
                pl.BlockSpec((C, 1), lambda b: (0, 0)),         # b_out
            ],
            out_specs=pl.BlockSpec((1, C, S), lambda b: (b, 0, 0)),
            scratch_shapes=[pltpu.VMEM((C, S), jnp.float32)],   # fused-head o
        ),
        compiler_params=pltpu.CompilerParams(
            dimension_semantics=("parallel",),           # feeds both v7x TCs
            vmem_limit_bytes=vmem_limit),
        cost_estimate=pl.CostEstimate(
            flops=int(flops),
            transcendentals=int(transcendentals),
            bytes_accessed=int(bytes_accessed)),
    )(x_nat, gn_w.reshape(C, 1), gn_b.reshape(C, 1), w_in_mm,
      b_in.reshape(3 * C, 1), w_out_mm, b_out.reshape(C, 1))

    return out.reshape(B, C, H, W)


def _reference(x, gn_w, gn_b, w_in, b_in, w_out, b_out):
    """Pure-JAX f32 reference mirroring the PyTorch module (weights (out,in))."""
    B, C, H, W = x.shape
    mean = jnp.mean(x, axis=(1, 2, 3), keepdims=True)
    var = jnp.var(x, axis=(1, 2, 3), keepdims=True)
    xn = (x - mean) / jnp.sqrt(var + EPS)
    xn = xn * gn_w.reshape(1, C, 1, 1) + gn_b.reshape(1, C, 1, 1)
    xs = jnp.transpose(xn, (0, 2, 3, 1)).reshape(B, H * W, C)
    qkv = xs @ w_in.T + b_in
    q, k, v = jnp.split(qkv, 3, axis=-1)
    hs = C // NUM_HEADS

    def split_heads(t):
        return jnp.transpose(t.reshape(B, H * W, NUM_HEADS, hs), (0, 2, 1, 3))

    q, k, v = split_heads(q), split_heads(k), split_heads(v)
    s = jnp.einsum('bhqd,bhkd->bhqk', q, k) / (hs ** 0.5)
    p = jax.nn.softmax(s, axis=-1)
    o = jnp.einsum('bhqk,bhkd->bhqd', p, v)
    o = jnp.transpose(o, (0, 2, 1, 3)).reshape(B, H * W, C)
    o = o @ w_out.T + b_out
    o = jnp.transpose(o.reshape(B, H, W, C), (0, 3, 1, 2))
    return x + o


if __name__ == "__main__":
    # C divisible by num_heads=4 -> hs=8 (sublane-aligned head slices); S=256.
    B, C, H, W = 2, 32, 16, 16
    key = jax.random.PRNGKey(0)
    kx, k1, k2, k3, k4, k5, k6 = jax.random.split(key, 7)

    x = jax.random.normal(kx, (B, C, H, W), dtype=jnp.float32)

    # GroupNorm affine params (learnable; perturbed from the ones/zeros init
    # so the affine path is actually exercised).
    gn_w = 1.0 + 0.1 * jax.random.normal(k5, (C,), dtype=jnp.float32)
    gn_b = 0.1 * jax.random.normal(k6, (C,), dtype=jnp.float32)

    # Linear params in PyTorch nn.Linear layout: weight (out_features, in_features).
    w_in = 0.1 * jax.random.normal(k1, (3 * C, C), dtype=jnp.float32)
    b_in = 0.1 * jax.random.normal(k2, (3 * C,), dtype=jnp.float32)
    w_out = 0.1 * jax.random.normal(k3, (C, C), dtype=jnp.float32)
    b_out = 0.1 * jax.random.normal(k4, (C,), dtype=jnp.float32)

    out = attention_block(x, gn_w, gn_b, w_in, b_in, w_out, b_out)
    out = jax.block_until_ready(out)

    ref = _reference(x, gn_w, gn_b, w_in, b_in, w_out, b_out)
    assert out.shape == (B, C, H, W)
    err = float(jnp.max(jnp.abs(out - ref)))
    # bf16 MXU operands (f32 accumulation) => slightly looser parity vs the
    # pure-f32 reference.
    assert jnp.allclose(out, ref, atol=2e-2, rtol=2e-2), f"max abs err = {err}"

    print("KERNEL_OK")
</pallas_src>

<mosaic_0001>
module attributes {stable_mosaic.version = 11 : i64} {
  func.func @_attention_block_kernel(%arg0: i32, %arg1: memref<1x32x256xf32, #tpu.memory_space<vmem>>, %arg2: memref<32x1xf32, #tpu.memory_space<vmem>>, %arg3: memref<32x1xf32, #tpu.memory_space<vmem>>, %arg4: memref<96x32xbf16, #tpu.memory_space<vmem>>, %arg5: memref<96x1xf32, #tpu.memory_space<vmem>>, %arg6: memref<32x32xbf16, #tpu.memory_space<vmem>>, %arg7: memref<32x1xf32, #tpu.memory_space<vmem>>, %arg8: memref<1x32x256xf32, #tpu.memory_space<vmem>>, %arg9: memref<32x256xf32, #tpu.memory_space<vmem>>) attributes {dimension_semantics = [#tpu.dimension_semantics<parallel>], iteration_bounds = array<i64: 2>, scalar_prefetch = 0 : i64, scratch_operands = 1 : i64, tpu.core_type = #tpu.core_type<tc>, window_params = [{transform_indices = @transform_0, window_bounds = array<i64: 1, 32, 256>}, {pipeline_mode = #tpu.pipeline_mode<synchronous>, transform_indices = @transform_1, window_bounds = array<i64: 32, 1>}, {pipeline_mode = #tpu.pipeline_mode<synchronous>, transform_indices = @transform_2, window_bounds = array<i64: 32, 1>}, {pipeline_mode = #tpu.pipeline_mode<synchronous>, transform_indices = @transform_3, window_bounds = array<i64: 96, 32>}, {pipeline_mode = #tpu.pipeline_mode<synchronous>, transform_indices = @transform_4, window_bounds = array<i64: 96, 1>}, {pipeline_mode = #tpu.pipeline_mode<synchronous>, transform_indices = @transform_5, window_bounds = array<i64: 32, 32>}, {pipeline_mode = #tpu.pipeline_mode<synchronous>, transform_indices = @transform_6, window_bounds = array<i64: 32, 1>}, {transform_indices = @transform_7, window_bounds = array<i64: 1, 32, 256>}]} {
    %c0 = arith.constant 0 : index
    %c0_0 = arith.constant 0 : index
    %c0_1 = arith.constant 0 : index
    %0 = vector.load %arg1[%c0, %c0_0, %c0_1] : memref<1x32x256xf32, #tpu.memory_space<vmem>>, vector<1x32x256xf32>
    %1 = vector.shape_cast %0 : vector<1x32x256xf32> to vector<32x256xf32>
    %2 = vector.shape_cast %1 : vector<32x256xf32> to vector<1x32x256xf32>
    %cst = arith.constant dense<0.000000e+00> : vector<1xf32>
    %3 = vector.multi_reduction <add>, %2, %cst [1, 2] : vector<1x32x256xf32> to vector<1xf32>
    %4 = vector.shape_cast %3 : vector<1xf32> to vector<1x1x1xf32>
    %5 = vector.extract %4[0, 0, 0] : f32 from vector<1x1x1xf32>
    %cst_2 = arith.constant 1.22070313E-4 : f32
    %6 = arith.mulf %5, %cst_2 : f32
    %7 = vector.broadcast %6 : f32 to vector<32x256xf32>
    %8 = arith.subf %1, %7 : vector<32x256xf32>
    %9 = arith.mulf %8, %8 : vector<32x256xf32>
    %10 = vector.shape_cast %9 : vector<32x256xf32> to vector<1x32x256xf32>
    %cst_3 = arith.constant dense<0.000000e+00> : vector<1xf32>
    %11 = vector.multi_reduction <add>, %10, %cst_3 [1, 2] : vector<1x32x256xf32> to vector<1xf32>
    %12 = vector.shape_cast %11 : vector<1xf32> to vector<1x1x1xf32>
    %13 = vector.extract %12[0, 0, 0] : f32 from vector<1x1x1xf32>
    %cst_4 = arith.constant 1.22070313E-4 : f32
    %14 = arith.mulf %13, %cst_4 : f32
    %cst_5 = arith.constant 9.99999974E-6 : f32
    %15 = arith.addf %14, %cst_5 : f32
    %16 = math.rsqrt %15 : f32
    %17 = vector.broadcast %16 : f32 to vector<32x256xf32>
    %18 = arith.mulf %8, %17 : vector<32x256xf32>
    %c0_6 = arith.constant 0 : index
    %c0_7 = arith.constant 0 : index
    %19 = vector.load %arg2[%c0_6, %c0_7] : memref<32x1xf32, #tpu.memory_space<vmem>>, vector<32x1xf32>
    %20 = vector.broadcast %19 : vector<32x1xf32> to vector<32x256xf32>
    %21 = arith.mulf %18, %20 : vector<32x256xf32>
    %c0_8 = arith.constant 0 : index
    %c0_9 = arith.constant 0 : index
    %22 = vector.load %arg3[%c0_8, %c0_9] : memref<32x1xf32, #tpu.memory_space<vmem>>, vector<32x1xf32>
    %23 = vector.broadcast %22 : vector<32x1xf32> to vector<32x256xf32>
    %24 = arith.addf %21, %23 : vector<32x256xf32>
    %c0_10 = arith.constant 0 : index
    %c0_11 = arith.constant 0 : index
    %25 = vector.load %arg4[%c0_10, %c0_11] : memref<96x32xbf16, #tpu.memory_space<vmem>>, vector<96x32xbf16>
    %26 = arith.truncf %24 : vector<32x256xf32> to vector<32x256xbf16>
    %cst_12 = arith.constant dense<0.000000e+00> : vector<96x256xf32>
    %27 = tpu.matmul %25, %26, %cst_12 {dimension_numbers = #tpu.dot_dimension_numbers<[1], [0], [0], [1], [0, 0, 1, 1], [], []>} : vector<96x32xbf16>, vector<32x256xbf16>, vector<96x256xf32> -> vector<96x256xf32>
    %c0_13 = arith.constant 0 : index
    %c0_14 = arith.constant 0 : index
    %28 = vector.load %arg5[%c0_13, %c0_14] : memref<96x1xf32, #tpu.memory_space<vmem>>, vector<96x1xf32>
    %29 = vector.broadcast %28 : vector<96x1xf32> to vector<96x256xf32>
    %30 = arith.addf %27, %29 : vector<96x256xf32>
    %31 = vector.extract_strided_slice %30 {offsets = [0, 0], sizes = [8, 256], strides = [1, 1]} : vector<96x256xf32> to vector<8x256xf32>
    %32 = arith.truncf %31 : vector<8x256xf32> to vector<8x256xbf16>
    %33 = vector.extract_strided_slice %30 {offsets = [32, 0], sizes = [8, 256], strides = [1, 1]} : vector<96x256xf32> to vector<8x256xf32>
    %34 = arith.truncf %33 : vector<8x256xf32> to vector<8x256xbf16>
    %35 = vector.extract_strided_slice %30 {offsets = [64, 0], sizes = [8, 256], strides = [1, 1]} : vector<96x256xf32> to vector<8x256xf32>
    %36 = arith.truncf %35 : vector<8x256xf32> to vector<8x256xbf16>
    %cst_15 = arith.constant dense<0.000000e+00> : vector<256x256xf32>
    %37 = tpu.matmul %34, %32, %cst_15 {dimension_numbers = #tpu.dot_dimension_numbers<[0], [0], [1], [1], [0, 1, 1, 1], [], []>} : vector<8x256xbf16>, vector<8x256xbf16>, vector<256x256xf32> -> vector<256x256xf32>
    %cst_16 = arith.constant 0.353553385 : f32
    %38 = vector.broadcast %cst_16 : f32 to vector<256x256xf32>
    %39 = arith.mulf %37, %38 : vector<256x256xf32>
    %cst_17 = arith.constant dense<0xFF800000> : vector<256xf32>
    %40 = vector.multi_reduction <maximumf>, %39, %cst_17 [0] : vector<256x256xf32> to vector<256xf32>
    %41 = vector.shape_cast %40 : vector<256xf32> to vector<1x256xf32>
    %42 = vector.broadcast %41 : vector<1x256xf32> to vector<256x256xf32>
    %43 = arith.subf %39, %42 : vector<256x256xf32>
    %44 = math.exp %43 : vector<256x256xf32>
    %cst_18 = arith.constant dense<0.000000e+00> : vector<256xf32>
    %45 = vector.multi_reduction <add>, %44, %cst_18 [0] : vector<256x256xf32> to vector<256xf32>
    %46 = vector.shape_cast %45 : vector<256xf32> to vector<1x256xf32>
    %47 = arith.truncf %44 : vector<256x256xf32> to vector<256x256xbf16>
    %cst_19 = arith.constant dense<0.000000e+00> : vector<8x256xf32>
    %48 = tpu.matmul %36, %47, %cst_19 {dimension_numbers = #tpu.dot_dimension_numbers<[1], [0], [0], [1], [0, 0, 1, 1], [], []>} : vector<8x256xbf16>, vector<256x256xbf16>, vector<8x256xf32> -> vector<8x256xf32>
    %49 = tpu.reciprocal %46 {approx = true} : vector<1x256xf32> -> vector<1x256xf32>
    %50 = vector.broadcast %49 : vector<1x256xf32> to vector<8x256xf32>
    %51 = arith.mulf %48, %50 : vector<8x256xf32>
    %c0_20 = arith.constant 0 : index
    %c0_21 = arith.constant 0 : index
    %52 = vector.load %arg9[%c0_20, %c0_21] : memref<32x256xf32, #tpu.memory_space<vmem>>, vector<8x256xf32>
    tpu.vector_store %arg9[%c0_20, %c0_21], %51 {strides = array<i32>} : memref<32x256xf32, #tpu.memory_space<vmem>>, vector<8x256xf32>,
    %53 = vector.extract_strided_slice %30 {offsets = [8, 0], sizes = [8, 256], strides = [1, 1]} : vector<96x256xf32> to vector<8x256xf32>
    %54 = arith.truncf %53 : vector<8x256xf32> to vector<8x256xbf16>
    %55 = vector.extract_strided_slice %30 {offsets = [40, 0], sizes = [8, 256], strides = [1, 1]} : vector<96x256xf32> to vector<8x256xf32>
    %56 = arith.truncf %55 : vector<8x256xf32> to vector<8x256xbf16>
    %57 = vector.extract_strided_slice %30 {offsets = [72, 0], sizes = [8, 256], strides = [1, 1]} : vector<96x256xf32> to vector<8x256xf32>
    %58 = arith.truncf %57 : vector<8x256xf32> to vector<8x256xbf16>
    %cst_22 = arith.constant dense<0.000000e+00> : vector<256x256xf32>
    %59 = tpu.matmul %56, %54, %cst_22 {dimension_numbers = #tpu.dot_dimension_numbers<[0], [0], [1], [1], [0, 1, 1, 1], [], []>} : vector<8x256xbf16>, vector<8x256xbf16>, vector<256x256xf32> -> vector<256x256xf32>
    %cst_23 = arith.constant 0.353553385 : f32
    %60 = vector.broadcast %cst_23 : f32 to vector<256x256xf32>
    %61 = arith.mulf %59, %60 : vector<256x256xf32>
    %cst_24 = arith.constant dense<0xFF800000> : vector<256xf32>
    %62 = vector.multi_reduction <maximumf>, %61, %cst_24 [0] : vector<256x256xf32> to vector<256xf32>
    %63 = vector.shape_cast %62 : vector<256xf32> to vector<1x256xf32>
    %64 = vector.broadcast %63 : vector<1x256xf32> to vector<256x256xf32>
    %65 = arith.subf %61, %64 : vector<256x256xf32>
    %66 = math.exp %65 : vector<256x256xf32>
    %cst_25 = arith.constant dense<0.000000e+00> : vector<256xf32>
    %67 = vector.multi_reduction <add>, %66, %cst_25 [0] : vector<256x256xf32> to vector<256xf32>
    %68 = vector.shape_cast %67 : vector<256xf32> to vector<1x256xf32>
    %69 = arith.truncf %66 : vector<256x256xf32> to vector<256x256xbf16>
    %cst_26 = arith.constant dense<0.000000e+00> : vector<8x256xf32>
    %70 = tpu.matmul %58, %69, %cst_26 {dimension_numbers = #tpu.dot_dimension_numbers<[1], [0], [0], [1], [0, 0, 1, 1], [], []>} : vector<8x256xbf16>, vector<256x256xbf16>, vector<8x256xf32> -> vector<8x256xf32>
    %71 = tpu.reciprocal %68 {approx = true} : vector<1x256xf32> -> vector<1x256xf32>
    %72 = vector.broadcast %71 : vector<1x256xf32> to vector<8x256xf32>
    %73 = arith.mulf %70, %72 : vector<8x256xf32>
    %c8 = arith.constant 8 : index
    %c0_27 = arith.constant 0 : index
    %74 = vector.load %arg9[%c8, %c0_27] : memref<32x256xf32, #tpu.memory_space<vmem>>, vector<8x256xf32>
    tpu.vector_store %arg9[%c8, %c0_27], %73 {strides = array<i32>} : memref<32x256xf32, #tpu.memory_space<vmem>>, vector<8x256xf32>,
    %75 = vector.extract_strided_slice %30 {offsets = [16, 0], sizes = [8, 256], strides = [1, 1]} : vector<96x256xf32> to vector<8x256xf32>
    %76 = arith.truncf %75 : vector<8x256xf32> to vector<8x256xbf16>
    %77 = vector.extract_strided_slice %30 {offsets = [48, 0], sizes = [8, 256], strides = [1, 1]} : vector<96x256xf32> to vector<8x256xf32>
    %78 = arith.truncf %77 : vector<8x256xf32> to vector<8x256xbf16>
    %79 = vector.extract_strided_slice %30 {offsets = [80, 0], sizes = [8, 256], strides = [1, 1]} : vector<96x256xf32> to vector<8x256xf32>
    %80 = arith.truncf %79 : vector<8x256xf32> to vector<8x256xbf16>
    %cst_28 = arith.constant dense<0.000000e+00> : vector<256x256xf32>
    %81 = tpu.matmul %78, %76, %cst_28 {dimension_numbers = #tpu.dot_dimension_numbers<[0], [0], [1], [1], [0, 1, 1, 1], [], []>} : vector<8x256xbf16>, vector<8x256xbf16>, vector<256x256xf32> -> vector<256x256xf32>
    %cst_29 = arith.constant 0.353553385 : f32
    %82 = vector.broadcast %cst_29 : f32 to vector<256x256xf32>
    %83 = arith.mulf %81, %82 : vector<256x256xf32>
    %cst_30 = arith.constant dense<0xFF800000> : vector<256xf32>
    %84 = vector.multi_reduction <maximumf>, %83, %cst_30 [0] : vector<256x256xf32> to vector<256xf32>
    %85 = vector.shape_cast %84 : vector<256xf32> to vector<1x256xf32>
    %86 = vector.broadcast %85 : vector<1x256xf32> to vector<256x256xf32>
    %87 = arith.subf %83, %86 : vector<256x256xf32>
    %88 = math.exp %87 : vector<256x256xf32>
    %cst_31 = arith.constant dense<0.000000e+00> : vector<256xf32>
    %89 = vector.multi_reduction <add>, %88, %cst_31 [0] : vector<256x256xf32> to vector<256xf32>
    %90 = vector.shape_cast %89 : vector<256xf32> to vector<1x256xf32>
    %91 = arith.truncf %88 : vector<256x256xf32> to vector<256x256xbf16>
    %cst_32 = arith.constant dense<0.000000e+00> : vector<8x256xf32>
    %92 = tpu.matmul %80, %91, %cst_32 {dimension_numbers = #tpu.dot_dimension_numbers<[1], [0], [0], [1], [0, 0, 1, 1], [], []>} : vector<8x256xbf16>, vector<256x256xbf16>, vector<8x256xf32> -> vector<8x256xf32>
    %93 = tpu.reciprocal %90 {approx = true} : vector<1x256xf32> -> vector<1x256xf32>
    %94 = vector.broadcast %93 : vector<1x256xf32> to vector<8x256xf32>
    %95 = arith.mulf %92, %94 : vector<8x256xf32>
    %c16 = arith.constant 16 : index
    %c0_33 = arith.constant 0 : index
    %96 = vector.load %arg9[%c16, %c0_33] : memref<32x256xf32, #tpu.memory_space<vmem>>, vector<8x256xf32>
    tpu.vector_store %arg9[%c16, %c0_33], %95 {strides = array<i32>} : memref<32x256xf32, #tpu.memory_space<vmem>>, vector<8x256xf32>,
    %97 = vector.extract_strided_slice %30 {offsets = [24, 0], sizes = [8, 256], strides = [1, 1]} : vector<96x256xf32> to vector<8x256xf32>
    %98 = arith.truncf %97 : vector<8x256xf32> to vector<8x256xbf16>
    %99 = vector.extract_strided_slice %30 {offsets = [56, 0], sizes = [8, 256], strides = [1, 1]} : vector<96x256xf32> to vector<8x256xf32>
    %100 = arith.truncf %99 : vector<8x256xf32> to vector<8x256xbf16>
    %101 = vector.extract_strided_slice %30 {offsets = [88, 0], sizes = [8, 256], strides = [1, 1]} : vector<96x256xf32> to vector<8x256xf32>
    %102 = arith.truncf %101 : vector<8x256xf32> to vector<8x256xbf16>
    %cst_34 = arith.constant dense<0.000000e+00> : vector<256x256xf32>
    %103 = tpu.matmul %100, %98, %cst_34 {dimension_numbers = #tpu.dot_dimension_numbers<[0], [0], [1], [1], [0, 1, 1, 1], [], []>} : vector<8x256xbf16>, vector<8x256xbf16>, vector<256x256xf32> -> vector<256x256xf32>
    %cst_35 = arith.constant 0.353553385 : f32
    %104 = vector.broadcast %cst_35 : f32 to vector<256x256xf32>
    %105 = arith.mulf %103, %104 : vector<256x256xf32>
    %cst_36 = arith.constant dense<0xFF800000> : vector<256xf32>
    %106 = vector.multi_reduction <maximumf>, %105, %cst_36 [0] : vector<256x256xf32> to vector<256xf32>
    %107 = vector.shape_cast %106 : vector<256xf32> to vector<1x256xf32>
    %108 = vector.broadcast %107 : vector<1x256xf32> to vector<256x256xf32>
    %109 = arith.subf %105, %108 : vector<256x256xf32>
    %110 = math.exp %109 : vector<256x256xf32>
    %cst_37 = arith.constant dense<0.000000e+00> : vector<256xf32>
    %111 = vector.multi_reduction <add>, %110, %cst_37 [0] : vector<256x256xf32> to vector<256xf32>
    %112 = vector.shape_cast %111 : vector<256xf32> to vector<1x256xf32>
    %113 = arith.truncf %110 : vector<256x256xf32> to vector<256x256xbf16>
    %cst_38 = arith.constant dense<0.000000e+00> : vector<8x256xf32>
    %114 = tpu.matmul %102, %113, %cst_38 {dimension_numbers = #tpu.dot_dimension_numbers<[1], [0], [0], [1], [0, 0, 1, 1], [], []>} : vector<8x256xbf16>, vector<256x256xbf16>, vector<8x256xf32> -> vector<8x256xf32>
    %115 = tpu.reciprocal %112 {approx = true} : vector<1x256xf32> -> vector<1x256xf32>
    %116 = vector.broadcast %115 : vector<1x256xf32> to vector<8x256xf32>
    %117 = arith.mulf %114, %116 : vector<8x256xf32>
    %c24 = arith.constant 24 : index
    %c0_39 = arith.constant 0 : index
    %118 = vector.load %arg9[%c24, %c0_39] : memref<32x256xf32, #tpu.memory_space<vmem>>, vector<8x256xf32>
    tpu.vector_store %arg9[%c24, %c0_39], %117 {strides = array<i32>} : memref<32x256xf32, #tpu.memory_space<vmem>>, vector<8x256xf32>,
    %c0_40 = arith.constant 0 : index
    %c0_41 = arith.constant 0 : index
    %119 = vector.load %arg6[%c0_40, %c0_41] : memref<32x32xbf16, #tpu.memory_space<vmem>>, vector<32x32xbf16>
    %c0_42 = arith.constant 0 : index
    %c0_43 = arith.constant 0 : index
    %120 = vector.load %arg9[%c0_42, %c0_43] : memref<32x256xf32, #tpu.memory_space<vmem>>, vector<32x256xf32>
    %121 = arith.truncf %120 : vector<32x256xf32> to vector<32x256xbf16>
    %cst_44 = arith.constant dense<0.000000e+00> : vector<32x256xf32>
    %122 = tpu.matmul %119, %121, %cst_44 {dimension_numbers = #tpu.dot_dimension_numbers<[1], [0], [0], [1], [0, 0, 1, 1], [], []>} : vector<32x32xbf16>, vector<32x256xbf16>, vector<32x256xf32> -> vector<32x256xf32>
    %123 = arith.addf %1, %122 : vector<32x256xf32>
    %c0_45 = arith.constant 0 : index
    %c0_46 = arith.constant 0 : index
    %124 = vector.load %arg7[%c0_45, %c0_46] : memref<32x1xf32, #tpu.memory_space<vmem>>, vector<32x1xf32>
    %125 = vector.broadcast %124 : vector<32x1xf32> to vector<32x256xf32>
    %126 = arith.addf %123, %125 : vector<32x256xf32>
    %c0_47 = arith.constant 0 : index
    %c0_48 = arith.constant 0 : index
    %c0_49 = arith.constant 0 : index
    %127 = vector.load %arg8[%c0_47, %c0_48, %c0_49] : memref<1x32x256xf32, #tpu.memory_space<vmem>>, vector<1x32x256xf32>
    %128 = vector.shape_cast %127 : vector<1x32x256xf32> to vector<32x256xf32>
    %129 = vector.shape_cast %126 : vector<32x256xf32> to vector<1x32x256xf32>
    tpu.vector_store %arg8[%c0_47, %c0_48, %c0_49], %129 {strides = array<i32>} : memref<1x32x256xf32, #tpu.memory_space<vmem>>, vector<1x32x256xf32>,
    return
  }
  func.func @transform_0(%arg0: i32) -> (i32, i32, i32) {
    %c0_i32 = arith.constant 0 : i32
    %c0_i32_0 = arith.constant 0 : i32
    %c0_i32_1 = arith.constant 0 : i32
    return %arg0, %c0_i32, %c0_i32_0 : i32, i32, i32
  }
  func.func @transform_1(%arg0: i32) -> (i32, i32) {
    %c0_i32 = arith.constant 0 : i32
    %c0_i32_0 = arith.constant 0 : i32
    %c0_i32_1 = arith.constant 0 : i32
    return %c0_i32, %c0_i32_0 : i32, i32
  }
  func.func @transform_2(%arg0: i32) -> (i32, i32) {
    %c0_i32 = arith.constant 0 : i32
    %c0_i32_0 = arith.constant 0 : i32
    %c0_i32_1 = arith.constant 0 : i32
    return %c0_i32, %c0_i32_0 : i32, i32
  }
  func.func @transform_3(%arg0: i32) -> (i32, i32) {
    %c0_i32 = arith.constant 0 : i32
    %c0_i32_0 = arith.constant 0 : i32
    %c0_i32_1 = arith.constant 0 : i32
    return %c0_i32, %c0_i32_0 : i32, i32
  }
  func.func @transform_4(%arg0: i32) -> (i32, i32) {
    %c0_i32 = arith.constant 0 : i32
    %c0_i32_0 = arith.constant 0 : i32
    %c0_i32_1 = arith.constant 0 : i32
    return %c0_i32, %c0_i32_0 : i32, i32
  }
  func.func @transform_5(%arg0: i32) -> (i32, i32) {
    %c0_i32 = arith.constant 0 : i32
    %c0_i32_0 = arith.constant 0 : i32
    %c0_i32_1 = arith.constant 0 : i32
    return %c0_i32, %c0_i32_0 : i32, i32
  }
  func.func @transform_6(%arg0: i32) -> (i32, i32) {
    %c0_i32 = arith.constant 0 : i32
    %c0_i32_0 = arith.constant 0 : i32
    %c0_i32_1 = arith.constant 0 : i32
    return %c0_i32, %c0_i32_0 : i32, i32
  }
  func.func @transform_7(%arg0: i32) -> (i32, i32, i32) {
    %c0_i32 = arith.constant 0 : i32
    %c0_i32_0 = arith.constant 0 : i32
    %c0_i32_1 = arith.constant 0 : i32
    return %arg0, %c0_i32, %c0_i32_0 : i32, i32, i32
  }
}

</mosaic_0001>

<llo_original>
// kernel: tpu_custom_call.1
$region0: #{tpu_custom_call.1}
  #allocation0 [shape = 'u32[]', space=smem, size = 0x4, offset = 0x4, fixed_abs, tag = 'smem constant byte address 0x4 - core index']
  #allocation1 [shape = 'u32[72,128]{1,0:T(1,128)}', space=vmem, size = 0x9000, scoped, tag = 'internal scratch']
  #allocation2 [shape = 'f32[32,256]{1,0:T(8,128)}', space=vmem, size = 0x8000, scoped, tag = 'scratch operand']
  %s0 = inlined_call_operand.vmem [shape: f32[2,32,256], index: 0, kind: input, shape index: {}]
  %s1 = inlined_call_operand.vmem [shape: f32[32,1], index: 1, kind: input, shape index: {}]
  %s2 = inlined_call_operand.vmem [shape: f32[32,1], index: 2, kind: input, shape index: {}]
  %s3 = inlined_call_operand.vmem [shape: bf16[96,32], index: 3, kind: input, shape index: {}]
  %s4 = inlined_call_operand.vmem [shape: f32[96,1], index: 4, kind: input, shape index: {}]
  %s5 = inlined_call_operand.vmem [shape: bf16[32,32], index: 5, kind: input, shape index: {}]
  %s6 = inlined_call_operand.vmem [shape: f32[32,1], index: 6, kind: input, shape index: {}]
  %s7 = inlined_call_operand.hbm [shape: f32[2,32,256], index: 7, kind: output, shape index: {}]
  %s8 = sld [smem:[#allocation0]]
  $region61: #{tpu_custom_call.1} parent=0
    _
  %s10 = ssub.s32 1, %s8
  %s11 = scalar_select 0, %s10, %s8
  $region1: #{tpu_custom_call.1} parent=0
    #allocation3 [shape = 'u8[65536]{0}', space=vmem, size = 0x10000, scoped, tag = 'output window, operand 0']
    #allocation4 [shape = 's32[2]{0}', space=sflag, size = 0x8, scoped, tag = 'scoped memory for tpu_custom_call.1']
    %12 = vsyncpa [#allocation4], 0
    %s13 = scalar_lea.sflag [#allocation4], 1
    %14 = vsyncpa %s13, 0
    loop: start=0, step=1, limit=4
    $region2: #{tpu_custom_call.1} parent=1 // loop_pre_header
      _
    $region3: #{tpu_custom_call.1} parent=1 // loop_header
      %s16 = sphi 0, %s20
      %p17 = scmp.ge.s32.totalorder %s16, 4
      %s26 = sphi 0, %s28
      %s29 = sphi 0, %s26
      %s30 = sphi 0, %s29
      %s46 = sphi 0, %s30
      %s50 = sphi 0, %s50
      %s52 = sphi 0, %s50
      %s53 = sphi 0, %s52
      %s67 = sphi 0, %s53
      %s71 = sphi 0, %s71
      %s73 = sphi 0, %s71
      %s74 = sphi 0, %s73
      %s88 = sphi 0, %s74
      %s92 = sphi 0, %s92
      %s94 = sphi 0, %s92
      %s95 = sphi 0, %s94
      %s109 = sphi 0, %s95
      %s113 = sphi 0, %s113
      %s115 = sphi 0, %s113
      %s116 = sphi 0, %s115
      %s130 = sphi 0, %s116
      %s134 = sphi 0, %s134
      %s136 = sphi 0, %s134
      %s137 = sphi 0, %s136
      %s151 = sphi 0, %s137
      %s155 = sphi 0, %s155
      %s157 = sphi 0, %s155
      %s158 = sphi 0, %s157
      %s172 = sphi 0, %s158
      %s178 = sphi 0, %s180
      %s181 = sphi 0, %s178
      %s182 = sphi 0, %s181
      %s198 = sphi 0, %s182
    $region4: #{tpu_custom_call.1} parent=1 // loop_header_branch
      %19 = sbr.rel (%p17) target = $region8
    $region5: #{tpu_custom_call.1} parent=1 // loop_body
      %s21 = ssub.s32 %s16, 1
      %s22 = ssub.s32 %s16, 2
      %s23 = sadd.s32 %s16, 1
      %s24 = ssub.s32 %s16, %s23
      %p25 = scmp.eq.s32.totalorder %s24, 0
      %s27 = sadd.s32 %s26, 1
      %s28 = scalar_select %p25, %s26, %s27
      %p31 = pneg %p25
      %p32 = scmp.eq.s32.totalorder %s16, 1
      %p33 = por %p31, %p32
      %p34 = scmp.ne.s32.totalorder %s26, %s29
      %p35 = scmp.eq.s32.totalorder %s16, 0
      %p36 = por %p34, %p35
      %p37 = scmp.ne.s32.totalorder %s26, %s29
      %p38 = scmp.eq.s32.totalorder %s21, 1
      %p39 = por %p37, %p38
      %p40 = scmp.ne.s32.totalorder %s29, %s30
      %p41 = scmp.eq.s32.totalorder %s21, 0
      %p42 = por %p40, %p41
      %p43 = scmp.ne.s32.totalorder %s29, %s30
      %p44 = scmp.eq.s32.totalorder %s22, 1
      %p45 = por %p43, %p44
      %p47 = scmp.ne.s32.totalorder %s30, %s46
      %p48 = scmp.eq.s32.totalorder %s22, 0
      %p49 = por %p47, %p48
      %s51 = sadd.s32 %s50, 1
      %p54 = scmp.eq.s32.totalorder %s16, 1
      %p55 = scmp.ne.s32.totalorder %s50, %s52
      %p56 = scmp.eq.s32.totalorder %s16, 0
      %p57 = por %p55, %p56
      %p58 = scmp.ne.s32.totalorder %s50, %s52
      %p59 = scmp.eq.s32.totalorder %s21, 1
      %p60 = por %p58, %p59
      %p61 = scmp.ne.s32.totalorder %s52, %s53
      %p62 = scmp.eq.s32.totalorder %s21, 0
      %p63 = por %p61, %p62
      %p64 = scmp.ne.s32.totalorder %s52, %s53
      %p65 = scmp.eq.s32.totalorder %s22, 1
      %p66 = por %p64, %p65
      %p68 = scmp.ne.s32.totalorder %s53, %s67
      %p69 = scmp.eq.s32.totalorder %s22, 0
      %p70 = por %p68, %p69
      %s72 = sadd.s32 %s71, 1
      %p75 = scmp.eq.s32.totalorder %s16, 1
      %p76 = scmp.ne.s32.totalorder %s71, %s73
      %p77 = scmp.eq.s32.totalorder %s16, 0
      %p78 = por %p76, %p77
      %p79 = scmp.ne.s32.totalorder %s71, %s73
      %p80 = scmp.eq.s32.totalorder %s21, 1
      %p81 = por %p79, %p80
      %p82 = scmp.ne.s32.totalorder %s73, %s74
      %p83 = scmp.eq.s32.totalorder %s21, 0
      %p84 = por %p82, %p83
      %p85 = scmp.ne.s32.totalorder %s73, %s74
      %p86 = scmp.eq.s32.totalorder %s22, 1
      %p87 = por %p85, %p86
      %p89 = scmp.ne.s32.totalorder %s74, %s88
      %p90 = scmp.eq.s32.totalorder %s22, 0
      %p91 = por %p89, %p90
      %s93 = sadd.s32 %s92, 1
      %p96 = scmp.eq.s32.totalorder %s16, 1
      %p97 = scmp.ne.s32.totalorder %s92, %s94
      %p98 = scmp.eq.s32.totalorder %s16, 0
      %p99 = por %p97, %p98
      %p100 = scmp.ne.s32.totalorder %s92, %s94
      %p101 = scmp.eq.s32.totalorder %s21, 1
      %p102 = por %p100, %p101
      %p103 = scmp.ne.s32.totalorder %s94, %s95
      %p104 = scmp.eq.s32.totalorder %s21, 0
      %p105 = por %p103, %p104
      %p106 = scmp.ne.s32.totalorder %s94, %s95
      %p107 = scmp.eq.s32.totalorder %s22, 1
      %p108 = por %p106, %p107
      %p110 = scmp.ne.s32.totalorder %s95, %s109
      %p111 = scmp.eq.s32.totalorder %s22, 0
      %p112 = por %p110, %p111
      %s114 = sadd.s32 %s113, 1
      %p117 = scmp.eq.s32.totalorder %s16, 1
      %p118 = scmp.ne.s32.totalorder %s113, %s115
      %p119 = scmp.eq.s32.totalorder %s16, 0
      %p120 = por %p118, %p119
      %p121 = scmp.ne.s32.totalorder %s113, %s115
      %p122 = scmp.eq.s32.totalorder %s21, 1
      %p123 = por %p121, %p122
      %p124 = scmp.ne.s32.totalorder %s115, %s116
      %p125 = scmp.eq.s32.totalorder %s21, 0
      %p126 = por %p124, %p125
      %p127 = scmp.ne.s32.totalorder %s115, %s116
      %p128 = scmp.eq.s32.totalorder %s22, 1
      %p129 = por %p127, %p128
      %p131 = scmp.ne.s32.totalorder %s116, %s130
      %p132 = scmp.eq.s32.totalorder %s22, 0
      %p133 = por %p131, %p132
      %s135 = sadd.s32 %s134, 1
      %p138 = scmp.eq.s32.totalorder %s16, 1
      %p139 = scmp.ne.s32.totalorder %s134, %s136
      %p140 = scmp.eq.s32.totalorder %s16, 0
      %p141 = por %p139, %p140
      %p142 = scmp.ne.s32.totalorder %s134, %s136
      %p143 = scmp.eq.s32.totalorder %s21, 1
      %p144 = por %p142, %p143
      %p145 = scmp.ne.s32.totalorder %s136, %s137
      %p146 = scmp.eq.s32.totalorder %s21, 0
      %p147 = por %p145, %p146
      %p148 = scmp.ne.s32.totalorder %s136, %s137
      %p149 = scmp.eq.s32.totalorder %s22, 1
      %p150 = por %p148, %p149
      %p152 = scmp.ne.s32.totalorder %s137, %s151
      %p153 = scmp.eq.s32.totalorder %s22, 0
      %p154 = por %p152, %p153
      %s156 = sadd.s32 %s155, 1
      %p159 = scmp.eq.s32.totalorder %s16, 1
      %p160 = scmp.ne.s32.totalorder %s155, %s157
      %p161 = scmp.eq.s32.totalorder %s16, 0
      %p162 = por %p160, %p161
      %p163 = scmp.ne.s32.totalorder %s155, %s157
      %p164 = scmp.eq.s32.totalorder %s21, 1
      %p165 = por %p163, %p164
      %p166 = scmp.ne.s32.totalorder %s157, %s158
      %p167 = scmp.eq.s32.totalorder %s21, 0
      %p168 = por %p166, %p167
      %p169 = scmp.ne.s32.totalorder %s157, %s158
      %p170 = scmp.eq.s32.totalorder %s22, 1
      %p171 = por %p169, %p170
      %p173 = scmp.ne.s32.totalorder %s158, %s172
      %p174 = scmp.eq.s32.totalorder %s22, 0
      %p175 = por %p173, %p174
      %s176 = ssub.s32 %s16, %s23
      %p177 = scmp.eq.s32.totalorder %s176, 0
      %s179 = sadd.s32 %s178, 1
      %s180 = scalar_select %p177, %s178, %s179
      %p183 = pneg %p177
      %p184 = scmp.eq.s32.totalorder %s16, 1
      %p185 = por %p183, %p184
      %p186 = scmp.ne.s32.totalorder %s178, %s181
      %p187 = scmp.eq.s32.totalorder %s16, 0
      %p188 = por %p186, %p187
      %p189 = scmp.ne.s32.totalorder %s178, %s181
      %p190 = scmp.eq.s32.totalorder %s21, 1
      %p191 = por %p189, %p190
      %p192 = scmp.ne.s32.totalorder %s181, %s182
      %p193 = scmp.eq.s32.totalorder %s21, 0
      %p194 = por %p192, %p193
      %p195 = scmp.ne.s32.totalorder %s181, %s182
      %p196 = scmp.eq.s32.totalorder %s22, 1
      %p197 = por %p195, %p196
      %p199 = scmp.ne.s32.totalorder %s182, %s198
      %p200 = scmp.eq.s32.totalorder %s22, 0
      %p201 = por %p199, %p200
      %p202 = scmp.le.s32.totalorder 1, %s16
      %p203 = scmp.lt.s32.totalorder %s16, 3
      %p204 = pnand %p202, %p203
      %p205 = pneg %p204
      // Predicated region
      $region9: #{tpu_custom_call.1} parent=5 // pred_check
        _
      $region10: #{tpu_custom_call.1} parent=5 // pred_check_branch
        %207 = sbr.rel (%p204) target = $region12
      $region11: #{tpu_custom_call.1} parent=5 // pred_region
        %s208 = ssub.s32 %s16, 1
        // Predicated region
        $region13: #{tpu_custom_call.1} parent=11 // pred_check
          %p209 = pneg %p63
        $region14: #{tpu_custom_call.1} parent=11 // pred_check_branch
          %211 = sbr.rel (%p209) target = $region16
        $region15: #{tpu_custom_call.1} parent=11 // pred_region
          _
        $region16: #{tpu_custom_call.1} parent=11 // pred_fallthru
          _
        // Predicated region
        $region17: #{tpu_custom_call.1} parent=11 // pred_check
          %p212 = pneg %p84
        $region18: #{tpu_custom_call.1} parent=11 // pred_check_branch
          %214 = sbr.rel (%p212) target = $region20
        $region19: #{tpu_custom_call.1} parent=11 // pred_region
          _
        $region20: #{tpu_custom_call.1} parent=11 // pred_fallthru
          _
        // Predicated region
        $region21: #{tpu_custom_call.1} parent=11 // pred_check
          %p215 = pneg %p105
        $region22: #{tpu_custom_call.1} parent=11 // pred_check_branch
          %217 = sbr.rel (%p215) target = $region24
        $region23: #{tpu_custom_call.1} parent=11 // pred_region
          _
        $region24: #{tpu_custom_call.1} parent=11 // pred_fallthru
          _
        // Predicated region
        $region25: #{tpu_custom_call.1} parent=11 // pred_check
          %p218 = pneg %p126
        $region26: #{tpu_custom_call.1} parent=11 // pred_check_branch
          %220 = sbr.rel (%p218) target = $region28
        $region27: #{tpu_custom_call.1} parent=11 // pred_region
          _
        $region28: #{tpu_custom_call.1} parent=11 // pred_fallthru
          _
        // Predicated region
        $region29: #{tpu_custom_call.1} parent=11 // pred_check
          %p221 = pneg %p147
        $region30: #{tpu_custom_call.1} parent=11 // pred_check_branch
          %223 = sbr.rel (%p221) target = $region32
        $region31: #{tpu_custom_call.1} parent=11 // pred_region
          _
        $region32: #{tpu_custom_call.1} parent=11 // pred_fallthru
          _
        // Predicated region
        $region33: #{tpu_custom_call.1} parent=11 // pred_check
          %p224 = pneg %p168
        $region34: #{tpu_custom_call.1} parent=11 // pred_check_branch
          %226 = sbr.rel (%p224) target = $region36
        $region35: #{tpu_custom_call.1} parent=11 // pred_region
          _
        $region36: #{tpu_custom_call.1} parent=11 // pred_fallthru
          _
      $region12: #{tpu_custom_call.1} parent=5 // pred_fallthru
        _
      %p227 = scmp.lt.s32.totalorder %s16, 2
      // Predicated region
      $region37: #{tpu_custom_call.1} parent=5 // pred_check
        %p228 = pneg %p227
      $region38: #{tpu_custom_call.1} parent=5 // pred_check_branch
        %230 = sbr.rel (%p228) target = $region40
      $region39: #{tpu_custom_call.1} parent=5 // pred_region
        // Predicated region
        $region41: #{tpu_custom_call.1} parent=39 // pred_check
          %p231 = pneg %p36
        $region42: #{tpu_custom_call.1} parent=39 // pred_check_branch
          %233 = sbr.rel (%p231) target = $region44
        $region43: #{tpu_custom_call.1} parent=39 // pred_region
          %p234 = scmp.lt.s32.totalorder %s16, 1
          %s235 = scalar_select %p234, %s16, 1
          %s236 = smul.addr %s235, 8
          %s237 = smul.addr %s236, 8
          %s238 = scalar_lea.vmem %s0, %s237
        $region44: #{tpu_custom_call.1} parent=39 // pred_fallthru
          _
      $region40: #{tpu_custom_call.1} parent=5 // pred_fallthru
        _
      %p239 = scmp.le.s32.totalorder 1, %s16
      %p240 = scmp.lt.s32.totalorder %s16, 3
      %p241 = pnand %p239, %p240
      %p242 = pneg %p241
      // Predicated region
      $region45: #{tpu_custom_call.1} parent=5 // pred_check
        _
      $region46: #{tpu_custom_call.1} parent=5 // pred_check_branch
        %244 = sbr.rel (%p241) target = $region48
      $region47: #{tpu_custom_call.1} parent=5 // pred_region
        %s245 = ssub.s32 %s16, 1
        %p246 = scmp.lt.s32.totalorder %s21, 1
        %s247 = scalar_select %p246, %s21, 1
        %s248 = smul.addr %s247, 8
        %s249 = smul.addr %s248, 8
        %s250 = scalar_lea.vmem %s0, %s249
        %p251 = pneg %p42
        %p252 = pneg %p39
        %p253 = pneg %p63
        %p254 = pneg %p60
        %p255 = pneg %p84
        %p256 = pneg %p81
        %p257 = pneg %p105
        %p258 = pneg %p102
        %p259 = pneg %p126
        %p260 = pneg %p123
        %p261 = pneg %p147
        %p262 = pneg %p144
        %p263 = pneg %p168
        %p264 = pneg %p165
        %p265 = pneg %p194
        %p266 = pneg %p191
        %s267 = sand.u32 %s181, 1
        %s268 = scalar_lea.sflag [#allocation4], %s267
        %s269 = sand.u32 %s181, 1
        %s270 = smul.addr %s269, 64
        %s271 = scalar_lea.vmem [#allocation3], %s270
        %p272 = scmp.lt.s32.totalorder %s21, 1
        %s273 = scalar_select %p272, %s21, 1
        %s274 = smul.addr %s273, 8
        %s275 = smul.addr %s274, 8
        %s276 = scalar_lea.vmem %s0, %s275
        %v278 = vld [vmem:[%s276] sm:$0xff]
        %v279 = vld [vmem:[%s276 + $0x8] sm:$0xff]
        %v280 = vld [vmem:[%s276 + $0x10] sm:$0xff]
        %v281 = vld [vmem:[%s276 + $0x18] sm:$0xff]
        %v282 = vld [vmem:[%s276 + $0x20] sm:$0xff]
        %v283 = vld [vmem:[%s276 + $0x28] sm:$0xff]
        %v284 = vld [vmem:[%s276 + $0x30] sm:$0xff]
        %v285 = vld [vmem:[%s276 + $0x38] sm:$0xff]
        %v286 = vadd.f32 %v278, %v279
        %v287 = vadd.f32 %v286, %v280
        %v288 = vadd.f32 %v287, %v281
        %v289 = vadd.f32 %v288, %v282
        %v290 = vadd.f32 %v289, %v283
        %v291 = vadd.f32 %v290, %v284
        %v292 = vadd.f32 %v291, %v285
        %293 = vadd.xlane.f32.xlu0 %v292
        %v294 = vpop.xlane.xlu0 %293
        %v295 = vrot.slane %v294, 4
        %v296 = vadd.f32 %v294, %v295
        %v297 = vrot.slane %v296, 2
        %v298 = vadd.f32 %v296, %v297
        %v299 = vrot.slane %v298, 1
        %v300 = vadd.f32 %v298, %v299
        %s301 = vtos %v300
        %s302 = smul.f32 %s301, 0.00012207031
        %v303 = vstv %s302
        %v304 = vsub.f32 %v278, %v303
        %v305 = vsub.f32 %v279, %v303
        %v306 = vsub.f32 %v280, %v303
        %v307 = vsub.f32 %v281, %v303
        %v308 = vsub.f32 %v282, %v303
        %v309 = vsub.f32 %v283, %v303
        %v310 = vsub.f32 %v284, %v303
        %v311 = vsub.f32 %v285, %v303
        %v312 = vmul.f32 %v304, %v304
        %v313 = vmul.f32 %v305, %v305
        %v314 = vmul.f32 %v306, %v306
        %v315 = vmul.f32 %v307, %v307
        %v316 = vmul.f32 %v308, %v308
        %v317 = vmul.f32 %v309, %v309
        %v318 = vmul.f32 %v310, %v310
        %v319 = vmul.f32 %v311, %v311
        %v320 = vadd.f32 %v312, %v313
        %v321 = vadd.f32 %v320, %v314
        %v322 = vadd.f32 %v321, %v315
        %v323 = vadd.f32 %v322, %v316
        %v324 = vadd.f32 %v323, %v317
        %v325 = vadd.f32 %v324, %v318
        %v326 = vadd.f32 %v325, %v319
        %327 = vadd.xlane.f32.xlu0 %v326
        %v328 = vpop.xlane.xlu0 %327
        %v329 = vrot.slane %v328, 4
        %v330 = vadd.f32 %v328, %v329
        %v331 = vrot.slane %v330, 2
        %v332 = vadd.f32 %v330, %v331
        %v333 = vrot.slane %v332, 1
        %v334 = vadd.f32 %v332, %v333
        %s335 = vtos %v334
        %s336 = smul.f32 %s335, 0.00012207031
        %s337 = sadd.f32 %s336, 1e-05
        %v338 = vstv %s337
        %v339 = vrsqrt.pop %v338
        %v340 = vmul.f32 %v339, %v338
        %v341 = vmul.f32 %v340, %v339
        %v342 = vmul.f32 0.5, %v341
        %v343 = vsub.f32 1.5, %v342
        %v344 = vmul.f32 %v339, %v343
        %vm345 = vweird.f32 %v338
        %vm346 = vweird.f32 %v339
        %vm347 = vmor %vm345, %vm346
        %v348 = vsel %vm347, %v339, %v344
        %s349 = vtos %v348
        %v350 = vstv %s349
        %v351 = vmul.f32 %v304, %v350
        %v352 = vmul.f32 %v305, %v350
        %v353 = vmul.f32 %v306, %v350
        %v354 = vmul.f32 %v307, %v350
        %v355 = vmul.f32 %v308, %v350
        %v356 = vmul.f32 %v309, %v350
        %v357 = vmul.f32 %v310, %v350
        %v358 = vmul.f32 %v311, %v350
        %v359 = vld [vmem:[%s1] sm:$0xff]
        %v360 = vld [vmem:[%s1 + $0x8] sm:$0xff]
        %v361 = vld [vmem:[%s1 + $0x10] sm:$0xff]
        %v362 = vld [vmem:[%s1 + $0x18] sm:$0xff]
        %364 = vset.pattern.permute.xlu0 0
        %365 = vperm.xlu0 %364, %v359
        %v366 = vpop.permute.xlu0 %365
        %369 = vset.pattern.permute.xlu0 0
        %370 = vperm.xlu0 %369, %v360
        %v371 = vpop.permute.xlu0 %370
        %374 = vset.pattern.permute.xlu0 0
        %375 = vperm.xlu0 %374, %v361
        %v376 = vpop.permute.xlu0 %375
        %379 = vset.pattern.permute.xlu0 0
        %380 = vperm.xlu0 %379, %v362
        %v381 = vpop.permute.xlu0 %380
        %v383 = vmul.f32 %v351, %v366
        %v384 = vmul.f32 %v352, %v366
        %v385 = vmul.f32 %v353, %v371
        %v386 = vmul.f32 %v354, %v371
        %v387 = vmul.f32 %v355, %v376
        %v388 = vmul.f32 %v356, %v376
        %v389 = vmul.f32 %v357, %v381
        %v390 = vmul.f32 %v358, %v381
        %v391 = vld [vmem:[%s2] sm:$0xff]
        %v392 = vld [vmem:[%s2 + $0x8] sm:$0xff]
        %v393 = vld [vmem:[%s2 + $0x10] sm:$0xff]
        %v394 = vld [vmem:[%s2 + $0x18] sm:$0xff]
        %396 = vset.pattern.permute.xlu0 0
        %397 = vperm.xlu0 %396, %v391
        %v398 = vpop.permute.xlu0 %397
        %401 = vset.pattern.permute.xlu0 0
        %402 = vperm.xlu0 %401, %v392
        %v403 = vpop.permute.xlu0 %402
        %406 = vset.pattern.permute.xlu0 0
        %407 = vperm.xlu0 %406, %v393
        %v408 = vpop.permute.xlu0 %407
        %411 = vset.pattern.permute.xlu0 0
        %412 = vperm.xlu0 %411, %v394
        %v413 = vpop.permute.xlu0 %412
        %v415 = vadd.f32 %v383, %v398
        %v416 = vadd.f32 %v384, %v398
        %v417 = vadd.f32 %v385, %v403
        %v418 = vadd.f32 %v386, %v403
        %v419 = vadd.f32 %v387, %v408
        %v420 = vadd.f32 %v388, %v408
        %v421 = vadd.f32 %v389, %v413
        %v422 = vadd.f32 %v390, %v413
        %v423 = vld [vmem:[%s3] sm:$0xf]
        %v424 = vld [vmem:[%s3 + $0x4] sm:$0xf]
        %v425 = vld [vmem:[%s3 + $0x8] sm:$0xf]
        %v426 = vld [vmem:[%s3 + $0xc] sm:$0xf]
        %v427 = vld [vmem:[%s3 + $0x10] sm:$0xf]
        %v428 = vld [vmem:[%s3 + $0x14] sm:$0xf]
        %v429 = vld [vmem:[%s3 + $0x18] sm:$0xf]
        %v430 = vld [vmem:[%s3 + $0x1c] sm:$0xf]
        %v431 = vld [vmem:[%s3 + $0x20] sm:$0xf]
        %v432 = vld [vmem:[%s3 + $0x24] sm:$0xf]
        %v433 = vld [vmem:[%s3 + $0x28] sm:$0xf]
        %v434 = vld [vmem:[%s3 + $0x2c] sm:$0xf]
        %v435 = vpack.c.bf16 %v417, %v415
        %v436 = vpack.c.bf16 %v418, %v416
        %v437 = vpack.c.bf16 %v421, %v419
        %v438 = vpack.c.bf16 %v422, %v420
        %v439 = vld [vmem:[%s4] sm:$0xff]
        %v440 = vld [vmem:[%s4 + $0x8] sm:$0xff]
        %v441 = vld [vmem:[%s4 + $0x10] sm:$0xff]
        %v442 = vld [vmem:[%s4 + $0x18] sm:$0xff]
        %v443 = vld [vmem:[%s4 + $0x20] sm:$0xff]
        %v444 = vld [vmem:[%s4 + $0x28] sm:$0xff]
        %v445 = vld [vmem:[%s4 + $0x30] sm:$0xff]
        %v446 = vld [vmem:[%s4 + $0x38] sm:$0xff]
        %v447 = vld [vmem:[%s4 + $0x40] sm:$0xff]
        %v448 = vld [vmem:[%s4 + $0x48] sm:$0xff]
        %v449 = vld [vmem:[%s4 + $0x50] sm:$0xff]
        %v450 = vld [vmem:[%s4 + $0x58] sm:$0xff]
        %452 = vset.pattern.permute.xlu0 0
        %453 = vperm.xlu0 %452, %v439
        %v454 = vpop.permute.xlu0 %453
        %457 = vset.pattern.permute.xlu0 0
        %458 = vperm.xlu0 %457, %v440
        %v459 = vpop.permute.xlu0 %458
        %462 = vset.pattern.permute.xlu0 0
        %463 = vperm.xlu0 %462, %v441
        %v464 = vpop.permute.xlu0 %463
        %467 = vset.pattern.permute.xlu0 0
        %468 = vperm.xlu0 %467, %v442
        %v469 = vpop.permute.xlu0 %468
        %472 = vset.pattern.permute.xlu0 0
        %473 = vperm.xlu0 %472, %v443
        %v474 = vpop.permute.xlu0 %473
        %477 = vset.pattern.permute.xlu0 0
        %478 = vperm.xlu0 %477, %v444
        %v479 = vpop.permute.xlu0 %478
        %482 = vset.pattern.permute.xlu0 0
        %483 = vperm.xlu0 %482, %v445
        %v484 = vpop.permute.xlu0 %483
        %487 = vset.pattern.permute.xlu0 0
        %488 = vperm.xlu0 %487, %v446
        %v489 = vpop.permute.xlu0 %488
        %492 = vset.pattern.permute.xlu0 0
        %493 = vperm.xlu0 %492, %v447
        %v494 = vpop.permute.xlu0 %493
        %497 = vset.pattern.permute.xlu0 0
        %498 = vperm.xlu0 %497, %v448
        %v499 = vpop.permute.xlu0 %498
        %502 = vset.pattern.permute.xlu0 0
        %503 = vperm.xlu0 %502, %v449
        %v504 = vpop.permute.xlu0 %503
        %507 = vset.pattern.permute.xlu0 0
        %508 = vperm.xlu0 %507, %v450
        %v509 = vpop.permute.xlu0 %508
        %v523 = vunpack.c.l.b16 %v423
        %v524 = vunpack.c.l.b16 %v424
        %v525 = vunpack.c.l.b16 %v425
        %v526 = vunpack.c.l.b16 %v426
        %v527 = vunpack.c.l.b16 %v427
        %v528 = vunpack.c.l.b16 %v428
        %v529 = vunpack.c.l.b16 %v429
        %v530 = vunpack.c.l.b16 %v430
        %v531 = vunpack.c.l.b16 %v431
        %v532 = vunpack.c.l.b16 %v432
        %v533 = vunpack.c.l.b16 %v433
        %v534 = vunpack.c.l.b16 %v434
        %v535 = vpack.c.b16 %v524, %v523
        %v536 = vpack.c.b16 %v526, %v525
        %v537 = vpack.c.b16 %v528, %v527
        %v538 = vpack.c.b16 %v530, %v529
        %v539 = vpack.c.b16 %v532, %v531
        %v540 = vpack.c.b16 %v534, %v533
        %vm541 = vcmask 261120
        %v543 = vsel %vm541, %v535, 0
        %v546 = vsel %vm541, %v536, 0
        %v549 = vsel %vm541, %v537, 0
        %v552 = vsel %vm541, %v538, 0
        %v555 = vsel %vm541, %v539, 0
        %v558 = vsel %vm541, %v540, 0
        %560 = vmatpush.bf16.msra.mxu0 0
        %561 = vmatpush.bf16.msra.mxu0 0
        %562 = vmatpush.bf16.msra.mxu0 0
        %563 = vmatpush.bf16.msra.mxu0 0
        %564 = vmatpush.bf16.msra.mxu0 0
        %565 = vmatpush.bf16.msra.mxu0 0
        %566 = vmatpush.bf16.msra.mxu0 %v437
        %567 = vmatpush.bf16.msra.mxu0 %v435
        %568 = vmatmul.bf16.gmra.mxu0 %v543
        %v569 = vpop.f32.mrf.mxu0
        %v570 = vadd.f32 %v454, %v569
        %v571 = vpop.f32.mrf.mxu0
        %v572 = vadd.f32 %v459, %v571
        %573 = vmatmul.bf16.gmra.mxu0 %v546
        %v574 = vpop.f32.mrf.mxu0
        %v575 = vadd.f32 %v464, %v574
        %v576 = vpop.f32.mrf.mxu0
        %v577 = vadd.f32 %v469, %v576
        %578 = vmatmul.bf16.gmra.mxu0 %v549
        %v579 = vpop.f32.mrf.mxu0
        %v580 = vadd.f32 %v474, %v579
        %v581 = vpop.f32.mrf.mxu0
        %v582 = vadd.f32 %v479, %v581
        %583 = vmatmul.bf16.gmra.mxu0 %v552
        %v584 = vpop.f32.mrf.mxu0
        %v585 = vadd.f32 %v484, %v584
        %v586 = vpop.f32.mrf.mxu0
        %v587 = vadd.f32 %v489, %v586
        %588 = vmatmul.bf16.gmra.mxu0 %v555
        %v589 = vpop.f32.mrf.mxu0
        %v590 = vadd.f32 %v494, %v589
        %v591 = vpop.f32.mrf.mxu0
        %v592 = vadd.f32 %v499, %v591
        %593 = vmatmul.bf16.gmra.mxu0 %v558
        %v594 = vpop.f32.mrf.mxu0
        %v595 = vadd.f32 %v504, %v594
        %v596 = vpop.f32.mrf.mxu0
        %v597 = vadd.f32 %v509, %v596
        %598 = vdwg.mxu0
        %599 = vmatpush.bf16.msra.mxu0 0
        %600 = vmatpush.bf16.msra.mxu0 0
        %601 = vmatpush.bf16.msra.mxu0 0
        %602 = vmatpush.bf16.msra.mxu0 0
        %603 = vmatpush.bf16.msra.mxu0 0
        %604 = vmatpush.bf16.msra.mxu0 0
        %605 = vmatpush.bf16.msra.mxu0 %v438
        %606 = vmatpush.bf16.msra.mxu0 %v436
        %607 = vmatmul.bf16.gmra.mxu0 %v543
        %v608 = vpop.f32.mrf.mxu0
        %v609 = vadd.f32 %v454, %v608
        %v610 = vpop.f32.mrf.mxu0
        %v611 = vadd.f32 %v459, %v610
        %612 = vmatmul.bf16.gmra.mxu0 %v546
        %v613 = vpop.f32.mrf.mxu0
        %v614 = vadd.f32 %v464, %v613
        %v615 = vpop.f32.mrf.mxu0
        %v616 = vadd.f32 %v469, %v615
        %617 = vmatmul.bf16.gmra.mxu0 %v549
        %v618 = vpop.f32.mrf.mxu0
        %v619 = vadd.f32 %v474, %v618
        %v620 = vpop.f32.mrf.mxu0
        %v621 = vadd.f32 %v479, %v620
        %622 = vmatmul.bf16.gmra.mxu0 %v552
        %v623 = vpop.f32.mrf.mxu0
        %v624 = vadd.f32 %v484, %v623
        %v625 = vpop.f32.mrf.mxu0
        %v626 = vadd.f32 %v489, %v625
        %627 = vmatmul.bf16.gmra.mxu0 %v555
        %v628 = vpop.f32.mrf.mxu0
        %v629 = vadd.f32 %v494, %v628
        %v630 = vpop.f32.mrf.mxu0
        %v631 = vadd.f32 %v499, %v630
        %632 = vmatmul.bf16.gmra.mxu0 %v558
        %v633 = vpop.f32.mrf.mxu0
        %v634 = vadd.f32 %v504, %v633
        %v635 = vpop.f32.mrf.mxu0
        %v636 = vadd.f32 %v509, %v635
        %637 = vdwg.mxu0
        %v638 = vpack.c.bf16 %v570, %v570
        %v639 = vpack.c.bf16 %v609, %v609
        %v640 = vpack.c.bf16 %v580, %v580
        %v641 = vpack.c.bf16 %v619, %v619
        %v642 = vpack.c.bf16 %v590, %v590
        %v643 = vpack.c.bf16 %v629, %v629
        %644 = vxpose.binary.xlu0.c.b16.start [1/16] %v641, %v640, 128
        %645 = vxpose.binary.xlu0.c.b16.cont [2/16] 0, 0, 128
        %646 = vxpose.binary.xlu0.c.b16.cont [3/16] 0, 0, 128
        %647 = vxpose.binary.xlu0.c.b16.cont [4/16] 0, 0, 128
        %648 = vxpose.binary.xlu0.c.b16.cont [5/16] 0, 0, 128
        %649 = vxpose.binary.xlu0.c.b16.cont [6/16] 0, 0, 128
        %650 = vxpose.binary.xlu0.c.b16.cont [7/16] 0, 0, 128
        %651 = vxpose.binary.xlu0.c.b16.end [8/16] 0, 0, 128
        %v652 = vpop.trf.xlu0
        %v653 = vpop.trf.xlu0
        %v654 = vpop.trf.xlu0
        %v655 = vpop.trf.xlu0
        %v656 = vpop.trf.xlu0
        %v657 = vpop.trf.xlu0
        %v658 = vpop.trf.xlu0
        %v659 = vpop.trf.xlu0
        %v660 = vpop.trf.xlu0
        %v661 = vpop.trf.xlu0
        %v662 = vpop.trf.xlu0
        %v663 = vpop.trf.xlu0
        %v664 = vpop.trf.xlu0
        %v665 = vpop.trf.xlu0
        %v666 = vpop.trf.xlu0
        %v667 = vpop.trf.xlu0
        %vm668 = vcmask 64512
        %v670 = vsel %vm668, %v652, 0
        %v673 = vsel %vm668, %v654, 0
        %v676 = vsel %vm668, %v656, 0
        %v679 = vsel %vm668, %v658, 0
        %v682 = vsel %vm668, %v660, 0
        %v685 = vsel %vm668, %v662, 0
        %v688 = vsel %vm668, %v664, 0
        %v691 = vsel %vm668, %v666, 0
        %v694 = vsel %vm668, %v653, 0
        %v697 = vsel %vm668, %v655, 0
        %v700 = vsel %vm668, %v657, 0
        %v703 = vsel %vm668, %v659, 0
        %v706 = vsel %vm668, %v661, 0
        %v709 = vsel %vm668, %v663, 0
        %v712 = vsel %vm668, %v665, 0
        %v715 = vsel %vm668, %v667, 0
        %vm717 = vcmask 1043456
        %v719 = vsel %vm717, %v638, 0
        %v722 = vsel %vm717, %v639, 0
        %724 = vmatpush.bf16.msra.mxu0 0
        %725 = vmatpush.bf16.msra.mxu0 0
        %726 = vmatpush.bf16.msra.mxu0 0
        %727 = vmatpush.bf16.msra.mxu0 0
        %728 = vmatpush.bf16.msra.mxu0 0
        %729 = vmatpush.bf16.msra.mxu0 0
        %730 = vmatpush.bf16.msra.mxu0 0
        %731 = vmatpush.bf16.msra.mxu0 %v719
        %732 = vmatmul.bf16.gmra.mxu0 %v670
        %v733 = vpop.f32.mrf.mxu0
        %v734 = vadd.f32 0.0, %v733
        %v735 = vpop.f32.mrf.mxu0
        %v736 = vadd.f32 0.0, %v735
        %737 = vmatmul.bf16.gmra.mxu0 %v673
        %v738 = vpop.f32.mrf.mxu0
        %v739 = vadd.f32 0.0, %v738
        %v740 = vpop.f32.mrf.mxu0
        %v741 = vadd.f32 0.0, %v740
        %742 = vmatmul.bf16.gmra.mxu0 %v676
        %v743 = vpop.f32.mrf.mxu0
        %v744 = vadd.f32 0.0, %v743
        %v745 = vpop.f32.mrf.mxu0
        %v746 = vadd.f32 0.0, %v745
        %747 = vmatmul.bf16.gmra.mxu0 %v679
        %v748 = vpop.f32.mrf.mxu0
        %v749 = vadd.f32 0.0, %v748
        %v750 = vpop.f32.mrf.mxu0
        %v751 = vadd.f32 0.0, %v750
        %752 = vmatmul.bf16.gmra.mxu0 %v682
        %v753 = vpop.f32.mrf.mxu0
        %v754 = vadd.f32 0.0, %v753
        %v755 = vpop.f32.mrf.mxu0
        %v756 = vadd.f32 0.0, %v755
        %757 = vmatmul.bf16.gmra.mxu0 %v685
        %v758 = vpop.f32.mrf.mxu0
        %v759 = vadd.f32 0.0, %v758
        %v760 = vpop.f32.mrf.mxu0
        %v761 = vadd.f32 0.0, %v760
        %762 = vmatmul.bf16.gmra.mxu0 %v688
        %v763 = vpop.f32.mrf.mxu0
        %v764 = vadd.f32 0.0, %v763
        %v765 = vpop.f32.mrf.mxu0
        %v766 = vadd.f32 0.0, %v765
        %767 = vmatmul.bf16.gmra.mxu0 %v691
        %v768 = vpop.f32.mrf.mxu0
        %v769 = vadd.f32 0.0, %v768
        %v770 = vpop.f32.mrf.mxu0
        %v771 = vadd.f32 0.0, %v770
        %772 = vmatmul.bf16.gmra.mxu0 %v694
        %v773 = vpop.f32.mrf.mxu0
        %v774 = vadd.f32 0.0, %v773
        %v775 = vpop.f32.mrf.mxu0
        %v776 = vadd.f32 0.0, %v775
        %777 = vmatmul.bf16.gmra.mxu0 %v697
        %v778 = vpop.f32.mrf.mxu0
        %v779 = vadd.f32 0.0, %v778
        %v780 = vpop.f32.mrf.mxu0
        %v781 = vadd.f32 0.0, %v780
        %782 = vmatmul.bf16.gmra.mxu0 %v700
        %v783 = vpop.f32.mrf.mxu0
        %v784 = vadd.f32 0.0, %v783
        %v785 = vpop.f32.mrf.mxu0
        %v786 = vadd.f32 0.0, %v785
        %787 = vmatmul.bf16.gmra.mxu0 %v703
        %v788 = vpop.f32.mrf.mxu0
        %v789 = vadd.f32 0.0, %v788
        %v790 = vpop.f32.mrf.mxu0
        %v791 = vadd.f32 0.0, %v790
        %792 = vmatmul.bf16.gmra.mxu0 %v706
        %v793 = vpop.f32.mrf.mxu0
        %v794 = vadd.f32 0.0, %v793
        %v795 = vpop.f32.mrf.mxu0
        %v796 = vadd.f32 0.0, %v795
        %797 = vmatmul.bf16.gmra.mxu0 %v709
        %v798 = vpop.f32.mrf.mxu0
        %v799 = vadd.f32 0.0, %v798
        %v800 = vpop.f32.mrf.mxu0
        %v801 = vadd.f32 0.0, %v800
        %802 = vmatmul.bf16.gmra.mxu0 %v712
        %v803 = vpop.f32.mrf.mxu0
        %v804 = vadd.f32 0.0, %v803
        %v805 = vpop.f32.mrf.mxu0
        %v806 = vadd.f32 0.0, %v805
        %807 = vmatmul.bf16.gmra.mxu0 %v715
        %v808 = vpop.f32.mrf.mxu0
        %v809 = vadd.f32 0.0, %v808
        %v810 = vpop.f32.mrf.mxu0
        %v811 = vadd.f32 0.0, %v810
        %812 = vdwg.mxu0
        %813 = vmatpush.bf16.msra.mxu0 0
        %814 = vmatpush.bf16.msra.mxu0 0
        %815 = vmatpush.bf16.msra.mxu0 0
        %816 = vmatpush.bf16.msra.mxu0 0
        %817 = vmatpush.bf16.msra.mxu0 0
        %818 = vmatpush.bf16.msra.mxu0 0
        %819 = vmatpush.bf16.msra.mxu0 0
        %820 = vmatpush.bf16.msra.mxu0 %v722
        %821 = vmatmul.bf16.gmra.mxu0 %v670
        %v822 = vpop.f32.mrf.mxu0
        %v823 = vadd.f32 0.0, %v822
        %v824 = vpop.f32.mrf.mxu0
        %v825 = vadd.f32 0.0, %v824
        %826 = vmatmul.bf16.gmra.mxu0 %v673
        %v827 = vpop.f32.mrf.mxu0
        %v828 = vadd.f32 0.0, %v827
        %v829 = vpop.f32.mrf.mxu0
        %v830 = vadd.f32 0.0, %v829
        %831 = vmatmul.bf16.gmra.mxu0 %v676
        %v832 = vpop.f32.mrf.mxu0
        %v833 = vadd.f32 0.0, %v832
        %v834 = vpop.f32.mrf.mxu0
        %v835 = vadd.f32 0.0, %v834
        %836 = vmatmul.bf16.gmra.mxu0 %v679
        %v837 = vpop.f32.mrf.mxu0
        %v838 = vadd.f32 0.0, %v837
        %v839 = vpop.f32.mrf.mxu0
        %v840 = vadd.f32 0.0, %v839
        %841 = vmatmul.bf16.gmra.mxu0 %v682
        %v842 = vpop.f32.mrf.mxu0
        %v843 = vadd.f32 0.0, %v842
        %v844 = vpop.f32.mrf.mxu0
        %v845 = vadd.f32 0.0, %v844
        %846 = vmatmul.bf16.gmra.mxu0 %v685
        %v847 = vpop.f32.mrf.mxu0
        %v848 = vadd.f32 0.0, %v847
        %v849 = vpop.f32.mrf.mxu0
        %v850 = vadd.f32 0.0, %v849
        %851 = vmatmul.bf16.gmra.mxu0 %v688
        %v852 = vpop.f32.mrf.mxu0
        %v853 = vadd.f32 0.0, %v852
        %v854 = vpop.f32.mrf.mxu0
        %v855 = vadd.f32 0.0, %v854
        %856 = vmatmul.bf16.gmra.mxu0 %v691
        %v857 = vpop.f32.mrf.mxu0
        %v858 = vadd.f32 0.0, %v857
        %v859 = vpop.f32.mrf.mxu0
        %v860 = vadd.f32 0.0, %v859
        %861 = vmatmul.bf16.gmra.mxu0 %v694
        %v862 = vpop.f32.mrf.mxu0
        %v863 = vadd.f32 0.0, %v862
        %v864 = vpop.f32.mrf.mxu0
        %v865 = vadd.f32 0.0, %v864
        %866 = vmatmul.bf16.gmra.mxu0 %v697
        %v867 = vpop.f32.mrf.mxu0
        %v868 = vadd.f32 0.0, %v867
        %v869 = vpop.f32.mrf.mxu0
        %v870 = vadd.f32 0.0, %v869
        %871 = vmatmul.bf16.gmra.mxu0 %v700
        %v872 = vpop.f32.mrf.mxu0
        %v873 = vadd.f32 0.0, %v872
        %v874 = vpop.f32.mrf.mxu0
        %v875 = vadd.f32 0.0, %v874
        %876 = vmatmul.bf16.gmra.mxu0 %v703
        %v877 = vpop.f32.mrf.mxu0
        %v878 = vadd.f32 0.0, %v877
        %v879 = vpop.f32.mrf.mxu0
        %v880 = vadd.f32 0.0, %v879
        %881 = vmatmul.bf16.gmra.mxu0 %v706
        %v882 = vpop.f32.mrf.mxu0
        %v883 = vadd.f32 0.0, %v882
        %v884 = vpop.f32.mrf.mxu0
        %v885 = vadd.f32 0.0, %v884
        %886 = vmatmul.bf16.gmra.mxu0 %v709
        %v887 = vpop.f32.mrf.mxu0
        %v888 = vadd.f32 0.0, %v887
        %v889 = vpop.f32.mrf.mxu0
        %v890 = vadd.f32 0.0, %v889
        %891 = vmatmul.bf16.gmra.mxu0 %v712
        %v892 = vpop.f32.mrf.mxu0
        %v893 = vadd.f32 0.0, %v892
        %v894 = vpop.f32.mrf.mxu0
        %v895 = vadd.f32 0.0, %v894
        %896 = vmatmul.bf16.gmra.mxu0 %v715
        %v897 = vpop.f32.mrf.mxu0
        %v898 = vadd.f32 0.0, %v897
        %v899 = vpop.f32.mrf.mxu0
        %v900 = vadd.f32 0.0, %v899
        %901 = vdwg.mxu0
        %v902 = vmul.f32 %v734, 0.35355338
        %v903 = vmul.f32 %v823, 0.35355338
        %v904 = vmul.f32 %v736, 0.35355338
        %v905 = vmul.f32 %v825, 0.35355338
        %v906 = vmul.f32 %v739, 0.35355338
        %v907 = vmul.f32 %v828, 0.35355338
        %v908 = vmul.f32 %v741, 0.35355338
        %v909 = vmul.f32 %v830, 0.35355338
        %v910 = vmul.f32 %v744, 0.35355338
        %v911 = vmul.f32 %v833, 0.35355338
        %v912 = vmul.f32 %v746, 0.35355338
        %v913 = vmul.f32 %v835, 0.35355338
        %v914 = vmul.f32 %v749, 0.35355338
        %v915 = vmul.f32 %v838, 0.35355338
        %v916 = vmul.f32 %v751, 0.35355338
        %v917 = vmul.f32 %v840, 0.35355338
        %v918 = vmul.f32 %v754, 0.35355338
        %v919 = vmul.f32 %v843, 0.35355338
        %v920 = vmul.f32 %v756, 0.35355338
        %v921 = vmul.f32 %v845, 0.35355338
        %v922 = vmul.f32 %v759, 0.35355338
        %v923 = vmul.f32 %v848, 0.35355338
        %v924 = vmul.f32 %v761, 0.35355338
        %v925 = vmul.f32 %v850, 0.35355338
        %v926 = vmul.f32 %v764, 0.35355338
        %v927 = vmul.f32 %v853, 0.35355338
        %v928 = vmul.f32 %v766, 0.35355338
        %v929 = vmul.f32 %v855, 0.35355338
        %v930 = vmul.f32 %v769, 0.35355338
        %v931 = vmul.f32 %v858, 0.35355338
        %v932 = vmul.f32 %v771, 0.35355338
        %v933 = vmul.f32 %v860, 0.35355338
        %v934 = vmul.f32 %v774, 0.35355338
        %v935 = vmul.f32 %v863, 0.35355338
        %v936 = vmul.f32 %v776, 0.35355338
        %v937 = vmul.f32 %v865, 0.35355338
        %v938 = vmul.f32 %v779, 0.35355338
        %v939 = vmul.f32 %v868, 0.35355338
        %v940 = vmul.f32 %v781, 0.35355338
        %v941 = vmul.f32 %v870, 0.35355338
        %v942 = vmul.f32 %v784, 0.35355338
        %v943 = vmul.f32 %v873, 0.35355338
        %v944 = vmul.f32 %v786, 0.35355338
        %v945 = vmul.f32 %v875, 0.35355338
        %v946 = vmul.f32 %v789, 0.35355338
        %v947 = vmul.f32 %v878, 0.35355338
        %v948 = vmul.f32 %v791, 0.35355338
        %v949 = vmul.f32 %v880, 0.35355338
        %v950 = vmul.f32 %v794, 0.35355338
        %v951 = vmul.f32 %v883, 0.35355338
        %v952 = vmul.f32 %v796, 0.35355338
        %v953 = vmul.f32 %v885, 0.35355338
        %v954 = vmul.f32 %v799, 0.35355338
        %v955 = vmul.f32 %v888, 0.35355338
        %v956 = vmul.f32 %v801, 0.35355338
        %v957 = vmul.f32 %v890, 0.35355338
        %v958 = vmul.f32 %v804, 0.35355338
        %v959 = vmul.f32 %v893, 0.35355338
        %v960 = vmul.f32 %v806, 0.35355338
        %v961 = vmul.f32 %v895, 0.35355338
        %v962 = vmul.f32 %v809, 0.35355338
        %v963 = vmul.f32 %v898, 0.35355338
        %v964 = vmul.f32 %v811, 0.35355338
        %v965 = vmul.f32 %v900, 0.35355338
        %v966 = vmax.f32 %v902, %v906
        %v967 = vmax.f32 %v904, %v908
        %v968 = vmax.f32 %v966, %v910
        %v969 = vmax.f32 %v967, %v912
        %v970 = vmax.f32 %v968, %v914
        %v971 = vmax.f32 %v969, %v916
        %v972 = vmax.f32 %v970, %v918
        %v973 = vmax.f32 %v971, %v920
        %v974 = vmax.f32 %v972, %v922
        %v975 = vmax.f32 %v973, %v924
        %v976 = vmax.f32 %v974, %v926
        %v977 = vmax.f32 %v975, %v928
        %v978 = vmax.f32 %v976, %v930
        %v979 = vmax.f32 %v977, %v932
        %v980 = vmax.f32 %v978, %v934
        %v981 = vmax.f32 %v979, %v936
        %v982 = vmax.f32 %v980, %v938
        %v983 = vmax.f32 %v981, %v940
        %v984 = vmax.f32 %v982, %v942
        %v985 = vmax.f32 %v983, %v944
        %v986 = vmax.f32 %v984, %v946
        %v987 = vmax.f32 %v985, %v948
        %v988 = vmax.f32 %v986, %v950
        %v989 = vmax.f32 %v987, %v952
        %v990 = vmax.f32 %v988, %v954
        %v991 = vmax.f32 %v989, %v956
        %v992 = vmax.f32 %v990, %v958
        %v993 = vmax.f32 %v991, %v960
        %v994 = vmax.f32 %v992, %v962
        %v995 = vmax.f32 %v993, %v964
        %v996 = vmax.f32 %v994, %v995
        %v997 = vrot.slane %v996, 4
        %v998 = vmax.f32 %v996, %v997
        %v999 = vrot.slane %v998, 2
        %v1000 = vmax.f32 %v998, %v999
        %v1001 = vrot.slane %v1000, 1
        %v1002 = vmax.f32 %v1000, %v1001
        %v1003 = vmax.f32 %v903, %v907
        %v1004 = vmax.f32 %v905, %v909
        %v1005 = vmax.f32 %v1003, %v911
        %v1006 = vmax.f32 %v1004, %v913
        %v1007 = vmax.f32 %v1005, %v915
        %v1008 = vmax.f32 %v1006, %v917
        %v1009 = vmax.f32 %v1007, %v919
        %v1010 = vmax.f32 %v1008, %v921
        %v1011 = vmax.f32 %v1009, %v923
        %v1012 = vmax.f32 %v1010, %v925
        %v1013 = vmax.f32 %v1011, %v927
        %v1014 = vmax.f32 %v1012, %v929
        %v1015 = vmax.f32 %v1013, %v931
        %v1016 = vmax.f32 %v1014, %v933
        %v1017 = vmax.f32 %v1015, %v935
        %v1018 = vmax.f32 %v1016, %v937
        %v1019 = vmax.f32 %v1017, %v939
        %v1020 = vmax.f32 %v1018, %v941
        %v1021 = vmax.f32 %v1019, %v943
        %v1022 = vmax.f32 %v1020, %v945
        %v1023 = vmax.f32 %v1021, %v947
        %v1024 = vmax.f32 %v1022, %v949
        %v1025 = vmax.f32 %v1023, %v951
        %v1026 = vmax.f32 %v1024, %v953
        %v1027 = vmax.f32 %v1025, %v955
        %v1028 = vmax.f32 %v1026, %v957
        %v1029 = vmax.f32 %v1027, %v959
        %v1030 = vmax.f32 %v1028, %v961
        %v1031 = vmax.f32 %v1029, %v963
        %v1032 = vmax.f32 %v1030, %v965
        %v1033 = vmax.f32 %v1031, %v1032
        %v1034 = vrot.slane %v1033, 4
        %v1035 = vmax.f32 %v1033, %v1034
        %v1036 = vrot.slane %v1035, 2
        %v1037 = vmax.f32 %v1035, %v1036
        %v1038 = vrot.slane %v1037, 1
        %v1039 = vmax.f32 %v1037, %v1038
        %v1040 = vsub.f32 %v902, %v1002
        %v1041 = vsub.f32 %v903, %v1039
        %v1042 = vsub.f32 %v904, %v1002
        %v1043 = vsub.f32 %v905, %v1039
        %v1044 = vsub.f32 %v906, %v1002
        %v1045 = vsub.f32 %v907, %v1039
        %v1046 = vsub.f32 %v908, %v1002
        %v1047 = vsub.f32 %v909, %v1039
        %v1048 = vsub.f32 %v910, %v1002
        %v1049 = vsub.f32 %v911, %v1039
        %v1050 = vsub.f32 %v912, %v1002
        %v1051 = vsub.f32 %v913, %v1039
        %v1052 = vsub.f32 %v914, %v1002
        %v1053 = vsub.f32 %v915, %v1039
        %v1054 = vsub.f32 %v916, %v1002
        %v1055 = vsub.f32 %v917, %v1039
        %v1056 = vsub.f32 %v918, %v1002
        %v1057 = vsub.f32 %v919, %v1039
        %v1058 = vsub.f32 %v920, %v1002
        %v1059 = vsub.f32 %v921, %v1039
        %v1060 = vsub.f32 %v922, %v1002
        %v1061 = vsub.f32 %v923, %v1039
        %v1062 = vsub.f32 %v924, %v1002
        %v1063 = vsub.f32 %v925, %v1039
        %v1064 = vsub.f32 %v926, %v1002
        %v1065 = vsub.f32 %v927, %v1039
        %v1066 = vsub.f32 %v928, %v1002
        %v1067 = vsub.f32 %v929, %v1039
        %v1068 = vsub.f32 %v930, %v1002
        %v1069 = vsub.f32 %v931, %v1039
        %v1070 = vsub.f32 %v932, %v1002
        %v1071 = vsub.f32 %v933, %v1039
        %v1072 = vsub.f32 %v934, %v1002
        %v1073 = vsub.f32 %v935, %v1039
        %v1074 = vsub.f32 %v936, %v1002
        %v1075 = vsub.f32 %v937, %v1039
        %v1076 = vsub.f32 %v938, %v1002
        %v1077 = vsub.f32 %v939, %v1039
        %v1078 = vsub.f32 %v940, %v1002
        %v1079 = vsub.f32 %v941, %v1039
        %v1080 = vsub.f32 %v942, %v1002
        %v1081 = vsub.f32 %v943, %v1039
        %v1082 = vsub.f32 %v944, %v1002
        %v1083 = vsub.f32 %v945, %v1039
        %v1084 = vsub.f32 %v946, %v1002
        %v1085 = vsub.f32 %v947, %v1039
        %v1086 = vsub.f32 %v948, %v1002
        %v1087 = vsub.f32 %v949, %v1039
        %v1088 = vsub.f32 %v950, %v1002
        %v1089 = vsub.f32 %v951, %v1039
        %v1090 = vsub.f32 %v952, %v1002
        %v1091 = vsub.f32 %v953, %v1039
        %v1092 = vsub.f32 %v954, %v1002
        %v1093 = vsub.f32 %v955, %v1039
        %v1094 = vsub.f32 %v956, %v1002
        %v1095 = vsub.f32 %v957, %v1039
        %v1096 = vsub.f32 %v958, %v1002
        %v1097 = vsub.f32 %v959, %v1039
        %v1098 = vsub.f32 %v960, %v1002
        %v1099 = vsub.f32 %v961, %v1039
        %v1100 = vsub.f32 %v962, %v1002
        %v1101 = vsub.f32 %v963, %v1039
        %v1102 = vsub.f32 %v964, %v1002
        %v1103 = vsub.f32 %v965, %v1039
        %v1104 = vmul.f32 %v1040, 1.442695
        %v1105 = vpow.pop %v1104
        %v1106 = vmul.f32 %v1041, 1.442695
        %v1107 = vpow.pop %v1106
        %v1108 = vmul.f32 %v1042, 1.442695
        %v1109 = vpow.pop %v1108
        %v1110 = vmul.f32 %v1043, 1.442695
        %v1111 = vpow.pop %v1110
        %v1112 = vmul.f32 %v1044, 1.442695
        %v1113 = vpow.pop %v1112
        %v1114 = vmul.f32 %v1045, 1.442695
        %v1115 = vpow.pop %v1114
        %v1116 = vmul.f32 %v1046, 1.442695
        %v1117 = vpow.pop %v1116
        %v1118 = vmul.f32 %v1047, 1.442695
        %v1119 = vpow.pop %v1118
        %v1120 = vmul.f32 %v1048, 1.442695
        %v1121 = vpow.pop %v1120
        %v1122 = vmul.f32 %v1049, 1.442695
        %v1123 = vpow.pop %v1122
        %v1124 = vmul.f32 %v1050, 1.442695
        %v1125 = vpow.pop %v1124
        %v1126 = vmul.f32 %v1051, 1.442695
        %v1127 = vpow.pop %v1126
        %v1128 = vmul.f32 %v1052, 1.442695
        %v1129 = vpow.pop %v1128
        %v1130 = vmul.f32 %v1053, 1.442695
        %v1131 = vpow.pop %v1130
        %v1132 = vmul.f32 %v1054, 1.442695
        %v1133 = vpow.pop %v1132
        %v1134 = vmul.f32 %v1055, 1.442695
        %v1135 = vpow.pop %v1134
        %v1136 = vmul.f32 %v1056, 1.442695
        %v1137 = vpow.pop %v1136
        %v1138 = vmul.f32 %v1057, 1.442695
        %v1139 = vpow.pop %v1138
        %v1140 = vmul.f32 %v1058, 1.442695
        %v1141 = vpow.pop %v1140
        %v1142 = vmul.f32 %v1059, 1.442695
        %v1143 = vpow.pop %v1142
        %v1144 = vmul.f32 %v1060, 1.442695
        %v1145 = vpow.pop %v1144
        %v1146 = vmul.f32 %v1061, 1.442695
        %v1147 = vpow.pop %v1146
        %v1148 = vmul.f32 %v1062, 1.442695
        %v1149 = vpow.pop %v1148
        %v1150 = vmul.f32 %v1063, 1.442695
        %v1151 = vpow.pop %v1150
        %v1152 = vmul.f32 %v1064, 1.442695
        %v1153 = vpow.pop %v1152
        %v1154 = vmul.f32 %v1065, 1.442695
        %v1155 = vpow.pop %v1154
        %v1156 = vmul.f32 %v1066, 1.442695
        %v1157 = vpow.pop %v1156
        %v1158 = vmul.f32 %v1067, 1.442695
        %v1159 = vpow.pop %v1158
        %v1160 = vmul.f32 %v1068, 1.442695
        %v1161 = vpow.pop %v1160
        %v1162 = vmul.f32 %v1069, 1.442695
        %v1163 = vpow.pop %v1162
        %v1164 = vmul.f32 %v1070, 1.442695
        %v1165 = vpow.pop %v1164
        %v1166 = vmul.f32 %v1071, 1.442695
        %v1167 = vpow.pop %v1166
        %v1168 = vmul.f32 %v1072, 1.442695
        %v1169 = vpow.pop %v1168
        %v1170 = vmul.f32 %v1073, 1.442695
        %v1171 = vpow.pop %v1170
        %v1172 = vmul.f32 %v1074, 1.442695
        %v1173 = vpow.pop %v1172
        %v1174 = vmul.f32 %v1075, 1.442695
        %v1175 = vpow.pop %v1174
        %v1176 = vmul.f32 %v1076, 1.442695
        %v1177 = vpow.pop %v1176
        %v1178 = vmul.f32 %v1077, 1.442695
        %v1179 = vpow.pop %v1178
        %v1180 = vmul.f32 %v1078, 1.442695
        %v1181 = vpow.pop %v1180
        %v1182 = vmul.f32 %v1079, 1.442695
        %v1183 = vpow.pop %v1182
        %v1184 = vmul.f32 %v1080, 1.442695
        %v1185 = vpow.pop %v1184
        %v1186 = vmul.f32 %v1081, 1.442695
        %v1187 = vpow.pop %v1186
        %v1188 = vmul.f32 %v1082, 1.442695
        %v1189 = vpow.pop %v1188
        %v1190 = vmul.f32 %v1083, 1.442695
        %v1191 = vpow.pop %v1190
        %v1192 = vmul.f32 %v1084, 1.442695
        %v1193 = vpow.pop %v1192
        %v1194 = vmul.f32 %v1085, 1.442695
        %v1195 = vpow.pop %v1194
        %v1196 = vmul.f32 %v1086, 1.442695
        %v1197 = vpow.pop %v1196
        %v1198 = vmul.f32 %v1087, 1.442695
        %v1199 = vpow.pop %v1198
        %v1200 = vmul.f32 %v1088, 1.442695
        %v1201 = vpow.pop %v1200
        %v1202 = vmul.f32 %v1089, 1.442695
        %v1203 = vpow.pop %v1202
        %v1204 = vmul.f32 %v1090, 1.442695
        %v1205 = vpow.pop %v1204
        %v1206 = vmul.f32 %v1091, 1.442695
        %v1207 = vpow.pop %v1206
        %v1208 = vmul.f32 %v1092, 1.442695
        %v1209 = vpow.pop %v1208
        %v1210 = vmul.f32 %v1093, 1.442695
        %v1211 = vpow.pop %v1210
        %v1212 = vmul.f32 %v1094, 1.442695
        %v1213 = vpow.pop %v1212
        %v1214 = vmul.f32 %v1095, 1.442695
        %v1215 = vpow.pop %v1214
        %v1216 = vmul.f32 %v1096, 1.442695
        %v1217 = vpow.pop %v1216
        %v1218 = vmul.f32 %v1097, 1.442695
        %v1219 = vpow.pop %v1218
        %v1220 = vmul.f32 %v1098, 1.442695
        %v1221 = vpow.pop %v1220
        %v1222 = vmul.f32 %v1099, 1.442695
        %v1223 = vpow.pop %v1222
        %v1224 = vmul.f32 %v1100, 1.442695
        %v1225 = vpow.pop %v1224
        %v1226 = vmul.f32 %v1101, 1.442695
        %v1227 = vpow.pop %v1226
        %v1228 = vmul.f32 %v1102, 1.442695
        %v1229 = vpow.pop %v1228
        %v1230 = vmul.f32 %v1103, 1.442695
        %v1231 = vpow.pop %v1230
        %v1232 = vadd.f32 %v1105, %v1109
        %v1233 = vadd.f32 %v1232, %v1113
        %v1234 = vadd.f32 %v1233, %v1117
        %v1235 = vadd.f32 %v1234, %v1121
        %v1236 = vadd.f32 %v1235, %v1125
        %v1237 = vadd.f32 %v1236, %v1129
        %v1238 = vadd.f32 %v1237, %v1133
        %v1239 = vadd.f32 %v1238, %v1137
        %v1240 = vadd.f32 %v1239, %v1141
        %v1241 = vadd.f32 %v1240, %v1145
        %v1242 = vadd.f32 %v1241, %v1149
        %v1243 = vadd.f32 %v1242, %v1153
        %v1244 = vadd.f32 %v1243, %v1157
        %v1245 = vadd.f32 %v1244, %v1161
        %v1246 = vadd.f32 %v1245, %v1165
        %v1247 = vadd.f32 %v1246, %v1169
        %v1248 = vadd.f32 %v1247, %v1173
        %v1249 = vadd.f32 %v1248, %v1177
        %v1250 = vadd.f32 %v1249, %v1181
        %v1251 = vadd.f32 %v1250, %v1185
        %v1252 = vadd.f32 %v1251, %v1189
        %v1253 = vadd.f32 %v1252, %v1193
        %v1254 = vadd.f32 %v1253, %v1197
        %v1255 = vadd.f32 %v1254, %v1201
        %v1256 = vadd.f32 %v1255, %v1205
        %v1257 = vadd.f32 %v1256, %v1209
        %v1258 = vadd.f32 %v1257, %v1213
        %v1259 = vadd.f32 %v1258, %v1217
        %v1260 = vadd.f32 %v1259, %v1221
        %v1261 = vadd.f32 %v1260, %v1225
        %v1262 = vadd.f32 %v1261, %v1229
        %v1263 = vrot.slane %v1262, 4
        %v1264 = vadd.f32 %v1262, %v1263
        %v1265 = vrot.slane %v1264, 2
        %v1266 = vadd.f32 %v1264, %v1265
        %v1267 = vrot.slane %v1266, 1
        %v1268 = vadd.f32 %v1266, %v1267
        %v1269 = vadd.f32 %v1107, %v1111
        %v1270 = vadd.f32 %v1269, %v1115
        %v1271 = vadd.f32 %v1270, %v1119
        %v1272 = vadd.f32 %v1271, %v1123
        %v1273 = vadd.f32 %v1272, %v1127
        %v1274 = vadd.f32 %v1273, %v1131
        %v1275 = vadd.f32 %v1274, %v1135
        %v1276 = vadd.f32 %v1275, %v1139
        %v1277 = vadd.f32 %v1276, %v1143
        %v1278 = vadd.f32 %v1277, %v1147
        %v1279 = vadd.f32 %v1278, %v1151
        %v1280 = vadd.f32 %v1279, %v1155
        %v1281 = vadd.f32 %v1280, %v1159
        %v1282 = vadd.f32 %v1281, %v1163
        %v1283 = vadd.f32 %v1282, %v1167
        %v1284 = vadd.f32 %v1283, %v1171
        %v1285 = vadd.f32 %v1284, %v1175
        %v1286 = vadd.f32 %v1285, %v1179
        %v1287 = vadd.f32 %v1286, %v1183
        %v1288 = vadd.f32 %v1287, %v1187
        %v1289 = vadd.f32 %v1288, %v1191
        %v1290 = vadd.f32 %v1289, %v1195
        %v1291 = vadd.f32 %v1290, %v1199
        %v1292 = vadd.f32 %v1291, %v1203
        %v1293 = vadd.f32 %v1292, %v1207
        %v1294 = vadd.f32 %v1293, %v1211
        %v1295 = vadd.f32 %v1294, %v1215
        %v1296 = vadd.f32 %v1295, %v1219
        %v1297 = vadd.f32 %v1296, %v1223
        %v1298 = vadd.f32 %v1297, %v1227
        %v1299 = vadd.f32 %v1298, %v1231
        %v1300 = vrot.slane %v1299, 4
        %v1301 = vadd.f32 %v1299, %v1300
        %v1302 = vrot.slane %v1301, 2
        %v1303 = vadd.f32 %v1301, %v1302
        %v1304 = vrot.slane %v1303, 1
        %v1305 = vadd.f32 %v1303, %v1304
        %v1306 = vpack.c.bf16 %v1109, %v1105
        %v1307 = vpack.c.bf16 %v1111, %v1107
        %v1308 = vpack.c.bf16 %v1117, %v1113
        %v1309 = vpack.c.bf16 %v1119, %v1115
        %v1310 = vpack.c.bf16 %v1125, %v1121
        %v1311 = vpack.c.bf16 %v1127, %v1123
        %v1312 = vpack.c.bf16 %v1133, %v1129
        %v1313 = vpack.c.bf16 %v1135, %v1131
        %v1314 = vpack.c.bf16 %v1141, %v1137
        %v1315 = vpack.c.bf16 %v1143, %v1139
        %v1316 = vpack.c.bf16 %v1149, %v1145
        %v1317 = vpack.c.bf16 %v1151, %v1147
        %v1318 = vpack.c.bf16 %v1157, %v1153
        %v1319 = vpack.c.bf16 %v1159, %v1155
        %v1320 = vpack.c.bf16 %v1165, %v1161
        %v1321 = vpack.c.bf16 %v1167, %v1163
        %v1322 = vpack.c.bf16 %v1173, %v1169
        %v1323 = vpack.c.bf16 %v1175, %v1171
        %v1324 = vpack.c.bf16 %v1181, %v1177
        %v1325 = vpack.c.bf16 %v1183, %v1179
        %v1326 = vpack.c.bf16 %v1189, %v1185
        %v1327 = vpack.c.bf16 %v1191, %v1187
        %v1328 = vpack.c.bf16 %v1197, %v1193
        %v1329 = vpack.c.bf16 %v1199, %v1195
        %v1330 = vpack.c.bf16 %v1205, %v1201
        %v1331 = vpack.c.bf16 %v1207, %v1203
        %v1332 = vpack.c.bf16 %v1213, %v1209
        %v1333 = vpack.c.bf16 %v1215, %v1211
        %v1334 = vpack.c.bf16 %v1221, %v1217
        %v1335 = vpack.c.bf16 %v1223, %v1219
        %v1336 = vpack.c.bf16 %v1229, %v1225
        %v1337 = vpack.c.bf16 %v1231, %v1227
        %1338 = vmatpush.bf16.msra.mxu0 %v1320
        %1339 = vmatpush.bf16.msra.mxu0 %v1318
        %1340 = vmatpush.bf16.msra.mxu0 %v1316
        %1341 = vmatpush.bf16.msra.mxu0 %v1314
        %1342 = vmatpush.bf16.msra.mxu0 %v1312
        %1343 = vmatpush.bf16.msra.mxu0 %v1310
        %1344 = vmatpush.bf16.msra.mxu0 %v1308
        %1345 = vmatpush.bf16.msra.mxu0 %v1306
        %1346 = vmatmul.bf16.gmra.mxu0 %v642
        %v1347 = vpop.f32.mrf.mxu0
        %v1348 = vadd.f32 0.0, %v1347
        %v1349 = vpop.f32.mrf.mxu0
        %1350 = vdwg.mxu0
        %1351 = vmatpush.bf16.msra.mxu0 %v1336
        %1352 = vmatpush.bf16.msra.mxu0 %v1334
        %1353 = vmatpush.bf16.msra.mxu0 %v1332
        %1354 = vmatpush.bf16.msra.mxu0 %v1330
        %1355 = vmatpush.bf16.msra.mxu0 %v1328
        %1356 = vmatpush.bf16.msra.mxu0 %v1326
        %1357 = vmatpush.bf16.msra.mxu0 %v1324
        %1358 = vmatpush.bf16.msra.mxu0 %v1322
        %1359 = vmatmul.bf16.gmra.mxu0 %v643
        %v1360 = vpop.f32.mrf.mxu0
        %v1361 = vadd.f32 %v1348, %v1360
        %v1362 = vpop.f32.mrf.mxu0
        %1363 = vdwg.mxu0
        %1364 = vmatpush.bf16.msra.mxu0 %v1321
        %1365 = vmatpush.bf16.msra.mxu0 %v1319
        %1366 = vmatpush.bf16.msra.mxu0 %v1317
        %1367 = vmatpush.bf16.msra.mxu0 %v1315
        %1368 = vmatpush.bf16.msra.mxu0 %v1313
        %1369 = vmatpush.bf16.msra.mxu0 %v1311
        %1370 = vmatpush.bf16.msra.mxu0 %v1309
        %1371 = vmatpush.bf16.msra.mxu0 %v1307
        %1372 = vmatmul.bf16.gmra.mxu0 %v642
        %v1373 = vpop.f32.mrf.mxu0
        %v1374 = vadd.f32 0.0, %v1373
        %v1375 = vpop.f32.mrf.mxu0
        %1376 = vdwg.mxu0
        %1377 = vmatpush.bf16.msra.mxu0 %v1337
        %1378 = vmatpush.bf16.msra.mxu0 %v1335
        %1379 = vmatpush.bf16.msra.mxu0 %v1333
        %1380 = vmatpush.bf16.msra.mxu0 %v1331
        %1381 = vmatpush.bf16.msra.mxu0 %v1329
        %1382 = vmatpush.bf16.msra.mxu0 %v1327
        %1383 = vmatpush.bf16.msra.mxu0 %v1325
        %1384 = vmatpush.bf16.msra.mxu0 %v1323
        %1385 = vmatmul.bf16.gmra.mxu0 %v643
        %v1386 = vpop.f32.mrf.mxu0
        %v1387 = vadd.f32 %v1374, %v1386
        %v1388 = vpop.f32.mrf.mxu0
        %1389 = vdwg.mxu0
        %v1390 = vrcp.pop %v1268
        %v1391 = vrcp.pop %v1305
        %v1392 = vmul.f32 %v1361, %v1390
        %v1393 = vmul.f32 %v1387, %v1391
        %1394 = vst [vmem:[#allocation2] sm:$0xff] %v1392
        %1395 = vst [vmem:[#allocation2 + $0x8] sm:$0xff] %v1393
        %v1396 = vpack.c.bf16 %v572, %v572
        %v1397 = vpack.c.bf16 %v611, %v611
        %v1398 = vpack.c.bf16 %v582, %v582
        %v1399 = vpack.c.bf16 %v621, %v621
        %v1400 = vpack.c.bf16 %v592, %v592
        %v1401 = vpack.c.bf16 %v631, %v631
        %1402 = vxpose.binary.xlu0.c.b16.start [1/16] %v1399, %v1398, 128
        %1403 = vxpose.binary.xlu0.c.b16.cont [2/16] 0, 0, 128
        %1404 = vxpose.binary.xlu0.c.b16.cont [3/16] 0, 0, 128
        %1405 = vxpose.binary.xlu0.c.b16.cont [4/16] 0, 0, 128
        %1406 = vxpose.binary.xlu0.c.b16.cont [5/16] 0, 0, 128
        %1407 = vxpose.binary.xlu0.c.b16.cont [6/16] 0, 0, 128
        %1408 = vxpose.binary.xlu0.c.b16.cont [7/16] 0, 0, 128
        %1409 = vxpose.binary.xlu0.c.b16.end [8/16] 0, 0, 128
        %v1410 = vpop.trf.xlu0
        %v1411 = vpop.trf.xlu0
        %v1412 = vpop.trf.xlu0
        %v1413 = vpop.trf.xlu0
        %v1414 = vpop.trf.xlu0
        %v1415 = vpop.trf.xlu0
        %v1416 = vpop.trf.xlu0
        %v1417 = vpop.trf.xlu0
        %v1418 = vpop.trf.xlu0
        %v1419 = vpop.trf.xlu0
        %v1420 = vpop.trf.xlu0
        %v1421 = vpop.trf.xlu0
        %v1422 = vpop.trf.xlu0
        %v1423 = vpop.trf.xlu0
        %v1424 = vpop.trf.xlu0
        %v1425 = vpop.trf.xlu0
        %v1427 = vsel %vm668, %v1410, 0
        %v1430 = vsel %vm668, %v1412, 0
        %v1433 = vsel %vm668, %v1414, 0
        %v1436 = vsel %vm668, %v1416, 0
        %v1439 = vsel %vm668, %v1418, 0
        %v1442 = vsel %vm668, %v1420, 0
        %v1445 = vsel %vm668, %v1422, 0
        %v1448 = vsel %vm668, %v1424, 0
        %v1451 = vsel %vm668, %v1411, 0
        %v1454 = vsel %vm668, %v1413, 0
        %v1457 = vsel %vm668, %v1415, 0
        %v1460 = vsel %vm668, %v1417, 0
        %v1463 = vsel %vm668, %v1419, 0
        %v1466 = vsel %vm668, %v1421, 0
        %v1469 = vsel %vm668, %v1423, 0
        %v1472 = vsel %vm668, %v1425, 0
        %v1475 = vsel %vm717, %v1396, 0
        %v1478 = vsel %vm717, %v1397, 0
        %1480 = vmatpush.bf16.msra.mxu0 0
        %1481 = vmatpush.bf16.msra.mxu0 0
        %1482 = vmatpush.bf16.msra.mxu0 0
        %1483 = vmatpush.bf16.msra.mxu0 0
        %1484 = vmatpush.bf16.msra.mxu0 0
        %1485 = vmatpush.bf16.msra.mxu0 0
        %1486 = vmatpush.bf16.msra.mxu0 0
        %1487 = vmatpush.bf16.msra.mxu0 %v1475
        %1488 = vmatmul.bf16.gmra.mxu0 %v1427
        %v1489 = vpop.f32.mrf.mxu0
        %v1490 = vadd.f32 0.0, %v1489
        %v1491 = vpop.f32.mrf.mxu0
        %v1492 = vadd.f32 0.0, %v1491
        %1493 = vmatmul.bf16.gmra.mxu0 %v1430
        %v1494 = vpop.f32.mrf.mxu0
        %v1495 = vadd.f32 0.0, %v1494
        %v1496 = vpop.f32.mrf.mxu0
        %v1497 = vadd.f32 0.0, %v1496
        %1498 = vmatmul.bf16.gmra.mxu0 %v1433
        %v1499 = vpop.f32.mrf.mxu0
        %v1500 = vadd.f32 0.0, %v1499
        %v1501 = vpop.f32.mrf.mxu0
        %v1502 = vadd.f32 0.0, %v1501
        %1503 = vmatmul.bf16.gmra.mxu0 %v1436
        %v1504 = vpop.f32.mrf.mxu0
        %v1505 = vadd.f32 0.0, %v1504
        %v1506 = vpop.f32.mrf.mxu0
        %v1507 = vadd.f32 0.0, %v1506
        %1508 = vmatmul.bf16.gmra.mxu0 %v1439
        %v1509 = vpop.f32.mrf.mxu0
        %v1510 = vadd.f32 0.0, %v1509
        %v1511 = vpop.f32.mrf.mxu0
        %v1512 = vadd.f32 0.0, %v1511
        %1513 = vmatmul.bf16.gmra.mxu0 %v1442
        %v1514 = vpop.f32.mrf.mxu0
        %v1515 = vadd.f32 0.0, %v1514
        %v1516 = vpop.f32.mrf.mxu0
        %v1517 = vadd.f32 0.0, %v1516
        %1518 = vmatmul.bf16.gmra.mxu0 %v1445
        %v1519 = vpop.f32.mrf.mxu0
        %v1520 = vadd.f32 0.0, %v1519
        %v1521 = vpop.f32.mrf.mxu0
        %v1522 = vadd.f32 0.0, %v1521
        %1523 = vmatmul.bf16.gmra.mxu0 %v1448
        %v1524 = vpop.f32.mrf.mxu0
        %v1525 = vadd.f32 0.0, %v1524
        %v1526 = vpop.f32.mrf.mxu0
        %v1527 = vadd.f32 0.0, %v1526
        %1528 = vmatmul.bf16.gmra.mxu0 %v1451
        %v1529 = vpop.f32.mrf.mxu0
        %v1530 = vadd.f32 0.0, %v1529
        %v1531 = vpop.f32.mrf.mxu0
        %v1532 = vadd.f32 0.0, %v1531
        %1533 = vmatmul.bf16.gmra.mxu0 %v1454
        %v1534 = vpop.f32.mrf.mxu0
        %v1535 = vadd.f32 0.0, %v1534
        %v1536 = vpop.f32.mrf.mxu0
        %v1537 = vadd.f32 0.0, %v1536
        %1538 = vmatmul.bf16.gmra.mxu0 %v1457
        %v1539 = vpop.f32.mrf.mxu0
        %v1540 = vadd.f32 0.0, %v1539
        %v1541 = vpop.f32.mrf.mxu0
        %v1542 = vadd.f32 0.0, %v1541
        %1543 = vmatmul.bf16.gmra.mxu0 %v1460
        %v1544 = vpop.f32.mrf.mxu0
        %v1545 = vadd.f32 0.0, %v1544
        %v1546 = vpop.f32.mrf.mxu0
        %v1547 = vadd.f32 0.0, %v1546
        %1548 = vmatmul.bf16.gmra.mxu0 %v1463
        %v1549 = vpop.f32.mrf.mxu0
        %v1550 = vadd.f32 0.0, %v1549
        %v1551 = vpop.f32.mrf.mxu0
        %v1552 = vadd.f32 0.0, %v1551
        %1553 = vmatmul.bf16.gmra.mxu0 %v1466
        %v1554 = vpop.f32.mrf.mxu0
        %v1555 = vadd.f32 0.0, %v1554
        %v1556 = vpop.f32.mrf.mxu0
        %v1557 = vadd.f32 0.0, %v1556
        %1558 = vmatmul.bf16.gmra.mxu0 %v1469
        %v1559 = vpop.f32.mrf.mxu0
        %v1560 = vadd.f32 0.0, %v1559
        %v1561 = vpop.f32.mrf.mxu0
        %v1562 = vadd.f32 0.0, %v1561
        %1563 = vmatmul.bf16.gmra.mxu0 %v1472
        %v1564 = vpop.f32.mrf.mxu0
        %v1565 = vadd.f32 0.0, %v1564
        %v1566 = vpop.f32.mrf.mxu0
        %v1567 = vadd.f32 0.0, %v1566
        %1568 = vdwg.mxu0
        %1569 = vmatpush.bf16.msra.mxu0 0
        %1570 = vmatpush.bf16.msra.mxu0 0
        %1571 = vmatpush.bf16.msra.mxu0 0
        %1572 = vmatpush.bf16.msra.mxu0 0
        %1573 = vmatpush.bf16.msra.mxu0 0
        %1574 = vmatpush.bf16.msra.mxu0 0
        %1575 = vmatpush.bf16.msra.mxu0 0
        %1576 = vmatpush.bf16.msra.mxu0 %v1478
        %1577 = vmatmul.bf16.gmra.mxu0 %v1427
        %v1578 = vpop.f32.mrf.mxu0
        %v1579 = vadd.f32 0.0, %v1578
        %v1580 = vpop.f32.mrf.mxu0
        %v1581 = vadd.f32 0.0, %v1580
        %1582 = vmatmul.bf16.gmra.mxu0 %v1430
        %v1583 = vpop.f32.mrf.mxu0
        %v1584 = vadd.f32 0.0, %v1583
        %v1585 = vpop.f32.mrf.mxu0
        %v1586 = vadd.f32 0.0, %v1585
        %1587 = vmatmul.bf16.gmra.mxu0 %v1433
        %v1588 = vpop.f32.mrf.mxu0
        %v1589 = vadd.f32 0.0, %v1588
        %v1590 = vpop.f32.mrf.mxu0
        %v1591 = vadd.f32 0.0, %v1590
        %1592 = vmatmul.bf16.gmra.mxu0 %v1436
        %v1593 = vpop.f32.mrf.mxu0
        %v1594 = vadd.f32 0.0, %v1593
        %v1595 = vpop.f32.mrf.mxu0
        %v1596 = vadd.f32 0.0, %v1595
        %1597 = vmatmul.bf16.gmra.mxu0 %v1439
        %v1598 = vpop.f32.mrf.mxu0
        %v1599 = vadd.f32 0.0, %v1598
        %v1600 = vpop.f32.mrf.mxu0
        %v1601 = vadd.f32 0.0, %v1600
        %1602 = vmatmul.bf16.gmra.mxu0 %v1442
        %v1603 = vpop.f32.mrf.mxu0
        %v1604 = vadd.f32 0.0, %v1603
        %v1605 = vpop.f32.mrf.mxu0
        %v1606 = vadd.f32 0.0, %v1605
        %1607 = vmatmul.bf16.gmra.mxu0 %v1445
        %v1608 = vpop.f32.mrf.mxu0
        %v1609 = vadd.f32 0.0, %v1608
        %v1610 = vpop.f32.mrf.mxu0
        %v1611 = vadd.f32 0.0, %v1610
        %1612 = vmatmul.bf16.gmra.mxu0 %v1448
        %v1613 = vpop.f32.mrf.mxu0
        %v1614 = vadd.f32 0.0, %v1613
        %v1615 = vpop.f32.mrf.mxu0
        %v1616 = vadd.f32 0.0, %v1615
        %1617 = vmatmul.bf16.gmra.mxu0 %v1451
        %v1618 = vpop.f32.mrf.mxu0
        %v1619 = vadd.f32 0.0, %v1618
        %v1620 = vpop.f32.mrf.mxu0
        %v1621 = vadd.f32 0.0, %v1620
        %1622 = vmatmul.bf16.gmra.mxu0 %v1454
        %v1623 = vpop.f32.mrf.mxu0
        %v1624 = vadd.f32 0.0, %v1623
        %v1625 = vpop.f32.mrf.mxu0
        %v1626 = vadd.f32 0.0, %v1625
        %1627 = vmatmul.bf16.gmra.mxu0 %v1457
        %v1628 = vpop.f32.mrf.mxu0
        %v1629 = vadd.f32 0.0, %v1628
        %v1630 = vpop.f32.mrf.mxu0
        %v1631 = vadd.f32 0.0, %v1630
        %1632 = vmatmul.bf16.gmra.mxu0 %v1460
        %v1633 = vpop.f32.mrf.mxu0
        %v1634 = vadd.f32 0.0, %v1633
        %v1635 = vpop.f32.mrf.mxu0
        %v1636 = vadd.f32 0.0, %v1635
        %1637 = vmatmul.bf16.gmra.mxu0 %v1463
        %v1638 = vpop.f32.mrf.mxu0
        %v1639 = vadd.f32 0.0, %v1638
        %v1640 = vpop.f32.mrf.mxu0
        %v1641 = vadd.f32 0.0, %v1640
        %1642 = vmatmul.bf16.gmra.mxu0 %v1466
        %v1643 = vpop.f32.mrf.mxu0
        %v1644 = vadd.f32 0.0, %v1643
        %v1645 = vpop.f32.mrf.mxu0
        %v1646 = vadd.f32 0.0, %v1645
        %1647 = vmatmul.bf16.gmra.mxu0 %v1469
        %v1648 = vpop.f32.mrf.mxu0
        %v1649 = vadd.f32 0.0, %v1648
        %v1650 = vpop.f32.mrf.mxu0
        %v1651 = vadd.f32 0.0, %v1650
        %1652 = vmatmul.bf16.gmra.mxu0 %v1472
        %v1653 = vpop.f32.mrf.mxu0
        %v1654 = vadd.f32 0.0, %v1653
        %v1655 = vpop.f32.mrf.mxu0
        %v1656 = vadd.f32 0.0, %v1655
        %1657 = vdwg.mxu0
        %v1658 = vmul.f32 %v1490, 0.35355338
        %v1659 = vmul.f32 %v1579, 0.35355338
        %v1660 = vmul.f32 %v1492, 0.35355338
        %v1661 = vmul.f32 %v1581, 0.35355338
        %v1662 = vmul.f32 %v1495, 0.35355338
        %v1663 = vmul.f32 %v1584, 0.35355338
        %v1664 = vmul.f32 %v1497, 0.35355338
        %v1665 = vmul.f32 %v1586, 0.35355338
        %v1666 = vmul.f32 %v1500, 0.35355338
        %v1667 = vmul.f32 %v1589, 0.35355338
        %v1668 = vmul.f32 %v1502, 0.35355338
        %v1669 = vmul.f32 %v1591, 0.35355338
        %v1670 = vmul.f32 %v1505, 0.35355338
        %v1671 = vmul.f32 %v1594, 0.35355338
        %v1672 = vmul.f32 %v1507, 0.35355338
        %v1673 = vmul.f32 %v1596, 0.35355338
        %v1674 = vmul.f32 %v1510, 0.35355338
        %v1675 = vmul.f32 %v1599, 0.35355338
        %v1676 = vmul.f32 %v1512, 0.35355338
        %v1677 = vmul.f32 %v1601, 0.35355338
        %v1678 = vmul.f32 %v1515, 0.35355338
        %v1679 = vmul.f32 %v1604, 0.35355338
        %v1680 = vmul.f32 %v1517, 0.35355338
        %v1681 = vmul.f32 %v1606, 0.35355338
        %v1682 = vmul.f32 %v1520, 0.35355338
        %v1683 = vmul.f32 %v1609, 0.35355338
        %v1684 = vmul.f32 %v1522, 0.35355338
        %v1685 = vmul.f32 %v1611, 0.35355338
        %v1686 = vmul.f32 %v1525, 0.35355338
        %v1687 = vmul.f32 %v1614, 0.35355338
        %v1688 = vmul.f32 %v1527, 0.35355338
        %v1689 = vmul.f32 %v1616, 0.35355338
        %v1690 = vmul.f32 %v1530, 0.35355338
        %v1691 = vmul.f32 %v1619, 0.35355338
        %v1692 = vmul.f32 %v1532, 0.35355338
        %v1693 = vmul.f32 %v1621, 0.35355338
        %v1694 = vmul.f32 %v1535, 0.35355338
        %v1695 = vmul.f32 %v1624, 0.35355338
        %v1696 = vmul.f32 %v1537, 0.35355338
        %v1697 = vmul.f32 %v1626, 0.35355338
        %v1698 = vmul.f32 %v1540, 0.35355338
        %v1699 = vmul.f32 %v1629, 0.35355338
        %v1700 = vmul.f32 %v1542, 0.35355338
        %v1701 = vmul.f32 %v1631, 0.35355338
        %v1702 = vmul.f32 %v1545, 0.35355338
        %v1703 = vmul.f32 %v1634, 0.35355338
        %v1704 = vmul.f32 %v1547, 0.35355338
        %v1705 = vmul.f32 %v1636, 0.35355338
        %v1706 = vmul.f32 %v1550, 0.35355338
        %v1707 = vmul.f32 %v1639, 0.35355338
        %v1708 = vmul.f32 %v1552, 0.35355338
        %v1709 = vmul.f32 %v1641, 0.35355338
        %v1710 = vmul.f32 %v1555, 0.35355338
        %v1711 = vmul.f32 %v1644, 0.35355338
        %v1712 = vmul.f32 %v1557, 0.35355338
        %v1713 = vmul.f32 %v1646, 0.35355338
        %v1714 = vmul.f32 %v1560, 0.35355338
        %v1715 = vmul.f32 %v1649, 0.35355338
        %v1716 = vmul.f32 %v1562, 0.35355338
        %v1717 = vmul.f32 %v1651, 0.35355338
        %v1718 = vmul.f32 %v1565, 0.35355338
        %v1719 = vmul.f32 %v1654, 0.35355338
        %v1720 = vmul.f32 %v1567, 0.35355338
        %v1721 = vmul.f32 %v1656, 0.35355338
        %v1722 = vmax.f32 %v1658, %v1662
        %v1723 = vmax.f32 %v1660, %v1664
        %v1724 = vmax.f32 %v1722, %v1666
        %v1725 = vmax.f32 %v1723, %v1668
        %v1726 = vmax.f32 %v1724, %v1670
        %v1727 = vmax.f32 %v1725, %v1672
        %v1728 = vmax.f32 %v1726, %v1674
        %v1729 = vmax.f32 %v1727, %v1676
        %v1730 = vmax.f32 %v1728, %v1678
        %v1731 = vmax.f32 %v1729, %v1680
        %v1732 = vmax.f32 %v1730, %v1682
        %v1733 = vmax.f32 %v1731, %v1684
        %v1734 = vmax.f32 %v1732, %v1686
        %v1735 = vmax.f32 %v1733, %v1688
        %v1736 = vmax.f32 %v1734, %v1690
        %v1737 = vmax.f32 %v1735, %v1692
        %v1738 = vmax.f32 %v1736, %v1694
        %v1739 = vmax.f32 %v1737, %v1696
        %v1740 = vmax.f32 %v1738, %v1698
        %v1741 = vmax.f32 %v1739, %v1700
        %v1742 = vmax.f32 %v1740, %v1702
        %v1743 = vmax.f32 %v1741, %v1704
        %v1744 = vmax.f32 %v1742, %v1706
        %v1745 = vmax.f32 %v1743, %v1708
        %v1746 = vmax.f32 %v1744, %v1710
        %v1747 = vmax.f32 %v1745, %v1712
        %v1748 = vmax.f32 %v1746, %v1714
        %v1749 = vmax.f32 %v1747, %v1716
        %v1750 = vmax.f32 %v1748, %v1718
        %v1751 = vmax.f32 %v1749, %v1720
        %v1752 = vmax.f32 %v1750, %v1751
        %v1753 = vrot.slane %v1752, 4
        %v1754 = vmax.f32 %v1752, %v1753
        %v1755 = vrot.slane %v1754, 2
        %v1756 = vmax.f32 %v1754, %v1755
        %v1757 = vrot.slane %v1756, 1
        %v1758 = vmax.f32 %v1756, %v1757
        %v1759 = vmax.f32 %v1659, %v1663
        %v1760 = vmax.f32 %v1661, %v1665
        %v1761 = vmax.f32 %v1759, %v1667
        %v1762 = vmax.f32 %v1760, %v1669
        %v1763 = vmax.f32 %v1761, %v1671
        %v1764 = vmax.f32 %v1762, %v1673
        %v1765 = vmax.f32 %v1763, %v1675
        %v1766 = vmax.f32 %v1764, %v1677
        %v1767 = vmax.f32 %v1765, %v1679
        %v1768 = vmax.f32 %v1766, %v1681
        %v1769 = vmax.f32 %v1767, %v1683
        %v1770 = vmax.f32 %v1768, %v1685
        %v1771 = vmax.f32 %v1769, %v1687
        %v1772 = vmax.f32 %v1770, %v1689
        %v1773 = vmax.f32 %v1771, %v1691
        %v1774 = vmax.f32 %v1772, %v1693
        %v1775 = vmax.f32 %v1773, %v1695
        %v1776 = vmax.f32 %v1774, %v1697
        %v1777 = vmax.f32 %v1775, %v1699
        %v1778 = vmax.f32 %v1776, %v1701
        %v1779 = vmax.f32 %v1777, %v1703
        %v1780 = vmax.f32 %v1778, %v1705
        %v1781 = vmax.f32 %v1779, %v1707
        %v1782 = vmax.f32 %v1780, %v1709
        %v1783 = vmax.f32 %v1781, %v1711
        %v1784 = vmax.f32 %v1782, %v1713
        %v1785 = vmax.f32 %v1783, %v1715
        %v1786 = vmax.f32 %v1784, %v1717
        %v1787 = vmax.f32 %v1785, %v1719
        %v1788 = vmax.f32 %v1786, %v1721
        %v1789 = vmax.f32 %v1787, %v1788
        %v1790 = vrot.slane %v1789, 4
        %v1791 = vmax.f32 %v1789, %v1790
        %v1792 = vrot.slane %v1791, 2
        %v1793 = vmax.f32 %v1791, %v1792
        %v1794 = vrot.slane %v1793, 1
        %v1795 = vmax.f32 %v1793, %v1794
        %v1796 = vsub.f32 %v1658, %v1758
        %v1797 = vsub.f32 %v1659, %v1795
        %v1798 = vsub.f32 %v1660, %v1758
        %v1799 = vsub.f32 %v1661, %v1795
        %v1800 = vsub.f32 %v1662, %v1758
        %v1801 = vsub.f32 %v1663, %v1795
        %v1802 = vsub.f32 %v1664, %v1758
        %v1803 = vsub.f32 %v1665, %v1795
        %v1804 = vsub.f32 %v1666, %v1758
        %v1805 = vsub.f32 %v1667, %v1795
        %v1806 = vsub.f32 %v1668, %v1758
        %v1807 = vsub.f32 %v1669, %v1795
        %v1808 = vsub.f32 %v1670, %v1758
        %v1809 = vsub.f32 %v1671, %v1795
        %v1810 = vsub.f32 %v1672, %v1758
        %v1811 = vsub.f32 %v1673, %v1795
        %v1812 = vsub.f32 %v1674, %v1758
        %v1813 = vsub.f32 %v1675, %v1795
        %v1814 = vsub.f32 %v1676, %v1758
        %v1815 = vsub.f32 %v1677, %v1795
        %v1816 = vsub.f32 %v1678, %v1758
        %v1817 = vsub.f32 %v1679, %v1795
        %v1818 = vsub.f32 %v1680, %v1758
        %v1819 = vsub.f32 %v1681, %v1795
        %v1820 = vsub.f32 %v1682, %v1758
        %v1821 = vsub.f32 %v1683, %v1795
        %v1822 = vsub.f32 %v1684, %v1758
        %v1823 = vsub.f32 %v1685, %v1795
        %v1824 = vsub.f32 %v1686, %v1758
        %v1825 = vsub.f32 %v1687, %v1795
        %v1826 = vsub.f32 %v1688, %v1758
        %v1827 = vsub.f32 %v1689, %v1795
        %v1828 = vsub.f32 %v1690, %v1758
        %v1829 = vsub.f32 %v1691, %v1795
        %v1830 = vsub.f32 %v1692, %v1758
        %v1831 = vsub.f32 %v1693, %v1795
        %v1832 = vsub.f32 %v1694, %v1758
        %v1833 = vsub.f32 %v1695, %v1795
        %v1834 = vsub.f32 %v1696, %v1758
        %v1835 = vsub.f32 %v1697, %v1795
        %v1836 = vsub.f32 %v1698, %v1758
        %v1837 = vsub.f32 %v1699, %v1795
        %v1838 = vsub.f32 %v1700, %v1758
        %v1839 = vsub.f32 %v1701, %v1795
        %v1840 = vsub.f32 %v1702, %v1758
        %v1841 = vsub.f32 %v1703, %v1795
        %v1842 = vsub.f32 %v1704, %v1758
        %v1843 = vsub.f32 %v1705, %v1795
        %v1844 = vsub.f32 %v1706, %v1758
        %v1845 = vsub.f32 %v1707, %v1795
        %v1846 = vsub.f32 %v1708, %v1758
        %v1847 = vsub.f32 %v1709, %v1795
        %v1848 = vsub.f32 %v1710, %v1758
        %v1849 = vsub.f32 %v1711, %v1795
        %v1850 = vsub.f32 %v1712, %v1758
        %v1851 = vsub.f32 %v1713, %v1795
        %v1852 = vsub.f32 %v1714, %v1758
        %v1853 = vsub.f32 %v1715, %v1795
        %v1854 = vsub.f32 %v1716, %v1758
        %v1855 = vsub.f32 %v1717, %v1795
        %v1856 = vsub.f32 %v1718, %v1758
        %v1857 = vsub.f32 %v1719, %v1795
        %v1858 = vsub.f32 %v1720, %v1758
        %v1859 = vsub.f32 %v1721, %v1795
        %v1860 = vmul.f32 %v1796, 1.442695
        %v1861 = vpow.pop %v1860
        %v1862 = vmul.f32 %v1797, 1.442695
        %v1863 = vpow.pop %v1862
        %v1864 = vmul.f32 %v1798, 1.442695
        %v1865 = vpow.pop %v1864
        %v1866 = vmul.f32 %v1799, 1.442695
        %v1867 = vpow.pop %v1866
        %v1868 = vmul.f32 %v1800, 1.442695
        %v1869 = vpow.pop %v1868
        %v1870 = vmul.f32 %v1801, 1.442695
        %v1871 = vpow.pop %v1870
        %v1872 = vmul.f32 %v1802, 1.442695
        %v1873 = vpow.pop %v1872
        %v1874 = vmul.f32 %v1803, 1.442695
        %v1875 = vpow.pop %v1874
        %v1876 = vmul.f32 %v1804, 1.442695
        %v1877 = vpow.pop %v1876
        %v1878 = vmul.f32 %v1805, 1.442695
        %v1879 = vpow.pop %v1878
        %v1880 = vmul.f32 %v1806, 1.442695
        %v1881 = vpow.pop %v1880
        %v1882 = vmul.f32 %v1807, 1.442695
        %v1883 = vpow.pop %v1882
        %v1884 = vmul.f32 %v1808, 1.442695
        %v1885 = vpow.pop %v1884
        %v1886 = vmul.f32 %v1809, 1.442695
        %v1887 = vpow.pop %v1886
        %v1888 = vmul.f32 %v1810, 1.442695
        %v1889 = vpow.pop %v1888
        %v1890 = vmul.f32 %v1811, 1.442695
        %v1891 = vpow.pop %v1890
        %v1892 = vmul.f32 %v1812, 1.442695
        %v1893 = vpow.pop %v1892
        %v1894 = vmul.f32 %v1813, 1.442695
        %v1895 = vpow.pop %v1894
        %v1896 = vmul.f32 %v1814, 1.442695
        %v1897 = vpow.pop %v1896
        %v1898 = vmul.f32 %v1815, 1.442695
        %v1899 = vpow.pop %v1898
        %v1900 = vmul.f32 %v1816, 1.442695
        %v1901 = vpow.pop %v1900
        %v1902 = vmul.f32 %v1817, 1.442695
        %v1903 = vpow.pop %v1902
        %v1904 = vmul.f32 %v1818, 1.442695
        %v1905 = vpow.pop %v1904
        %v1906 = vmul.f32 %v1819, 1.442695
        %v1907 = vpow.pop %v1906
        %v1908 = vmul.f32 %v1820, 1.442695
        %v1909 = vpow.pop %v1908
        %v1910 = vmul.f32 %v1821, 1.442695
        %v1911 = vpow.pop %v1910
        %v1912 = vmul.f32 %v1822, 1.442695
        %v1913 = vpow.pop %v1912
        %v1914 = vmul.f32 %v1823, 1.442695
        %v1915 = vpow.pop %v1914
        %v1916 = vmul.f32 %v1824, 1.442695
        %v1917 = vpow.pop %v1916
        %v1918 = vmul.f32 %v1825, 1.442695
        %v1919 = vpow.pop %v1918
        %v1920 = vmul.f32 %v1826, 1.442695
        %v1921 = vpow.pop %v1920
        %v1922 = vmul.f32 %v1827, 1.442695
        %v1923 = vpow.pop %v1922
        %v1924 = vmul.f32 %v1828, 1.442695
        %v1925 = vpow.pop %v1924
        %v1926 = vmul.f32 %v1829, 1.442695
        %v1927 = vpow.pop %v1926
        %v1928 = vmul.f32 %v1830, 1.442695
        %v1929 = vpow.pop %v1928
        %v1930 = vmul.f32 %v1831, 1.442695
        %v1931 = vpow.pop %v1930
        %v1932 = vmul.f32 %v1832, 1.442695
        %v1933 = vpow.pop %v1932
        %v1934 = vmul.f32 %v1833, 1.442695
        %v1935 = vpow.pop %v1934
        %v1936 = vmul.f32 %v1834, 1.442695
        %v1937 = vpow.pop %v1936
        %v1938 = vmul.f32 %v1835, 1.442695
        %v1939 = vpow.pop %v1938
        %v1940 = vmul.f32 %v1836, 1.442695
        %v1941 = vpow.pop %v1940
        %v1942 = vmul.f32 %v1837, 1.442695
        %v1943 = vpow.pop %v1942
        %v1944 = vmul.f32 %v1838, 1.442695
        %v1945 = vpow.pop %v1944
        %v1946 = vmul.f32 %v1839, 1.442695
        %v1947 = vpow.pop %v1946
        %v1948 = vmul.f32 %v1840, 1.442695
        %v1949 = vpow.pop %v1948
        %v1950 = vmul.f32 %v1841, 1.442695
        %v1951 = vpow.pop %v1950
        %v1952 = vmul.f32 %v1842, 1.442695
        %v1953 = vpow.pop %v1952
        %v1954 = vmul.f32 %v1843, 1.442695
        %v1955 = vpow.pop %v1954
        %v1956 = vmul.f32 %v1844, 1.442695
        %v1957 = vpow.pop %v1956
        %v1958 = vmul.f32 %v1845, 1.442695
        %v1959 = vpow.pop %v1958
        %v1960 = vmul.f32 %v1846, 1.442695
        %v1961 = vpow.pop %v1960
        %v1962 = vmul.f32 %v1847, 1.442695
        %v1963 = vpow.pop %v1962
        %v1964 = vmul.f32 %v1848, 1.442695
        %v1965 = vpow.pop %v1964
        %v1966 = vmul.f32 %v1849, 1.442695
        %v1967 = vpow.pop %v1966
        %v1968 = vmul.f32 %v1850, 1.442695
        %v1969 = vpow.pop %v1968
        %v1970 = vmul.f32 %v1851, 1.442695
        %v1971 = vpow.pop %v1970
        %v1972 = vmul.f32 %v1852, 1.442695
        %v1973 = vpow.pop %v1972
        %v1974 = vmul.f32 %v1853, 1.442695
        %v1975 = vpow.pop %v1974
        %v1976 = vmul.f32 %v1854, 1.442695
        %v1977 = vpow.pop %v1976
        %v1978 = vmul.f32 %v1855, 1.442695
        %v1979 = vpow.pop %v1978
        %v1980 = vmul.f32 %v1856, 1.442695
        %v1981 = vpow.pop %v1980
        %v1982 = vmul.f32 %v1857, 1.442695
        %v1983 = vpow.pop %v1982
        %v1984 = vmul.f32 %v1858, 1.442695
        %v1985 = vpow.pop %v1984
        %v1986 = vmul.f32 %v1859, 1.442695
        %v1987 = vpow.pop %v1986
        %v1988 = vadd.f32 %v1861, %v1865
        %v1989 = vadd.f32 %v1988, %v1869
        %v1990 = vadd.f32 %v1989, %v1873
        %v1991 = vadd.f32 %v1990, %v1877
        %v1992 = vadd.f32 %v1991, %v1881
        %v1993 = vadd.f32 %v1992, %v1885
        %v1994 = vadd.f32 %v1993, %v1889
        %v1995 = vadd.f32 %v1994, %v1893
        %v1996 = vadd.f32 %v1995, %v1897
        %v1997 = vadd.f32 %v1996, %v1901
        %v1998 = vadd.f32 %v1997, %v1905
        %v1999 = vadd.f32 %v1998, %v1909
        %v2000 = vadd.f32 %v1999, %v1913
        %v2001 = vadd.f32 %v2000, %v1917
        %v2002 = vadd.f32 %v2001, %v1921
        %v2003 = vadd.f32 %v2002, %v1925
        %v2004 = vadd.f32 %v2003, %v1929
        %v2005 = vadd.f32 %v2004, %v1933
        %v2006 = vadd.f32 %v2005, %v1937
        %v2007 = vadd.f32 %v2006, %v1941
        %v2008 = vadd.f32 %v2007, %v1945
        %v2009 = vadd.f32 %v2008, %v1949
        %v2010 = vadd.f32 %v2009, %v1953
        %v2011 = vadd.f32 %v2010, %v1957
        %v2012 = vadd.f32 %v2011, %v1961
        %v2013 = vadd.f32 %v2012, %v1965
        %v2014 = vadd.f32 %v2013, %v1969
        %v2015 = vadd.f32 %v2014, %v1973
        %v2016 = vadd.f32 %v2015, %v1977
        %v2017 = vadd.f32 %v2016, %v1981
        %v2018 = vadd.f32 %v2017, %v1985
        %v2019 = vrot.slane %v2018, 4
        %v2020 = vadd.f32 %v2018, %v2019
        %v2021 = vrot.slane %v2020, 2
        %v2022 = vadd.f32 %v2020, %v2021
        %v2023 = vrot.slane %v2022, 1
        %v2024 = vadd.f32 %v2022, %v2023
        %v2025 = vadd.f32 %v1863, %v1867
        %v2026 = vadd.f32 %v2025, %v1871
        %v2027 = vadd.f32 %v2026, %v1875
        %v2028 = vadd.f32 %v2027, %v1879
        %v2029 = vadd.f32 %v2028, %v1883
        %v2030 = vadd.f32 %v2029, %v1887
        %v2031 = vadd.f32 %v2030, %v1891
        %v2032 = vadd.f32 %v2031, %v1895
        %v2033 = vadd.f32 %v2032, %v1899
        %v2034 = vadd.f32 %v2033, %v1903
        %v2035 = vadd.f32 %v2034, %v1907
        %v2036 = vadd.f32 %v2035, %v1911
        %v2037 = vadd.f32 %v2036, %v1915
        %v2038 = vadd.f32 %v2037, %v1919
        %v2039 = vadd.f32 %v2038, %v1923
        %v2040 = vadd.f32 %v2039, %v1927
        %v2041 = vadd.f32 %v2040, %v1931
        %v2042 = vadd.f32 %v2041, %v1935
        %v2043 = vadd.f32 %v2042, %v1939
        %v2044 = vadd.f32 %v2043, %v1943
        %v2045 = vadd.f32 %v2044, %v1947
        %v2046 = vadd.f32 %v2045, %v1951
        %v2047 = vadd.f32 %v2046, %v1955
        %v2048 = vadd.f32 %v2047, %v1959
        %v2049 = vadd.f32 %v2048, %v1963
        %v2050 = vadd.f32 %v2049, %v1967
        %v2051 = vadd.f32 %v2050, %v1971
        %v2052 = vadd.f32 %v2051, %v1975
        %v2053 = vadd.f32 %v2052, %v1979
        %v2054 = vadd.f32 %v2053, %v1983
        %v2055 = vadd.f32 %v2054, %v1987
        %v2056 = vrot.slane %v2055, 4
        %v2057 = vadd.f32 %v2055, %v2056
        %v2058 = vrot.slane %v2057, 2
        %v2059 = vadd.f32 %v2057, %v2058
        %v2060 = vrot.slane %v2059, 1
        %v2061 = vadd.f32 %v2059, %v2060
        %v2062 = vpack.c.bf16 %v1865, %v1861
        %v2063 = vpack.c.bf16 %v1867, %v1863
        %v2064 = vpack.c.bf16 %v1873, %v1869
        %v2065 = vpack.c.bf16 %v1875, %v1871
        %v2066 = vpack.c.bf16 %v1881, %v1877
        %v2067 = vpack.c.bf16 %v1883, %v1879
        %v2068 = vpack.c.bf16 %v1889, %v1885
        %v2069 = vpack.c.bf16 %v1891, %v1887
        %v2070 = vpack.c.bf16 %v1897, %v1893
        %v2071 = vpack.c.bf16 %v1899, %v1895
        %v2072 = vpack.c.bf16 %v1905, %v1901
        %v2073 = vpack.c.bf16 %v1907, %v1903
        %v2074 = vpack.c.bf16 %v1913, %v1909
        %v2075 = vpack.c.bf16 %v1915, %v1911
        %v2076 = vpack.c.bf16 %v1921, %v1917
        %v2077 = vpack.c.bf16 %v1923, %v1919
        %v2078 = vpack.c.bf16 %v1929, %v1925
        %v2079 = vpack.c.bf16 %v1931, %v1927
        %v2080 = vpack.c.bf16 %v1937, %v1933
        %v2081 = vpack.c.bf16 %v1939, %v1935
        %v2082 = vpack.c.bf16 %v1945, %v1941
        %v2083 = vpack.c.bf16 %v1947, %v1943
        %v2084 = vpack.c.bf16 %v1953, %v1949
        %v2085 = vpack.c.bf16 %v1955, %v1951
        %v2086 = vpack.c.bf16 %v1961, %v1957
        %v2087 = vpack.c.bf16 %v1963, %v1959
        %v2088 = vpack.c.bf16 %v1969, %v1965
        %v2089 = vpack.c.bf16 %v1971, %v1967
        %v2090 = vpack.c.bf16 %v1977, %v1973
        %v2091 = vpack.c.bf16 %v1979, %v1975
        %v2092 = vpack.c.bf16 %v1985, %v1981
        %v2093 = vpack.c.bf16 %v1987, %v1983
        %2094 = vmatpush.bf16.msra.mxu0 %v2076
        %2095 = vmatpush.bf16.msra.mxu0 %v2074
        %2096 = vmatpush.bf16.msra.mxu0 %v2072
        %2097 = vmatpush.bf16.msra.mxu0 %v2070
        %2098 = vmatpush.bf16.msra.mxu0 %v2068
        %2099 = vmatpush.bf16.msra.mxu0 %v2066
        %2100 = vmatpush.bf16.msra.mxu0 %v2064
        %2101 = vmatpush.bf16.msra.mxu0 %v2062
        %2102 = vmatmul.bf16.gmra.mxu0 %v1400
        %v2103 = vpop.f32.mrf.mxu0
        %v2104 = vadd.f32 0.0, %v2103
        %v2105 = vpop.f32.mrf.mxu0
        %2106 = vdwg.mxu0
        %2107 = vmatpush.bf16.msra.mxu0 %v2092
        %2108 = vmatpush.bf16.msra.mxu0 %v2090
        %2109 = vmatpush.bf16.msra.mxu0 %v2088
        %2110 = vmatpush.bf16.msra.mxu0 %v2086
        %2111 = vmatpush.bf16.msra.mxu0 %v2084
        %2112 = vmatpush.bf16.msra.mxu0 %v2082
        %2113 = vmatpush.bf16.msra.mxu0 %v2080
        %2114 = vmatpush.bf16.msra.mxu0 %v2078
        %2115 = vmatmul.bf16.gmra.mxu0 %v1401
        %v2116 = vpop.f32.mrf.mxu0
        %v2117 = vadd.f32 %v2104, %v2116
        %v2118 = vpop.f32.mrf.mxu0
        %2119 = vdwg.mxu0
        %2120 = vmatpush.bf16.msra.mxu0 %v2077
        %2121 = vmatpush.bf16.msra.mxu0 %v2075
        %2122 = vmatpush.bf16.msra.mxu0 %v2073
        %2123 = vmatpush.bf16.msra.mxu0 %v2071
        %2124 = vmatpush.bf16.msra.mxu0 %v2069
        %2125 = vmatpush.bf16.msra.mxu0 %v2067
        %2126 = vmatpush.bf16.msra.mxu0 %v2065
        %2127 = vmatpush.bf16.msra.mxu0 %v2063
        %2128 = vmatmul.bf16.gmra.mxu0 %v1400
        %v2129 = vpop.f32.mrf.mxu0
        %v2130 = vadd.f32 0.0, %v2129
        %v2131 = vpop.f32.mrf.mxu0
        %2132 = vdwg.mxu0
        %2133 = vmatpush.bf16.msra.mxu0 %v2093
        %2134 = vmatpush.bf16.msra.mxu0 %v2091
        %2135 = vmatpush.bf16.msra.mxu0 %v2089
        %2136 = vmatpush.bf16.msra.mxu0 %v2087
        %2137 = vmatpush.bf16.msra.mxu0 %v2085
        %2138 = vmatpush.bf16.msra.mxu0 %v2083
        %2139 = vmatpush.bf16.msra.mxu0 %v2081
        %2140 = vmatpush.bf16.msra.mxu0 %v2079
        %2141 = vmatmul.bf16.gmra.mxu0 %v1401
        %v2142 = vpop.f32.mrf.mxu0
        %v2143 = vadd.f32 %v2130, %v2142
        %v2144 = vpop.f32.mrf.mxu0
        %2145 = vdwg.mxu0
        %v2146 = vrcp.pop %v2024
        %v2147 = vrcp.pop %v2061
        %v2148 = vmul.f32 %v2117, %v2146
        %v2149 = vmul.f32 %v2143, %v2147
        %2150 = vst [vmem:[#allocation2 + $0x10] sm:$0xff] %v2148
        %2151 = vst [vmem:[#allocation2 + $0x18] sm:$0xff] %v2149
        %v2152 = vpack.c.bf16 %v575, %v575
        %v2153 = vpack.c.bf16 %v614, %v614
        %v2154 = vpack.c.bf16 %v585, %v585
        %v2155 = vpack.c.bf16 %v624, %v624
        %v2156 = vpack.c.bf16 %v595, %v595
        %v2157 = vpack.c.bf16 %v634, %v634
        %2158 = vxpose.binary.xlu0.c.b16.start [1/16] %v2155, %v2154, 128
        %2159 = vxpose.binary.xlu0.c.b16.cont [2/16] 0, 0, 128
        %2160 = vxpose.binary.xlu0.c.b16.cont [3/16] 0, 0, 128
        %2161 = vxpose.binary.xlu0.c.b16.cont [4/16] 0, 0, 128
        %2162 = vxpose.binary.xlu0.c.b16.cont [5/16] 0, 0, 128
        %2163 = vxpose.binary.xlu0.c.b16.cont [6/16] 0, 0, 128
        %2164 = vxpose.binary.xlu0.c.b16.cont [7/16] 0, 0, 128
        %2165 = vxpose.binary.xlu0.c.b16.end [8/16] 0, 0, 128
        %v2166 = vpop.trf.xlu0
        %v2167 = vpop.trf.xlu0
        %v2168 = vpop.trf.xlu0
        %v2169 = vpop.trf.xlu0
        %v2170 = vpop.trf.xlu0
        %v2171 = vpop.trf.xlu0
        %v2172 = vpop.trf.xlu0
        %v2173 = vpop.trf.xlu0
        %v2174 = vpop.trf.xlu0
        %v2175 = vpop.trf.xlu0
        %v2176 = vpop.trf.xlu0
        %v2177 = vpop.trf.xlu0
        %v2178 = vpop.trf.xlu0
        %v2179 = vpop.trf.xlu0
        %v2180 = vpop.trf.xlu0
        %v2181 = vpop.trf.xlu0
        %v2183 = vsel %vm668, %v2166, 0
        %v2186 = vsel %vm668, %v2168, 0
        %v2189 = vsel %vm668, %v2170, 0
        %v2192 = vsel %vm668, %v2172, 0
        %v2195 = vsel %vm668, %v2174, 0
        %v2198 = vsel %vm668, %v2176, 0
        %v2201 = vsel %vm668, %v2178, 0
        %v2204 = vsel %vm668, %v2180, 0
        %v2207 = vsel %vm668, %v2167, 0
        %v2210 = vsel %vm668, %v2169, 0
        %v2213 = vsel %vm668, %v2171, 0
        %v2216 = vsel %vm668, %v2173, 0
        %v2219 = vsel %vm668, %v2175, 0
        %v2222 = vsel %vm668, %v2177, 0
        %v2225 = vsel %vm668, %v2179, 0
        %v2228 = vsel %vm668, %v2181, 0
        %v2231 = vsel %vm717, %v2152, 0
        %v2234 = vsel %vm717, %v2153, 0
        %2236 = vmatpush.bf16.msra.mxu0 0
        %2237 = vmatpush.bf16.msra.mxu0 0
        %2238 = vmatpush.bf16.msra.mxu0 0
        %2239 = vmatpush.bf16.msra.mxu0 0
        %2240 = vmatpush.bf16.msra.mxu0 0
        %2241 = vmatpush.bf16.msra.mxu0 0
        %2242 = vmatpush.bf16.msra.mxu0 0
        %2243 = vmatpush.bf16.msra.mxu0 %v2231
        %2244 = vmatmul.bf16.gmra.mxu0 %v2183
        %v2245 = vpop.f32.mrf.mxu0
        %v2246 = vadd.f32 0.0, %v2245
        %v2247 = vpop.f32.mrf.mxu0
        %v2248 = vadd.f32 0.0, %v2247
        %2249 = vmatmul.bf16.gmra.mxu0 %v2186
        %v2250 = vpop.f32.mrf.mxu0
        %v2251 = vadd.f32 0.0, %v2250
        %v2252 = vpop.f32.mrf.mxu0
        %v2253 = vadd.f32 0.0, %v2252
        %2254 = vmatmul.bf16.gmra.mxu0 %v2189
        %v2255 = vpop.f32.mrf.mxu0
        %v2256 = vadd.f32 0.0, %v2255
        %v2257 = vpop.f32.mrf.mxu0
        %v2258 = vadd.f32 0.0, %v2257
        %2259 = vmatmul.bf16.gmra.mxu0 %v2192
        %v2260 = vpop.f32.mrf.mxu0
        %v2261 = vadd.f32 0.0, %v2260
        %v2262 = vpop.f32.mrf.mxu0
        %v2263 = vadd.f32 0.0, %v2262
        %2264 = vmatmul.bf16.gmra.mxu0 %v2195
        %v2265 = vpop.f32.mrf.mxu0
        %v2266 = vadd.f32 0.0, %v2265
        %v2267 = vpop.f32.mrf.mxu0
        %v2268 = vadd.f32 0.0, %v2267
        %2269 = vmatmul.bf16.gmra.mxu0 %v2198
        %v2270 = vpop.f32.mrf.mxu0
        %v2271 = vadd.f32 0.0, %v2270
        %v2272 = vpop.f32.mrf.mxu0
        %v2273 = vadd.f32 0.0, %v2272
        %2274 = vmatmul.bf16.gmra.mxu0 %v2201
        %v2275 = vpop.f32.mrf.mxu0
        %v2276 = vadd.f32 0.0, %v2275
        %v2277 = vpop.f32.mrf.mxu0
        %v2278 = vadd.f32 0.0, %v2277
        %2279 = vmatmul.bf16.gmra.mxu0 %v2204
        %v2280 = vpop.f32.mrf.mxu0
        %v2281 = vadd.f32 0.0, %v2280
        %v2282 = vpop.f32.mrf.mxu0
        %v2283 = vadd.f32 0.0, %v2282
        %2284 = vmatmul.bf16.gmra.mxu0 %v2207
        %v2285 = vpop.f32.mrf.mxu0
        %v2286 = vadd.f32 0.0, %v2285
        %v2287 = vpop.f32.mrf.mxu0
        %v2288 = vadd.f32 0.0, %v2287
        %2289 = vmatmul.bf16.gmra.mxu0 %v2210
        %v2290 = vpop.f32.mrf.mxu0
        %v2291 = vadd.f32 0.0, %v2290
        %v2292 = vpop.f32.mrf.mxu0
        %v2293 = vadd.f32 0.0, %v2292
        %2294 = vmatmul.bf16.gmra.mxu0 %v2213
        %v2295 = vpop.f32.mrf.mxu0
        %v2296 = vadd.f32 0.0, %v2295
        %v2297 = vpop.f32.mrf.mxu0
        %v2298 = vadd.f32 0.0, %v2297
        %2299 = vmatmul.bf16.gmra.mxu0 %v2216
        %v2300 = vpop.f32.mrf.mxu0
        %v2301 = vadd.f32 0.0, %v2300
        %v2302 = vpop.f32.mrf.mxu0
        %v2303 = vadd.f32 0.0, %v2302
        %2304 = vmatmul.bf16.gmra.mxu0 %v2219
        %v2305 = vpop.f32.mrf.mxu0
        %v2306 = vadd.f32 0.0, %v2305
        %v2307 = vpop.f32.mrf.mxu0
        %v2308 = vadd.f32 0.0, %v2307
        %2309 = vmatmul.bf16.gmra.mxu0 %v2222
        %v2310 = vpop.f32.mrf.mxu0
        %v2311 = vadd.f32 0.0, %v2310
        %v2312 = vpop.f32.mrf.mxu0
        %v2313 = vadd.f32 0.0, %v2312
        %2314 = vmatmul.bf16.gmra.mxu0 %v2225
        %v2315 = vpop.f32.mrf.mxu0
        %v2316 = vadd.f32 0.0, %v2315
        %v2317 = vpop.f32.mrf.mxu0
        %v2318 = vadd.f32 0.0, %v2317
        %2319 = vmatmul.bf16.gmra.mxu0 %v2228
        %v2320 = vpop.f32.mrf.mxu0
        %v2321 = vadd.f32 0.0, %v2320
        %v2322 = vpop.f32.mrf.mxu0
        %v2323 = vadd.f32 0.0, %v2322
        %2324 = vdwg.mxu0
        %2325 = vmatpush.bf16.msra.mxu0 0
        %2326 = vmatpush.bf16.msra.mxu0 0
        %2327 = vmatpush.bf16.msra.mxu0 0
        %2328 = vmatpush.bf16.msra.mxu0 0
        %2329 = vmatpush.bf16.msra.mxu0 0
        %2330 = vmatpush.bf16.msra.mxu0 0
        %2331 = vmatpush.bf16.msra.mxu0 0
        %2332 = vmatpush.bf16.msra.mxu0 %v2234
        %2333 = vmatmul.bf16.gmra.mxu0 %v2183
        %v2334 = vpop.f32.mrf.mxu0
        %v2335 = vadd.f32 0.0, %v2334
        %v2336 = vpop.f32.mrf.mxu0
        %v2337 = vadd.f32 0.0, %v2336
        %2338 = vmatmul.bf16.gmra.mxu0 %v2186
        %v2339 = vpop.f32.mrf.mxu0
        %v2340 = vadd.f32 0.0, %v2339
        %v2341 = vpop.f32.mrf.mxu0
        %v2342 = vadd.f32 0.0, %v2341
        %2343 = vmatmul.bf16.gmra.mxu0 %v2189
        %v2344 = vpop.f32.mrf.mxu0
        %v2345 = vadd.f32 0.0, %v2344
        %v2346 = vpop.f32.mrf.mxu0
        %v2347 = vadd.f32 0.0, %v2346
        %2348 = vmatmul.bf16.gmra.mxu0 %v2192
        %v2349 = vpop.f32.mrf.mxu0
        %v2350 = vadd.f32 0.0, %v2349
        %v2351 = vpop.f32.mrf.mxu0
        %v2352 = vadd.f32 0.0, %v2351
        %2353 = vmatmul.bf16.gmra.mxu0 %v2195
        %v2354 = vpop.f32.mrf.mxu0
        %v2355 = vadd.f32 0.0, %v2354
        %v2356 = vpop.f32.mrf.mxu0
        %v2357 = vadd.f32 0.0, %v2356
        %2358 = vmatmul.bf16.gmra.mxu0 %v2198
        %v2359 = vpop.f32.mrf.mxu0
        %v2360 = vadd.f32 0.0, %v2359
        %v2361 = vpop.f32.mrf.mxu0
        %v2362 = vadd.f32 0.0, %v2361
        %2363 = vmatmul.bf16.gmra.mxu0 %v2201
        %v2364 = vpop.f32.mrf.mxu0
        %v2365 = vadd.f32 0.0, %v2364
        %v2366 = vpop.f32.mrf.mxu0
        %v2367 = vadd.f32 0.0, %v2366
        %2368 = vmatmul.bf16.gmra.mxu0 %v2204
        %v2369 = vpop.f32.mrf.mxu0
        %v2370 = vadd.f32 0.0, %v2369
        %v2371 = vpop.f32.mrf.mxu0
        %v2372 = vadd.f32 0.0, %v2371
        %2373 = vmatmul.bf16.gmra.mxu0 %v2207
        %v2374 = vpop.f32.mrf.mxu0
        %v2375 = vadd.f32 0.0, %v2374
        %v2376 = vpop.f32.mrf.mxu0
        %v2377 = vadd.f32 0.0, %v2376
        %2378 = vmatmul.bf16.gmra.mxu0 %v2210
        %v2379 = vpop.f32.mrf.mxu0
        %v2380 = vadd.f32 0.0, %v2379
        %v2381 = vpop.f32.mrf.mxu0
        %v2382 = vadd.f32 0.0, %v2381
        %2383 = vmatmul.bf16.gmra.mxu0 %v2213
        %v2384 = vpop.f32.mrf.mxu0
        %v2385 = vadd.f32 0.0, %v2384
        %v2386 = vpop.f32.mrf.mxu0
        %v2387 = vadd.f32 0.0, %v2386
        %2388 = vmatmul.bf16.gmra.mxu0 %v2216
        %v2389 = vpop.f32.mrf.mxu0
        %v2390 = vadd.f32 0.0, %v2389
        %v2391 = vpop.f32.mrf.mxu0
        %v2392 = vadd.f32 0.0, %v2391
        %2393 = vmatmul.bf16.gmra.mxu0 %v2219
        %v2394 = vpop.f32.mrf.mxu0
        %v2395 = vadd.f32 0.0, %v2394
        %v2396 = vpop.f32.mrf.mxu0
        %v2397 = vadd.f32 0.0, %v2396
        %2398 = vmatmul.bf16.gmra.mxu0 %v2222
        %v2399 = vpop.f32.mrf.mxu0
        %v2400 = vadd.f32 0.0, %v2399
        %v2401 = vpop.f32.mrf.mxu0
        %v2402 = vadd.f32 0.0, %v2401
        %2403 = vmatmul.bf16.gmra.mxu0 %v2225
        %v2404 = vpop.f32.mrf.mxu0
        %v2405 = vadd.f32 0.0, %v2404
        %v2406 = vpop.f32.mrf.mxu0
        %v2407 = vadd.f32 0.0, %v2406
        %2408 = vmatmul.bf16.gmra.mxu0 %v2228
        %v2409 = vpop.f32.mrf.mxu0
        %v2410 = vadd.f32 0.0, %v2409
        %v2411 = vpop.f32.mrf.mxu0
        %v2412 = vadd.f32 0.0, %v2411
        %2413 = vdwg.mxu0
        %v2414 = vmul.f32 %v2246, 0.35355338
        %v2415 = vmul.f32 %v2335, 0.35355338
        %v2416 = vmul.f32 %v2248, 0.35355338
        %v2417 = vmul.f32 %v2337, 0.35355338
        %v2418 = vmul.f32 %v2251, 0.35355338
        %v2419 = vmul.f32 %v2340, 0.35355338
        %v2420 = vmul.f32 %v2253, 0.35355338
        %v2421 = vmul.f32 %v2342, 0.35355338
        %v2422 = vmul.f32 %v2256, 0.35355338
        %v2423 = vmul.f32 %v2345, 0.35355338
        %v2424 = vmul.f32 %v2258, 0.35355338
        %v2425 = vmul.f32 %v2347, 0.35355338
        %v2426 = vmul.f32 %v2261, 0.35355338
        %v2427 = vmul.f32 %v2350, 0.35355338
        %v2428 = vmul.f32 %v2263, 0.35355338
        %v2429 = vmul.f32 %v2352, 0.35355338
        %v2430 = vmul.f32 %v2266, 0.35355338
        %v2431 = vmul.f32 %v2355, 0.35355338
        %v2432 = vmul.f32 %v2268, 0.35355338
        %v2433 = vmul.f32 %v2357, 0.35355338
        %v2434 = vmul.f32 %v2271, 0.35355338
        %v2435 = vmul.f32 %v2360, 0.35355338
        %v2436 = vmul.f32 %v2273, 0.35355338
        %v2437 = vmul.f32 %v2362, 0.35355338
        %v2438 = vmul.f32 %v2276, 0.35355338
        %v2439 = vmul.f32 %v2365, 0.35355338
        %v2440 = vmul.f32 %v2278, 0.35355338
        %v2441 = vmul.f32 %v2367, 0.35355338
        %v2442 = vmul.f32 %v2281, 0.35355338
        %v2443 = vmul.f32 %v2370, 0.35355338
        %v2444 = vmul.f32 %v2283, 0.35355338
        %v2445 = vmul.f32 %v2372, 0.35355338
        %v2446 = vmul.f32 %v2286, 0.35355338
        %v2447 = vmul.f32 %v2375, 0.35355338
        %v2448 = vmul.f32 %v2288, 0.35355338
        %v2449 = vmul.f32 %v2377, 0.35355338
        %v2450 = vmul.f32 %v2291, 0.35355338
        %v2451 = vmul.f32 %v2380, 0.35355338
        %v2452 = vmul.f32 %v2293, 0.35355338
        %v2453 = vmul.f32 %v2382, 0.35355338
        %v2454 = vmul.f32 %v2296, 0.35355338
        %v2455 = vmul.f32 %v2385, 0.35355338
        %v2456 = vmul.f32 %v2298, 0.35355338
        %v2457 = vmul.f32 %v2387, 0.35355338
        %v2458 = vmul.f32 %v2301, 0.35355338
        %v2459 = vmul.f32 %v2390, 0.35355338
        %v2460 = vmul.f32 %v2303, 0.35355338
        %v2461 = vmul.f32 %v2392, 0.35355338
        %v2462 = vmul.f32 %v2306, 0.35355338
        %v2463 = vmul.f32 %v2395, 0.35355338
        %v2464 = vmul.f32 %v2308, 0.35355338
        %v2465 = vmul.f32 %v2397, 0.35355338
        %v2466 = vmul.f32 %v2311, 0.35355338
        %v2467 = vmul.f32 %v2400, 0.35355338
        %v2468 = vmul.f32 %v2313, 0.35355338
        %v2469 = vmul.f32 %v2402, 0.35355338
        %v2470 = vmul.f32 %v2316, 0.35355338
        %v2471 = vmul.f32 %v2405, 0.35355338
        %v2472 = vmul.f32 %v2318, 0.35355338
        %v2473 = vmul.f32 %v2407, 0.35355338
        %v2474 = vmul.f32 %v2321, 0.35355338
        %v2475 = vmul.f32 %v2410, 0.35355338
        %v2476 = vmul.f32 %v2323, 0.35355338
        %v2477 = vmul.f32 %v2412, 0.35355338
        %v2478 = vmax.f32 %v2414, %v2418
        %v2479 = vmax.f32 %v2416, %v2420
        %v2480 = vmax.f32 %v2478, %v2422
        %v2481 = vmax.f32 %v2479, %v2424
        %v2482 = vmax.f32 %v2480, %v2426
        %v2483 = vmax.f32 %v2481, %v2428
        %v2484 = vmax.f32 %v2482, %v2430
        %v2485 = vmax.f32 %v2483, %v2432
        %v2486 = vmax.f32 %v2484, %v2434
        %v2487 = vmax.f32 %v2485, %v2436
        %v2488 = vmax.f32 %v2486, %v2438
        %v2489 = vmax.f32 %v2487, %v2440
        %v2490 = vmax.f32 %v2488, %v2442
        %v2491 = vmax.f32 %v2489, %v2444
        %v2492 = vmax.f32 %v2490, %v2446
        %v2493 = vmax.f32 %v2491, %v2448
        %v2494 = vmax.f32 %v2492, %v2450
        %v2495 = vmax.f32 %v2493, %v2452
        %v2496 = vmax.f32 %v2494, %v2454
        %v2497 = vmax.f32 %v2495, %v2456
        %v2498 = vmax.f32 %v2496, %v2458
        %v2499 = vmax.f32 %v2497, %v2460
        %v2500 = vmax.f32 %v2498, %v2462
        %v2501 = vmax.f32 %v2499, %v2464
        %v2502 = vmax.f32 %v2500, %v2466
        %v2503 = vmax.f32 %v2501, %v2468
        %v2504 = vmax.f32 %v2502, %v2470
        %v2505 = vmax.f32 %v2503, %v2472
        %v2506 = vmax.f32 %v2504, %v2474
        %v2507 = vmax.f32 %v2505, %v2476
        %v2508 = vmax.f32 %v2506, %v2507
        %v2509 = vrot.slane %v2508, 4
        %v2510 = vmax.f32 %v2508, %v2509
        %v2511 = vrot.slane %v2510, 2
        %v2512 = vmax.f32 %v2510, %v2511
        %v2513 = vrot.slane %v2512, 1
        %v2514 = vmax.f32 %v2512, %v2513
        %v2515 = vmax.f32 %v2415, %v2419
        %v2516 = vmax.f32 %v2417, %v2421
        %v2517 = vmax.f32 %v2515, %v2423
        %v2518 = vmax.f32 %v2516, %v2425
        %v2519 = vmax.f32 %v2517, %v2427
        %v2520 = vmax.f32 %v2518, %v2429
        %v2521 = vmax.f32 %v2519, %v2431
        %v2522 = vmax.f32 %v2520, %v2433
        %v2523 = vmax.f32 %v2521, %v2435
        %v2524 = vmax.f32 %v2522, %v2437
        %v2525 = vmax.f32 %v2523, %v2439
        %v2526 = vmax.f32 %v2524, %v2441
        %v2527 = vmax.f32 %v2525, %v2443
        %v2528 = vmax.f32 %v2526, %v2445
        %v2529 = vmax.f32 %v2527, %v2447
        %v2530 = vmax.f32 %v2528, %v2449
        %v2531 = vmax.f32 %v2529, %v2451
        %v2532 = vmax.f32 %v2530, %v2453
        %v2533 = vmax.f32 %v2531, %v2455
        %v2534 = vmax.f32 %v2532, %v2457
        %v2535 = vmax.f32 %v2533, %v2459
        %v2536 = vmax.f32 %v2534, %v2461
        %v2537 = vmax.f32 %v2535, %v2463
        %v2538 = vmax.f32 %v2536, %v2465
        %v2539 = vmax.f32 %v2537, %v2467
        %v2540 = vmax.f32 %v2538, %v2469
        %v2541 = vmax.f32 %v2539, %v2471
        %v2542 = vmax.f32 %v2540, %v2473
        %v2543 = vmax.f32 %v2541, %v2475
        %v2544 = vmax.f32 %v2542, %v2477
        %v2545 = vmax.f32 %v2543, %v2544
        %v2546 = vrot.slane %v2545, 4
        %v2547 = vmax.f32 %v2545, %v2546
        %v2548 = vrot.slane %v2547, 2
        %v2549 = vmax.f32 %v2547, %v2548
        %v2550 = vrot.slane %v2549, 1
        %v2551 = vmax.f32 %v2549, %v2550
        %v2552 = vsub.f32 %v2414, %v2514
        %v2553 = vsub.f32 %v2415, %v2551
        %v2554 = vsub.f32 %v2416, %v2514
        %v2555 = vsub.f32 %v2417, %v2551
        %v2556 = vsub.f32 %v2418, %v2514
        %v2557 = vsub.f32 %v2419, %v2551
        %v2558 = vsub.f32 %v2420, %v2514
        %v2559 = vsub.f32 %v2421, %v2551
        %v2560 = vsub.f32 %v2422, %v2514
        %v2561 = vsub.f32 %v2423, %v2551
        %v2562 = vsub.f32 %v2424, %v2514
        %v2563 = vsub.f32 %v2425, %v2551
        %v2564 = vsub.f32 %v2426, %v2514
        %v2565 = vsub.f32 %v2427, %v2551
        %v2566 = vsub.f32 %v2428, %v2514
        %v2567 = vsub.f32 %v2429, %v2551
        %v2568 = vsub.f32 %v2430, %v2514
        %v2569 = vsub.f32 %v2431, %v2551
        %v2570 = vsub.f32 %v2432, %v2514
        %v2571 = vsub.f32 %v2433, %v2551
        %v2572 = vsub.f32 %v2434, %v2514
        %v2573 = vsub.f32 %v2435, %v2551
        %v2574 = vsub.f32 %v2436, %v2514
        %v2575 = vsub.f32 %v2437, %v2551
        %v2576 = vsub.f32 %v2438, %v2514
        %v2577 = vsub.f32 %v2439, %v2551
        %v2578 = vsub.f32 %v2440, %v2514
        %v2579 = vsub.f32 %v2441, %v2551
        %v2580 = vsub.f32 %v2442, %v2514
        %v2581 = vsub.f32 %v2443, %v2551
        %v2582 = vsub.f32 %v2444, %v2514
        %v2583 = vsub.f32 %v2445, %v2551
        %v2584 = vsub.f32 %v2446, %v2514
        %v2585 = vsub.f32 %v2447, %v2551
        %v2586 = vsub.f32 %v2448, %v2514
        %v2587 = vsub.f32 %v2449, %v2551
        %v2588 = vsub.f32 %v2450, %v2514
        %v2589 = vsub.f32 %v2451, %v2551
        %v2590 = vsub.f32 %v2452, %v2514
        %v2591 = vsub.f32 %v2453, %v2551
        %v2592 = vsub.f32 %v2454, %v2514
        %v2593 = vsub.f32 %v2455, %v2551
        %v2594 = vsub.f32 %v2456, %v2514
        %v2595 = vsub.f32 %v2457, %v2551
        %v2596 = vsub.f32 %v2458, %v2514
        %v2597 = vsub.f32 %v2459, %v2551
        %v2598 = vsub.f32 %v2460, %v2514
        %v2599 = vsub.f32 %v2461, %v2551
        %v2600 = vsub.f32 %v2462, %v2514
        %v2601 = vsub.f32 %v2463, %v2551
        %v2602 = vsub.f32 %v2464, %v2514
        %v2603 = vsub.f32 %v2465, %v2551
        %v2604 = vsub.f32 %v2466, %v2514
        %v2605 = vsub.f32 %v2467, %v2551
        %v2606 = vsub.f32 %v2468, %v2514
        %v2607 = vsub.f32 %v2469, %v2551
        %v2608 = vsub.f32 %v2470, %v2514
        %v2609 = vsub.f32 %v2471, %v2551
        %v2610 = vsub.f32 %v2472, %v2514
        %v2611 = vsub.f32 %v2473, %v2551
        %v2612 = vsub.f32 %v2474, %v2514
        %v2613 = vsub.f32 %v2475, %v2551
        %v2614 = vsub.f32 %v2476, %v2514
        %v2615 = vsub.f32 %v2477, %v2551
        %v2616 = vmul.f32 %v2552, 1.442695
        %v2617 = vpow.pop %v2616
        %v2618 = vmul.f32 %v2553, 1.442695
        %v2619 = vpow.pop %v2618
        %v2620 = vmul.f32 %v2554, 1.442695
        %v2621 = vpow.pop %v2620
        %v2622 = vmul.f32 %v2555, 1.442695
        %v2623 = vpow.pop %v2622
        %v2624 = vmul.f32 %v2556, 1.442695
        %v2625 = vpow.pop %v2624
        %v2626 = vmul.f32 %v2557, 1.442695
        %v2627 = vpow.pop %v2626
        %v2628 = vmul.f32 %v2558, 1.442695
        %v2629 = vpow.pop %v2628
        %v2630 = vmul.f32 %v2559, 1.442695
        %v2631 = vpow.pop %v2630
        %v2632 = vmul.f32 %v2560, 1.442695
        %v2633 = vpow.pop %v2632
        %v2634 = vmul.f32 %v2561, 1.442695
        %v2635 = vpow.pop %v2634
        %v2636 = vmul.f32 %v2562, 1.442695
        %v2637 = vpow.pop %v2636
        %v2638 = vmul.f32 %v2563, 1.442695
        %v2639 = vpow.pop %v2638
        %v2640 = vmul.f32 %v2564, 1.442695
        %v2641 = vpow.pop %v2640
        %v2642 = vmul.f32 %v2565, 1.442695
        %v2643 = vpow.pop %v2642
        %v2644 = vmul.f32 %v2566, 1.442695
        %v2645 = vpow.pop %v2644
        %v2646 = vmul.f32 %v2567, 1.442695
        %v2647 = vpow.pop %v2646
        %v2648 = vmul.f32 %v2568, 1.442695
        %v2649 = vpow.pop %v2648
        %v2650 = vmul.f32 %v2569, 1.442695
        %v2651 = vpow.pop %v2650
        %v2652 = vmul.f32 %v2570, 1.442695
        %v2653 = vpow.pop %v2652
        %v2654 = vmul.f32 %v2571, 1.442695
        %v2655 = vpow.pop %v2654
        %v2656 = vmul.f32 %v2572, 1.442695
        %v2657 = vpow.pop %v2656
        %v2658 = vmul.f32 %v2573, 1.442695
        %v2659 = vpow.pop %v2658
        %v2660 = vmul.f32 %v2574, 1.442695
        %v2661 = vpow.pop %v2660
        %v2662 = vmul.f32 %v2575, 1.442695
        %v2663 = vpow.pop %v2662
        %v2664 = vmul.f32 %v2576, 1.442695
        %v2665 = vpow.pop %v2664
        %v2666 = vmul.f32 %v2577, 1.442695
        %v2667 = vpow.pop %v2666
        %v2668 = vmul.f32 %v2578, 1.442695
        %v2669 = vpow.pop %v2668
        %v2670 = vmul.f32 %v2579, 1.442695
        %v2671 = vpow.pop %v2670
        %v2672 = vmul.f32 %v2580, 1.442695
        %v2673 = vpow.pop %v2672
        %v2674 = vmul.f32 %v2581, 1.442695
        %v2675 = vpow.pop %v2674
        %v2676 = vmul.f32 %v2582, 1.442695
        %v2677 = vpow.pop %v2676
        %v2678 = vmul.f32 %v2583, 1.442695
        %v2679 = vpow.pop %v2678
        %v2680 = vmul.f32 %v2584, 1.442695
        %v2681 = vpow.pop %v2680
        %v2682 = vmul.f32 %v2585, 1.442695
        %v2683 = vpow.pop %v2682
        %v2684 = vmul.f32 %v2586, 1.442695
        %v2685 = vpow.pop %v2684
        %v2686 = vmul.f32 %v2587, 1.442695
        %v2687 = vpow.pop %v2686
        %v2688 = vmul.f32 %v2588, 1.442695
        %v2689 = vpow.pop %v2688
        %v2690 = vmul.f32 %v2589, 1.442695
        %v2691 = vpow.pop %v2690
        %v2692 = vmul.f32 %v2590, 1.442695
        %v2693 = vpow.pop %v2692
        %v2694 = vmul.f32 %v2591, 1.442695
        %v2695 = vpow.pop %v2694
        %v2696 = vmul.f32 %v2592, 1.442695
        %v2697 = vpow.pop %v2696
        %v2698 = vmul.f32 %v2593, 1.442695
        %v2699 = vpow.pop %v2698
        %v2700 = vmul.f32 %v2594, 1.442695
        %v2701 = vpow.pop %v2700
        %v2702 = vmul.f32 %v2595, 1.442695
        %v2703 = vpow.pop %v2702
        %v2704 = vmul.f32 %v2596, 1.442695
        %v2705 = vpow.pop %v2704
        %v2706 = vmul.f32 %v2597, 1.442695
        %v2707 = vpow.pop %v2706
        %v2708 = vmul.f32 %v2598, 1.442695
        %v2709 = vpow.pop %v2708
        %v2710 = vmul.f32 %v2599, 1.442695
        %v2711 = vpow.pop %v2710
        %v2712 = vmul.f32 %v2600, 1.442695
        %v2713 = vpow.pop %v2712
        %v2714 = vmul.f32 %v2601, 1.442695
        %v2715 = vpow.pop %v2714
        %v2716 = vmul.f32 %v2602, 1.442695
        %v2717 = vpow.pop %v2716
        %v2718 = vmul.f32 %v2603, 1.442695
        %v2719 = vpow.pop %v2718
        %v2720 = vmul.f32 %v2604, 1.442695
        %v2721 = vpow.pop %v2720
        %v2722 = vmul.f32 %v2605, 1.442695
        %v2723 = vpow.pop %v2722
        %v2724 = vmul.f32 %v2606, 1.442695
        %v2725 = vpow.pop %v2724
        %v2726 = vmul.f32 %v2607, 1.442695
        %v2727 = vpow.pop %v2726
        %v2728 = vmul.f32 %v2608, 1.442695
        %v2729 = vpow.pop %v2728
        %v2730 = vmul.f32 %v2609, 1.442695
        %v2731 = vpow.pop %v2730
        %v2732 = vmul.f32 %v2610, 1.442695
        %v2733 = vpow.pop %v2732
        %v2734 = vmul.f32 %v2611, 1.442695
        %v2735 = vpow.pop %v2734
        %v2736 = vmul.f32 %v2612, 1.442695
        %v2737 = vpow.pop %v2736
        %v2738 = vmul.f32 %v2613, 1.442695
        %v2739 = vpow.pop %v2738
        %v2740 = vmul.f32 %v2614, 1.442695
        %v2741 = vpow.pop %v2740
        %v2742 = vmul.f32 %v2615, 1.442695
        %v2743 = vpow.pop %v2742
        %v2744 = vadd.f32 %v2617, %v2621
        %v2745 = vadd.f32 %v2744, %v2625
        %v2746 = vadd.f32 %v2745, %v2629
        %v2747 = vadd.f32 %v2746, %v2633
        %v2748 = vadd.f32 %v2747, %v2637
        %v2749 = vadd.f32 %v2748, %v2641
        %v2750 = vadd.f32 %v2749, %v2645
        %v2751 = vadd.f32 %v2750, %v2649
        %v2752 = vadd.f32 %v2751, %v2653
        %v2753 = vadd.f32 %v2752, %v2657
        %v2754 = vadd.f32 %v2753, %v2661
        %v2755 = vadd.f32 %v2754, %v2665
        %v2756 = vadd.f32 %v2755, %v2669
        %v2757 = vadd.f32 %v2756, %v2673
        %v2758 = vadd.f32 %v2757, %v2677
        %v2759 = vadd.f32 %v2758, %v2681
        %v2760 = vadd.f32 %v2759, %v2685
        %v2761 = vadd.f32 %v2760, %v2689
        %v2762 = vadd.f32 %v2761, %v2693
        %v2763 = vadd.f32 %v2762, %v2697
        %v2764 = vadd.f32 %v2763, %v2701
        %v2765 = vadd.f32 %v2764, %v2705
        %v2766 = vadd.f32 %v2765, %v2709
        %v2767 = vadd.f32 %v2766, %v2713
        %v2768 = vadd.f32 %v2767, %v2717
        %v2769 = vadd.f32 %v2768, %v2721
        %v2770 = vadd.f32 %v2769, %v2725
        %v2771 = vadd.f32 %v2770, %v2729
        %v2772 = vadd.f32 %v2771, %v2733
        %v2773 = vadd.f32 %v2772, %v2737
        %v2774 = vadd.f32 %v2773, %v2741
        %v2775 = vrot.slane %v2774, 4
        %v2776 = vadd.f32 %v2774, %v2775
        %v2777 = vrot.slane %v2776, 2
        %v2778 = vadd.f32 %v2776, %v2777
        %v2779 = vrot.slane %v2778, 1
        %v2780 = vadd.f32 %v2778, %v2779
        %v2781 = vadd.f32 %v2619, %v2623
        %v2782 = vadd.f32 %v2781, %v2627
        %v2783 = vadd.f32 %v2782, %v2631
        %v2784 = vadd.f32 %v2783, %v2635
        %v2785 = vadd.f32 %v2784, %v2639
        %v2786 = vadd.f32 %v2785, %v2643
        %v2787 = vadd.f32 %v2786, %v2647
        %v2788 = vadd.f32 %v2787, %v2651
        %v2789 = vadd.f32 %v2788, %v2655
        %v2790 = vadd.f32 %v2789, %v2659
        %v2791 = vadd.f32 %v2790, %v2663
        %v2792 = vadd.f32 %v2791, %v2667
        %v2793 = vadd.f32 %v2792, %v2671
        %v2794 = vadd.f32 %v2793, %v2675
        %v2795 = vadd.f32 %v2794, %v2679
        %v2796 = vadd.f32 %v2795, %v2683
        %v2797 = vadd.f32 %v2796, %v2687
        %v2798 = vadd.f32 %v2797, %v2691
        %v2799 = vadd.f32 %v2798, %v2695
        %v2800 = vadd.f32 %v2799, %v2699
        %v2801 = vadd.f32 %v2800, %v2703
        %v2802 = vadd.f32 %v2801, %v2707
        %v2803 = vadd.f32 %v2802, %v2711
        %v2804 = vadd.f32 %v2803, %v2715
        %v2805 = vadd.f32 %v2804, %v2719
        %v2806 = vadd.f32 %v2805, %v2723
        %v2807 = vadd.f32 %v2806, %v2727
        %v2808 = vadd.f32 %v2807, %v2731
        %v2809 = vadd.f32 %v2808, %v2735
        %v2810 = vadd.f32 %v2809, %v2739
        %v2811 = vadd.f32 %v2810, %v2743
        %v2812 = vrot.slane %v2811, 4
        %v2813 = vadd.f32 %v2811, %v2812
        %v2814 = vrot.slane %v2813, 2
        %v2815 = vadd.f32 %v2813, %v2814
        %v2816 = vrot.slane %v2815, 1
        %v2817 = vadd.f32 %v2815, %v2816
        %v2818 = vpack.c.bf16 %v2621, %v2617
        %v2819 = vpack.c.bf16 %v2623, %v2619
        %v2820 = vpack.c.bf16 %v2629, %v2625
        %v2821 = vpack.c.bf16 %v2631, %v2627
        %v2822 = vpack.c.bf16 %v2637, %v2633
        %v2823 = vpack.c.bf16 %v2639, %v2635
        %v2824 = vpack.c.bf16 %v2645, %v2641
        %v2825 = vpack.c.bf16 %v2647, %v2643
        %v2826 = vpack.c.bf16 %v2653, %v2649
        %v2827 = vpack.c.bf16 %v2655, %v2651
        %v2828 = vpack.c.bf16 %v2661, %v2657
        %v2829 = vpack.c.bf16 %v2663, %v2659
        %v2830 = vpack.c.bf16 %v2669, %v2665
        %v2831 = vpack.c.bf16 %v2671, %v2667
        %v2832 = vpack.c.bf16 %v2677, %v2673
        %v2833 = vpack.c.bf16 %v2679, %v2675
        %v2834 = vpack.c.bf16 %v2685, %v2681
        %v2835 = vpack.c.bf16 %v2687, %v2683
        %v2836 = vpack.c.bf16 %v2693, %v2689
        %v2837 = vpack.c.bf16 %v2695, %v2691
        %v2838 = vpack.c.bf16 %v2701, %v2697
        %v2839 = vpack.c.bf16 %v2703, %v2699
        %v2840 = vpack.c.bf16 %v2709, %v2705
        %v2841 = vpack.c.bf16 %v2711, %v2707
        %v2842 = vpack.c.bf16 %v2717, %v2713
        %v2843 = vpack.c.bf16 %v2719, %v2715
        %v2844 = vpack.c.bf16 %v2725, %v2721
        %v2845 = vpack.c.bf16 %v2727, %v2723
        %v2846 = vpack.c.bf16 %v2733, %v2729
        %v2847 = vpack.c.bf16 %v2735, %v2731
        %v2848 = vpack.c.bf16 %v2741, %v2737
        %v2849 = vpack.c.bf16 %v2743, %v2739
        %2850 = vmatpush.bf16.msra.mxu0 %v2832
        %2851 = vmatpush.bf16.msra.mxu0 %v2830
        %2852 = vmatpush.bf16.msra.mxu0 %v2828
        %2853 = vmatpush.bf16.msra.mxu0 %v2826
        %2854 = vmatpush.bf16.msra.mxu0 %v2824
        %2855 = vmatpush.bf16.msra.mxu0 %v2822
        %2856 = vmatpush.bf16.msra.mxu0 %v2820
        %2857 = vmatpush.bf16.msra.mxu0 %v2818
        %2858 = vmatmul.bf16.gmra.mxu0 %v2156
        %v2859 = vpop.f32.mrf.mxu0
        %v2860 = vadd.f32 0.0, %v2859
        %v2861 = vpop.f32.mrf.mxu0
        %2862 = vdwg.mxu0
        %2863 = vmatpush.bf16.msra.mxu0 %v2848
        %2864 = vmatpush.bf16.msra.mxu0 %v2846
        %2865 = vmatpush.bf16.msra.mxu0 %v2844
        %2866 = vmatpush.bf16.msra.mxu0 %v2842
        %2867 = vmatpush.bf16.msra.mxu0 %v2840
        %2868 = vmatpush.bf16.msra.mxu0 %v2838
        %2869 = vmatpush.bf16.msra.mxu0 %v2836
        %2870 = vmatpush.bf16.msra.mxu0 %v2834
        %2871 = vmatmul.bf16.gmra.mxu0 %v2157
        %v2872 = vpop.f32.mrf.mxu0
        %v2873 = vadd.f32 %v2860, %v2872
        %v2874 = vpop.f32.mrf.mxu0
        %2875 = vdwg.mxu0
        %2876 = vmatpush.bf16.msra.mxu0 %v2833
        %2877 = vmatpush.bf16.msra.mxu0 %v2831
        %2878 = vmatpush.bf16.msra.mxu0 %v2829
        %2879 = vmatpush.bf16.msra.mxu0 %v2827
        %2880 = vmatpush.bf16.msra.mxu0 %v2825
        %2881 = vmatpush.bf16.msra.mxu0 %v2823
        %2882 = vmatpush.bf16.msra.mxu0 %v2821
        %2883 = vmatpush.bf16.msra.mxu0 %v2819
        %2884 = vmatmul.bf16.gmra.mxu0 %v2156
        %v2885 = vpop.f32.mrf.mxu0
        %v2886 = vadd.f32 0.0, %v2885
        %v2887 = vpop.f32.mrf.mxu0
        %2888 = vdwg.mxu0
        %2889 = vmatpush.bf16.msra.mxu0 %v2849
        %2890 = vmatpush.bf16.msra.mxu0 %v2847
        %2891 = vmatpush.bf16.msra.mxu0 %v2845
        %2892 = vmatpush.bf16.msra.mxu0 %v2843
        %2893 = vmatpush.bf16.msra.mxu0 %v2841
        %2894 = vmatpush.bf16.msra.mxu0 %v2839
        %2895 = vmatpush.bf16.msra.mxu0 %v2837
        %2896 = vmatpush.bf16.msra.mxu0 %v2835
        %2897 = vmatmul.bf16.gmra.mxu0 %v2157
        %v2898 = vpop.f32.mrf.mxu0
        %v2899 = vadd.f32 %v2886, %v2898
        %v2900 = vpop.f32.mrf.mxu0
        %2901 = vdwg.mxu0
        %v2902 = vrcp.pop %v2780
        %v2903 = vrcp.pop %v2817
        %v2904 = vmul.f32 %v2873, %v2902
        %v2905 = vmul.f32 %v2899, %v2903
        %2906 = vst [vmem:[#allocation2 + $0x20] sm:$0xff] %v2904
        %2907 = vst [vmem:[#allocation2 + $0x28] sm:$0xff] %v2905
        %v2908 = vpack.c.bf16 %v577, %v577
        %v2909 = vpack.c.bf16 %v616, %v616
        %v2910 = vpack.c.bf16 %v587, %v587
        %v2911 = vpack.c.bf16 %v626, %v626
        %v2912 = vpack.c.bf16 %v597, %v597
        %v2913 = vpack.c.bf16 %v636, %v636
        %2914 = vxpose.binary.xlu0.c.b16.start [1/16] %v2911, %v2910, 128
        %2915 = vxpose.binary.xlu0.c.b16.cont [2/16] 0, 0, 128
        %2916 = vxpose.binary.xlu0.c.b16.cont [3/16] 0, 0, 128
        %2917 = vxpose.binary.xlu0.c.b16.cont [4/16] 0, 0, 128
        %2918 = vxpose.binary.xlu0.c.b16.cont [5/16] 0, 0, 128
        %2919 = vxpose.binary.xlu0.c.b16.cont [6/16] 0, 0, 128
        %2920 = vxpose.binary.xlu0.c.b16.cont [7/16] 0, 0, 128
        %2921 = vxpose.binary.xlu0.c.b16.end [8/16] 0, 0, 128
        %v2922 = vpop.trf.xlu0
        %v2923 = vpop.trf.xlu0
        %v2924 = vpop.trf.xlu0
        %v2925 = vpop.trf.xlu0
        %v2926 = vpop.trf.xlu0
        %v2927 = vpop.trf.xlu0
        %v2928 = vpop.trf.xlu0
        %v2929 = vpop.trf.xlu0
        %v2930 = vpop.trf.xlu0
        %v2931 = vpop.trf.xlu0
        %v2932 = vpop.trf.xlu0
        %v2933 = vpop.trf.xlu0
        %v2934 = vpop.trf.xlu0
        %v2935 = vpop.trf.xlu0
        %v2936 = vpop.trf.xlu0
        %v2937 = vpop.trf.xlu0
        %v2939 = vsel %vm668, %v2922, 0
        %v2942 = vsel %vm668, %v2924, 0
        %v2945 = vsel %vm668, %v2926, 0
        %v2948 = vsel %vm668, %v2928, 0
        %v2951 = vsel %vm668, %v2930, 0
        %v2954 = vsel %vm668, %v2932, 0
        %v2957 = vsel %vm668, %v2934, 0
        %v2960 = vsel %vm668, %v2936, 0
        %v2963 = vsel %vm668, %v2923, 0
        %v2966 = vsel %vm668, %v2925, 0
        %v2969 = vsel %vm668, %v2927, 0
        %v2972 = vsel %vm668, %v2929, 0
        %v2975 = vsel %vm668, %v2931, 0
        %v2978 = vsel %vm668, %v2933, 0
        %v2981 = vsel %vm668, %v2935, 0
        %v2984 = vsel %vm668, %v2937, 0
        %v2987 = vsel %vm717, %v2908, 0
        %v2990 = vsel %vm717, %v2909, 0
        %2992 = vmatpush.bf16.msra.mxu0 0
        %2993 = vmatpush.bf16.msra.mxu0 0
        %2994 = vmatpush.bf16.msra.mxu0 0
        %2995 = vmatpush.bf16.msra.mxu0 0
        %2996 = vmatpush.bf16.msra.mxu0 0
        %2997 = vmatpush.bf16.msra.mxu0 0
        %2998 = vmatpush.bf16.msra.mxu0 0
        %2999 = vmatpush.bf16.msra.mxu0 %v2987
        %3000 = vmatmul.bf16.gmra.mxu0 %v2939
        %v3001 = vpop.f32.mrf.mxu0
        %v3002 = vadd.f32 0.0, %v3001
        %v3003 = vpop.f32.mrf.mxu0
        %v3004 = vadd.f32 0.0, %v3003
        %3005 = vmatmul.bf16.gmra.mxu0 %v2942
        %v3006 = vpop.f32.mrf.mxu0
        %v3007 = vadd.f32 0.0, %v3006
        %v3008 = vpop.f32.mrf.mxu0
        %v3009 = vadd.f32 0.0, %v3008
        %3010 = vmatmul.bf16.gmra.mxu0 %v2945
        %v3011 = vpop.f32.mrf.mxu0
        %v3012 = vadd.f32 0.0, %v3011
        %v3013 = vpop.f32.mrf.mxu0
        %v3014 = vadd.f32 0.0, %v3013
        %3015 = vmatmul.bf16.gmra.mxu0 %v2948
        %v3016 = vpop.f32.mrf.mxu0
        %v3017 = vadd.f32 0.0, %v3016
        %v3018 = vpop.f32.mrf.mxu0
        %v3019 = vadd.f32 0.0, %v3018
        %3020 = vmatmul.bf16.gmra.mxu0 %v2951
        %v3021 = vpop.f32.mrf.mxu0
        %v3022 = vadd.f32 0.0, %v3021
        %v3023 = vpop.f32.mrf.mxu0
        %v3024 = vadd.f32 0.0, %v3023
        %3025 = vmatmul.bf16.gmra.mxu0 %v2954
        %v3026 = vpop.f32.mrf.mxu0
        %v3027 = vadd.f32 0.0, %v3026
        %v3028 = vpop.f32.mrf.mxu0
        %v3029 = vadd.f32 0.0, %v3028
        %3030 = vmatmul.bf16.gmra.mxu0 %v2957
        %v3031 = vpop.f32.mrf.mxu0
        %v3032 = vadd.f32 0.0, %v3031
        %v3033 = vpop.f32.mrf.mxu0
        %v3034 = vadd.f32 0.0, %v3033
        %3035 = vmatmul.bf16.gmra.mxu0 %v2960
        %v3036 = vpop.f32.mrf.mxu0
        %v3037 = vadd.f32 0.0, %v3036
        %v3038 = vpop.f32.mrf.mxu0
        %v3039 = vadd.f32 0.0, %v3038
        %3040 = vmatmul.bf16.gmra.mxu0 %v2963
        %v3041 = vpop.f32.mrf.mxu0
        %v3042 = vadd.f32 0.0, %v3041
        %v3043 = vpop.f32.mrf.mxu0
        %v3044 = vadd.f32 0.0, %v3043
        %3045 = vmatmul.bf16.gmra.mxu0 %v2966
        %v3046 = vpop.f32.mrf.mxu0
        %v3047 = vadd.f32 0.0, %v3046
        %v3048 = vpop.f32.mrf.mxu0
        %v3049 = vadd.f32 0.0, %v3048
        %3050 = vmatmul.bf16.gmra.mxu0 %v2969
        %v3051 = vpop.f32.mrf.mxu0
        %v3052 = vadd.f32 0.0, %v3051
        %v3053 = vpop.f32.mrf.mxu0
        %v3054 = vadd.f32 0.0, %v3053
        %3055 = vmatmul.bf16.gmra.mxu0 %v2972
        %v3056 = vpop.f32.mrf.mxu0
        %v3057 = vadd.f32 0.0, %v3056
        %v3058 = vpop.f32.mrf.mxu0
        %v3059 = vadd.f32 0.0, %v3058
        %3060 = vmatmul.bf16.gmra.mxu0 %v2975
        %v3061 = vpop.f32.mrf.mxu0
        %v3062 = vadd.f32 0.0, %v3061
        %v3063 = vpop.f32.mrf.mxu0
        %v3064 = vadd.f32 0.0, %v3063
        %3065 = vmatmul.bf16.gmra.mxu0 %v2978
        %v3066 = vpop.f32.mrf.mxu0
        %v3067 = vadd.f32 0.0, %v3066
        %v3068 = vpop.f32.mrf.mxu0
        %v3069 = vadd.f32 0.0, %v3068
        %3070 = vmatmul.bf16.gmra.mxu0 %v2981
        %v3071 = vpop.f32.mrf.mxu0
        %v3072 = vadd.f32 0.0, %v3071
        %v3073 = vpop.f32.mrf.mxu0
        %v3074 = vadd.f32 0.0, %v3073
        %3075 = vmatmul.bf16.gmra.mxu0 %v2984
        %v3076 = vpop.f32.mrf.mxu0
        %v3077 = vadd.f32 0.0, %v3076
        %v3078 = vpop.f32.mrf.mxu0
        %v3079 = vadd.f32 0.0, %v3078
        %3080 = vdwg.mxu0
        %3081 = vmatpush.bf16.msra.mxu0 0
        %3082 = vmatpush.bf16.msra.mxu0 0
        %3083 = vmatpush.bf16.msra.mxu0 0
        %3084 = vmatpush.bf16.msra.mxu0 0
        %3085 = vmatpush.bf16.msra.mxu0 0
        %3086 = vmatpush.bf16.msra.mxu0 0
        %3087 = vmatpush.bf16.msra.mxu0 0
        %3088 = vmatpush.bf16.msra.mxu0 %v2990
        %3089 = vmatmul.bf16.gmra.mxu0 %v2939
        %v3090 = vpop.f32.mrf.mxu0
        %v3091 = vadd.f32 0.0, %v3090
        %v3092 = vpop.f32.mrf.mxu0
        %v3093 = vadd.f32 0.0, %v3092
        %3094 = vmatmul.bf16.gmra.mxu0 %v2942
        %v3095 = vpop.f32.mrf.mxu0
        %v3096 = vadd.f32 0.0, %v3095
        %v3097 = vpop.f32.mrf.mxu0
        %v3098 = vadd.f32 0.0, %v3097
        %3099 = vmatmul.bf16.gmra.mxu0 %v2945
        %v3100 = vpop.f32.mrf.mxu0
        %v3101 = vadd.f32 0.0, %v3100
        %v3102 = vpop.f32.mrf.mxu0
        %v3103 = vadd.f32 0.0, %v3102
        %3104 = vmatmul.bf16.gmra.mxu0 %v2948
        %v3105 = vpop.f32.mrf.mxu0
        %v3106 = vadd.f32 0.0, %v3105
        %v3107 = vpop.f32.mrf.mxu0
        %v3108 = vadd.f32 0.0, %v3107
        %3109 = vmatmul.bf16.gmra.mxu0 %v2951
        %v3110 = vpop.f32.mrf.mxu0
        %v3111 = vadd.f32 0.0, %v3110
        %v3112 = vpop.f32.mrf.mxu0
        %v3113 = vadd.f32 0.0, %v3112
        %3114 = vmatmul.bf16.gmra.mxu0 %v2954
        %v3115 = vpop.f32.mrf.mxu0
        %v3116 = vadd.f32 0.0, %v3115
        %v3117 = vpop.f32.mrf.mxu0
        %v3118 = vadd.f32 0.0, %v3117
        %3119 = vmatmul.bf16.gmra.mxu0 %v2957
        %v3120 = vpop.f32.mrf.mxu0
        %v3121 = vadd.f32 0.0, %v3120
        %v3122 = vpop.f32.mrf.mxu0
        %v3123 = vadd.f32 0.0, %v3122
        %3124 = vmatmul.bf16.gmra.mxu0 %v2960
        %v3125 = vpop.f32.mrf.mxu0
        %v3126 = vadd.f32 0.0, %v3125
        %v3127 = vpop.f32.mrf.mxu0
        %v3128 = vadd.f32 0.0, %v3127
        %3129 = vmatmul.bf16.gmra.mxu0 %v2963
        %v3130 = vpop.f32.mrf.mxu0
        %v3131 = vadd.f32 0.0, %v3130
        %v3132 = vpop.f32.mrf.mxu0
        %v3133 = vadd.f32 0.0, %v3132
        %3134 = vmatmul.bf16.gmra.mxu0 %v2966
        %v3135 = vpop.f32.mrf.mxu0
        %v3136 = vadd.f32 0.0, %v3135
        %v3137 = vpop.f32.mrf.mxu0
        %v3138 = vadd.f32 0.0, %v3137
        %3139 = vmatmul.bf16.gmra.mxu0 %v2969
        %v3140 = vpop.f32.mrf.mxu0
        %v3141 = vadd.f32 0.0, %v3140
        %v3142 = vpop.f32.mrf.mxu0
        %v3143 = vadd.f32 0.0, %v3142
        %3144 = vmatmul.bf16.gmra.mxu0 %v2972
        %v3145 = vpop.f32.mrf.mxu0
        %v3146 = vadd.f32 0.0, %v3145
        %v3147 = vpop.f32.mrf.mxu0
        %v3148 = vadd.f32 0.0, %v3147
        %3149 = vmatmul.bf16.gmra.mxu0 %v2975
        %v3150 = vpop.f32.mrf.mxu0
        %v3151 = vadd.f32 0.0, %v3150
        %v3152 = vpop.f32.mrf.mxu0
        %v3153 = vadd.f32 0.0, %v3152
        %3154 = vmatmul.bf16.gmra.mxu0 %v2978
        %v3155 = vpop.f32.mrf.mxu0
        %v3156 = vadd.f32 0.0, %v3155
        %v3157 = vpop.f32.mrf.mxu0
        %v3158 = vadd.f32 0.0, %v3157
        %3159 = vmatmul.bf16.gmra.mxu0 %v2981
        %v3160 = vpop.f32.mrf.mxu0
        %v3161 = vadd.f32 0.0, %v3160
        %v3162 = vpop.f32.mrf.mxu0
        %v3163 = vadd.f32 0.0, %v3162
        %3164 = vmatmul.bf16.gmra.mxu0 %v2984
        %v3165 = vpop.f32.mrf.mxu0
        %v3166 = vadd.f32 0.0, %v3165
        %v3167 = vpop.f32.mrf.mxu0
        %v3168 = vadd.f32 0.0, %v3167
        %3169 = vdwg.mxu0
        %v3170 = vmul.f32 %v3002, 0.35355338
        %v3171 = vmul.f32 %v3091, 0.35355338
        %v3172 = vmul.f32 %v3004, 0.35355338
        %v3173 = vmul.f32 %v3093, 0.35355338
        %v3174 = vmul.f32 %v3007, 0.35355338
        %v3175 = vmul.f32 %v3096, 0.35355338
        %v3176 = vmul.f32 %v3009, 0.35355338
        %v3177 = vmul.f32 %v3098, 0.35355338
        %v3178 = vmul.f32 %v3012, 0.35355338
        %v3179 = vmul.f32 %v3101, 0.35355338
        %v3180 = vmul.f32 %v3014, 0.35355338
        %v3181 = vmul.f32 %v3103, 0.35355338
        %v3182 = vmul.f32 %v3017, 0.35355338
        %v3183 = vmul.f32 %v3106, 0.35355338
        %v3184 = vmul.f32 %v3019, 0.35355338
        %v3185 = vmul.f32 %v3108, 0.35355338
        %v3186 = vmul.f32 %v3022, 0.35355338
        %v3187 = vmul.f32 %v3111, 0.35355338
        %v3188 = vmul.f32 %v3024, 0.35355338
        %v3189 = vmul.f32 %v3113, 0.35355338
        %v3190 = vmul.f32 %v3027, 0.35355338
        %v3191 = vmul.f32 %v3116, 0.35355338
        %v3192 = vmul.f32 %v3029, 0.35355338
        %v3193 = vmul.f32 %v3118, 0.35355338
        %v3194 = vmul.f32 %v3032, 0.35355338
        %v3195 = vmul.f32 %v3121, 0.35355338
        %v3196 = vmul.f32 %v3034, 0.35355338
        %v3197 = vmul.f32 %v3123, 0.35355338
        %v3198 = vmul.f32 %v3037, 0.35355338
        %v3199 = vmul.f32 %v3126, 0.35355338
        %v3200 = vmul.f32 %v3039, 0.35355338
        %v3201 = vmul.f32 %v3128, 0.35355338
        %v3202 = vmul.f32 %v3042, 0.35355338
        %v3203 = vmul.f32 %v3131, 0.35355338
        %v3204 = vmul.f32 %v3044, 0.35355338
        %v3205 = vmul.f32 %v3133, 0.35355338
        %v3206 = vmul.f32 %v3047, 0.35355338
        %v3207 = vmul.f32 %v3136, 0.35355338
        %v3208 = vmul.f32 %v3049, 0.35355338
        %v3209 = vmul.f32 %v3138, 0.35355338
        %v3210 = vmul.f32 %v3052, 0.35355338
        %v3211 = vmul.f32 %v3141, 0.35355338
        %v3212 = vmul.f32 %v3054, 0.35355338
        %v3213 = vmul.f32 %v3143, 0.35355338
        %v3214 = vmul.f32 %v3057, 0.35355338
        %v3215 = vmul.f32 %v3146, 0.35355338
        %v3216 = vmul.f32 %v3059, 0.35355338
        %v3217 = vmul.f32 %v3148, 0.35355338
        %v3218 = vmul.f32 %v3062, 0.35355338
        %v3219 = vmul.f32 %v3151, 0.35355338
        %v3220 = vmul.f32 %v3064, 0.35355338
        %v3221 = vmul.f32 %v3153, 0.35355338
        %v3222 = vmul.f32 %v3067, 0.35355338
        %v3223 = vmul.f32 %v3156, 0.35355338
        %v3224 = vmul.f32 %v3069, 0.35355338
        %v3225 = vmul.f32 %v3158, 0.35355338
        %v3226 = vmul.f32 %v3072, 0.35355338
        %v3227 = vmul.f32 %v3161, 0.35355338
        %v3228 = vmul.f32 %v3074, 0.35355338
        %v3229 = vmul.f32 %v3163, 0.35355338
        %v3230 = vmul.f32 %v3077, 0.35355338
        %v3231 = vmul.f32 %v3166, 0.35355338
        %v3232 = vmul.f32 %v3079, 0.35355338
        %v3233 = vmul.f32 %v3168, 0.35355338
        %v3234 = vmax.f32 %v3170, %v3174
        %v3235 = vmax.f32 %v3172, %v3176
        %v3236 = vmax.f32 %v3234, %v3178
        %v3237 = vmax.f32 %v3235, %v3180
        %v3238 = vmax.f32 %v3236, %v3182
        %v3239 = vmax.f32 %v3237, %v3184
        %v3240 = vmax.f32 %v3238, %v3186
        %v3241 = vmax.f32 %v3239, %v3188
        %v3242 = vmax.f32 %v3240, %v3190
        %v3243 = vmax.f32 %v3241, %v3192
        %v3244 = vmax.f32 %v3242, %v3194
        %v3245 = vmax.f32 %v3243, %v3196
        %v3246 = vmax.f32 %v3244, %v3198
        %v3247 = vmax.f32 %v3245, %v3200
        %v3248 = vmax.f32 %v3246, %v3202
        %v3249 = vmax.f32 %v3247, %v3204
        %v3250 = vmax.f32 %v3248, %v3206
        %v3251 = vmax.f32 %v3249, %v3208
        %v3252 = vmax.f32 %v3250, %v3210
        %v3253 = vmax.f32 %v3251, %v3212
        %v3254 = vmax.f32 %v3252, %v3214
        %v3255 = vmax.f32 %v3253, %v3216
        %v3256 = vmax.f32 %v3254, %v3218
        %v3257 = vmax.f32 %v3255, %v3220
        %v3258 = vmax.f32 %v3256, %v3222
        %v3259 = vmax.f32 %v3257, %v3224
        %v3260 = vmax.f32 %v3258, %v3226
        %v3261 = vmax.f32 %v3259, %v3228
        %v3262 = vmax.f32 %v3260, %v3230
        %v3263 = vmax.f32 %v3261, %v3232
        %v3264 = vmax.f32 %v3262, %v3263
        %v3265 = vrot.slane %v3264, 4
        %v3266 = vmax.f32 %v3264, %v3265
        %v3267 = vrot.slane %v3266, 2
        %v3268 = vmax.f32 %v3266, %v3267
        %v3269 = vrot.slane %v3268, 1
        %v3270 = vmax.f32 %v3268, %v3269
        %v3271 = vmax.f32 %v3171, %v3175
        %v3272 = vmax.f32 %v3173, %v3177
        %v3273 = vmax.f32 %v3271, %v3179
        %v3274 = vmax.f32 %v3272, %v3181
        %v3275 = vmax.f32 %v3273, %v3183
        %v3276 = vmax.f32 %v3274, %v3185
        %v3277 = vmax.f32 %v3275, %v3187
        %v3278 = vmax.f32 %v3276, %v3189
        %v3279 = vmax.f32 %v3277, %v3191
        %v3280 = vmax.f32 %v3278, %v3193
        %v3281 = vmax.f32 %v3279, %v3195
        %v3282 = vmax.f32 %v3280, %v3197
        %v3283 = vmax.f32 %v3281, %v3199
        %v3284 = vmax.f32 %v3282, %v3201
        %v3285 = vmax.f32 %v3283, %v3203
        %v3286 = vmax.f32 %v3284, %v3205
        %v3287 = vmax.f32 %v3285, %v3207
        %v3288 = vmax.f32 %v3286, %v3209
        %v3289 = vmax.f32 %v3287, %v3211
        %v3290 = vmax.f32 %v3288, %v3213
        %v3291 = vmax.f32 %v3289, %v3215
        %v3292 = vmax.f32 %v3290, %v3217
        %v3293 = vmax.f32 %v3291, %v3219
        %v3294 = vmax.f32 %v3292, %v3221
        %v3295 = vmax.f32 %v3293, %v3223
        %v3296 = vmax.f32 %v3294, %v3225
        %v3297 = vmax.f32 %v3295, %v3227
        %v3298 = vmax.f32 %v3296, %v3229
        %v3299 = vmax.f32 %v3297, %v3231
        %v3300 = vmax.f32 %v3298, %v3233
        %v3301 = vmax.f32 %v3299, %v3300
        %v3302 = vrot.slane %v3301, 4
        %v3303 = vmax.f32 %v3301, %v3302
        %v3304 = vrot.slane %v3303, 2
        %v3305 = vmax.f32 %v3303, %v3304
        %v3306 = vrot.slane %v3305, 1
        %v3307 = vmax.f32 %v3305, %v3306
        %v3308 = vsub.f32 %v3170, %v3270
        %v3309 = vsub.f32 %v3171, %v3307
        %v3310 = vsub.f32 %v3172, %v3270
        %v3311 = vsub.f32 %v3173, %v3307
        %v3312 = vsub.f32 %v3174, %v3270
        %v3313 = vsub.f32 %v3175, %v3307
        %v3314 = vsub.f32 %v3176, %v3270
        %v3315 = vsub.f32 %v3177, %v3307
        %v3316 = vsub.f32 %v3178, %v3270
        %v3317 = vsub.f32 %v3179, %v3307
        %v3318 = vsub.f32 %v3180, %v3270
        %v3319 = vsub.f32 %v3181, %v3307
        %v3320 = vsub.f32 %v3182, %v3270
        %v3321 = vsub.f32 %v3183, %v3307
        %v3322 = vsub.f32 %v3184, %v3270
        %v3323 = vsub.f32 %v3185, %v3307
        %v3324 = vsub.f32 %v3186, %v3270
        %v3325 = vsub.f32 %v3187, %v3307
        %v3326 = vsub.f32 %v3188, %v3270
        %v3327 = vsub.f32 %v3189, %v3307
        %v3328 = vsub.f32 %v3190, %v3270
        %v3329 = vsub.f32 %v3191, %v3307
        %v3330 = vsub.f32 %v3192, %v3270
        %v3331 = vsub.f32 %v3193, %v3307
        %v3332 = vsub.f32 %v3194, %v3270
        %v3333 = vsub.f32 %v3195, %v3307
        %v3334 = vsub.f32 %v3196, %v3270
        %v3335 = vsub.f32 %v3197, %v3307
        %v3336 = vsub.f32 %v3198, %v3270
        %v3337 = vsub.f32 %v3199, %v3307
        %v3338 = vsub.f32 %v3200, %v3270
        %v3339 = vsub.f32 %v3201, %v3307
        %v3340 = vsub.f32 %v3202, %v3270
        %v3341 = vsub.f32 %v3203, %v3307
        %v3342 = vsub.f32 %v3204, %v3270
        %v3343 = vsub.f32 %v3205, %v3307
        %v3344 = vsub.f32 %v3206, %v3270
        %v3345 = vsub.f32 %v3207, %v3307
        %v3346 = vsub.f32 %v3208, %v3270
        %v3347 = vsub.f32 %v3209, %v3307
        %v3348 = vsub.f32 %v3210, %v3270
        %v3349 = vsub.f32 %v3211, %v3307
        %v3350 = vsub.f32 %v3212, %v3270
        %v3351 = vsub.f32 %v3213, %v3307
        %v3352 = vsub.f32 %v3214, %v3270
        %v3353 = vsub.f32 %v3215, %v3307
        %v3354 = vsub.f32 %v3216, %v3270
        %v3355 = vsub.f32 %v3217, %v3307
        %v3356 = vsub.f32 %v3218, %v3270
        %v3357 = vsub.f32 %v3219, %v3307
        %v3358 = vsub.f32 %v3220, %v3270
        %v3359 = vsub.f32 %v3221, %v3307
        %v3360 = vsub.f32 %v3222, %v3270
        %v3361 = vsub.f32 %v3223, %v3307
        %v3362 = vsub.f32 %v3224, %v3270
        %v3363 = vsub.f32 %v3225, %v3307
        %v3364 = vsub.f32 %v3226, %v3270
        %v3365 = vsub.f32 %v3227, %v3307
        %v3366 = vsub.f32 %v3228, %v3270
        %v3367 = vsub.f32 %v3229, %v3307
        %v3368 = vsub.f32 %v3230, %v3270
        %v3369 = vsub.f32 %v3231, %v3307
        %v3370 = vsub.f32 %v3232, %v3270
        %v3371 = vsub.f32 %v3233, %v3307
        %v3372 = vmul.f32 %v3308, 1.442695
        %v3373 = vpow.pop %v3372
        %v3374 = vmul.f32 %v3309, 1.442695
        %v3375 = vpow.pop %v3374
        %v3376 = vmul.f32 %v3310, 1.442695
        %v3377 = vpow.pop %v3376
        %v3378 = vmul.f32 %v3311, 1.442695
        %v3379 = vpow.pop %v3378
        %v3380 = vmul.f32 %v3312, 1.442695
        %v3381 = vpow.pop %v3380
        %v3382 = vmul.f32 %v3313, 1.442695
        %v3383 = vpow.pop %v3382
        %v3384 = vmul.f32 %v3314, 1.442695
        %v3385 = vpow.pop %v3384
        %v3386 = vmul.f32 %v3315, 1.442695
        %v3387 = vpow.pop %v3386
        %v3388 = vmul.f32 %v3316, 1.442695
        %v3389 = vpow.pop %v3388
        %v3390 = vmul.f32 %v3317, 1.442695
        %v3391 = vpow.pop %v3390
        %v3392 = vmul.f32 %v3318, 1.442695
        %v3393 = vpow.pop %v3392
        %v3394 = vmul.f32 %v3319, 1.442695
        %v3395 = vpow.pop %v3394
        %v3396 = vmul.f32 %v3320, 1.442695
        %v3397 = vpow.pop %v3396
        %v3398 = vmul.f32 %v3321, 1.442695
        %v3399 = vpow.pop %v3398
        %v3400 = vmul.f32 %v3322, 1.442695
        %v3401 = vpow.pop %v3400
        %v3402 = vmul.f32 %v3323, 1.442695
        %v3403 = vpow.pop %v3402
        %v3404 = vmul.f32 %v3324, 1.442695
        %v3405 = vpow.pop %v3404
        %v3406 = vmul.f32 %v3325, 1.442695
        %v3407 = vpow.pop %v3406
        %v3408 = vmul.f32 %v3326, 1.442695
        %v3409 = vpow.pop %v3408
        %v3410 = vmul.f32 %v3327, 1.442695
        %v3411 = vpow.pop %v3410
        %v3412 = vmul.f32 %v3328, 1.442695
        %v3413 = vpow.pop %v3412
        %v3414 = vmul.f32 %v3329, 1.442695
        %v3415 = vpow.pop %v3414
        %v3416 = vmul.f32 %v3330, 1.442695
        %v3417 = vpow.pop %v3416
        %v3418 = vmul.f32 %v3331, 1.442695
        %v3419 = vpow.pop %v3418
        %v3420 = vmul.f32 %v3332, 1.442695
        %v3421 = vpow.pop %v3420
        %v3422 = vmul.f32 %v3333, 1.442695
        %v3423 = vpow.pop %v3422
        %v3424 = vmul.f32 %v3334, 1.442695
        %v3425 = vpow.pop %v3424
        %v3426 = vmul.f32 %v3335, 1.442695
        %v3427 = vpow.pop %v3426
        %v3428 = vmul.f32 %v3336, 1.442695
        %v3429 = vpow.pop %v3428
        %v3430 = vmul.f32 %v3337, 1.442695
        %v3431 = vpow.pop %v3430
        %v3432 = vmul.f32 %v3338, 1.442695
        %v3433 = vpow.pop %v3432
        %v3434 = vmul.f32 %v3339, 1.442695
        %v3435 = vpow.pop %v3434
        %v3436 = vmul.f32 %v3340, 1.442695
        %v3437 = vpow.pop %v3436
        %v3438 = vmul.f32 %v3341, 1.442695
        %v3439 = vpow.pop %v3438
        %v3440 = vmul.f32 %v3342, 1.442695
        %v3441 = vpow.pop %v3440
        %v3442 = vmul.f32 %v3343, 1.442695
        %v3443 = vpow.pop %v3442
        %v3444 = vmul.f32 %v3344, 1.442695
        %v3445 = vpow.pop %v3444
        %v3446 = vmul.f32 %v3345, 1.442695
        %v3447 = vpow.pop %v3446
        %v3448 = vmul.f32 %v3346, 1.442695
        %v3449 = vpow.pop %v3448
        %v3450 = vmul.f32 %v3347, 1.442695
        %v3451 = vpow.pop %v3450
        %v3452 = vmul.f32 %v3348, 1.442695
        %v3453 = vpow.pop %v3452
        %v3454 = vmul.f32 %v3349, 1.442695
        %v3455 = vpow.pop %v3454
        %v3456 = vmul.f32 %v3350, 1.442695
        %v3457 = vpow.pop %v3456
        %v3458 = vmul.f32 %v3351, 1.442695
        %v3459 = vpow.pop %v3458
        %v3460 = vmul.f32 %v3352, 1.442695
        %v3461 = vpow.pop %v3460
        %v3462 = vmul.f32 %v3353, 1.442695
        %v3463 = vpow.pop %v3462
        %v3464 = vmul.f32 %v3354, 1.442695
        %v3465 = vpow.pop %v3464
        %v3466 = vmul.f32 %v3355, 1.442695
        %v3467 = vpow.pop %v3466
        %v3468 = vmul.f32 %v3356, 1.442695
        %v3469 = vpow.pop %v3468
        %v3470 = vmul.f32 %v3357, 1.442695
        %v3471 = vpow.pop %v3470
        %v3472 = vmul.f32 %v3358, 1.442695
        %v3473 = vpow.pop %v3472
        %v3474 = vmul.f32 %v3359, 1.442695
        %v3475 = vpow.pop %v3474
        %v3476 = vmul.f32 %v3360, 1.442695
        %v3477 = vpow.pop %v3476
        %v3478 = vmul.f32 %v3361, 1.442695
        %v3479 = vpow.pop %v3478
        %v3480 = vmul.f32 %v3362, 1.442695
        %v3481 = vpow.pop %v3480
        %v3482 = vmul.f32 %v3363, 1.442695
        %v3483 = vpow.pop %v3482
        %v3484 = vmul.f32 %v3364, 1.442695
        %v3485 = vpow.pop %v3484
        %v3486 = vmul.f32 %v3365, 1.442695
        %v3487 = vpow.pop %v3486
        %v3488 = vmul.f32 %v3366, 1.442695
        %v3489 = vpow.pop %v3488
        %v3490 = vmul.f32 %v3367, 1.442695
        %v3491 = vpow.pop %v3490
        %v3492 = vmul.f32 %v3368, 1.442695
        %v3493 = vpow.pop %v3492
        %v3494 = vmul.f32 %v3369, 1.442695
        %v3495 = vpow.pop %v3494
        %v3496 = vmul.f32 %v3370, 1.442695
        %v3497 = vpow.pop %v3496
        %v3498 = vmul.f32 %v3371, 1.442695
        %v3499 = vpow.pop %v3498
        %v3500 = vadd.f32 %v3373, %v3377
        %v3501 = vadd.f32 %v3500, %v3381
        %v3502 = vadd.f32 %v3501, %v3385
        %v3503 = vadd.f32 %v3502, %v3389
        %v3504 = vadd.f32 %v3503, %v3393
        %v3505 = vadd.f32 %v3504, %v3397
        %v3506 = vadd.f32 %v3505, %v3401
        %v3507 = vadd.f32 %v3506, %v3405
        %v3508 = vadd.f32 %v3507, %v3409
        %v3509 = vadd.f32 %v3508, %v3413
        %v3510 = vadd.f32 %v3509, %v3417
        %v3511 = vadd.f32 %v3510, %v3421
        %v3512 = vadd.f32 %v3511, %v3425
        %v3513 = vadd.f32 %v3512, %v3429
        %v3514 = vadd.f32 %v3513, %v3433
        %v3515 = vadd.f32 %v3514, %v3437
        %v3516 = vadd.f32 %v3515, %v3441
        %v3517 = vadd.f32 %v3516, %v3445
        %v3518 = vadd.f32 %v3517, %v3449
        %v3519 = vadd.f32 %v3518, %v3453
        %v3520 = vadd.f32 %v3519, %v3457
        %v3521 = vadd.f32 %v3520, %v3461
        %v3522 = vadd.f32 %v3521, %v3465
        %v3523 = vadd.f32 %v3522, %v3469
        %v3524 = vadd.f32 %v3523, %v3473
        %v3525 = vadd.f32 %v3524, %v3477
        %v3526 = vadd.f32 %v3525, %v3481
        %v3527 = vadd.f32 %v3526, %v3485
        %v3528 = vadd.f32 %v3527, %v3489
        %v3529 = vadd.f32 %v3528, %v3493
        %v3530 = vadd.f32 %v3529, %v3497
        %v3531 = vrot.slane %v3530, 4
        %v3532 = vadd.f32 %v3530, %v3531
        %v3533 = vrot.slane %v3532, 2
        %v3534 = vadd.f32 %v3532, %v3533
        %v3535 = vrot.slane %v3534, 1
        %v3536 = vadd.f32 %v3534, %v3535
        %v3537 = vadd.f32 %v3375, %v3379
        %v3538 = vadd.f32 %v3537, %v3383
        %v3539 = vadd.f32 %v3538, %v3387
        %v3540 = vadd.f32 %v3539, %v3391
        %v3541 = vadd.f32 %v3540, %v3395
        %v3542 = vadd.f32 %v3541, %v3399
        %v3543 = vadd.f32 %v3542, %v3403
        %v3544 = vadd.f32 %v3543, %v3407
        %v3545 = vadd.f32 %v3544, %v3411
        %v3546 = vadd.f32 %v3545, %v3415
        %v3547 = vadd.f32 %v3546, %v3419
        %v3548 = vadd.f32 %v3547, %v3423
        %v3549 = vadd.f32 %v3548, %v3427
        %v3550 = vadd.f32 %v3549, %v3431
        %v3551 = vadd.f32 %v3550, %v3435
        %v3552 = vadd.f32 %v3551, %v3439
        %v3553 = vadd.f32 %v3552, %v3443
        %v3554 = vadd.f32 %v3553, %v3447
        %v3555 = vadd.f32 %v3554, %v3451
        %v3556 = vadd.f32 %v3555, %v3455
        %v3557 = vadd.f32 %v3556, %v3459
        %v3558 = vadd.f32 %v3557, %v3463
        %v3559 = vadd.f32 %v3558, %v3467
        %v3560 = vadd.f32 %v3559, %v3471
        %v3561 = vadd.f32 %v3560, %v3475
        %v3562 = vadd.f32 %v3561, %v3479
        %v3563 = vadd.f32 %v3562, %v3483
        %v3564 = vadd.f32 %v3563, %v3487
        %v3565 = vadd.f32 %v3564, %v3491
        %v3566 = vadd.f32 %v3565, %v3495
        %v3567 = vadd.f32 %v3566, %v3499
        %v3568 = vrot.slane %v3567, 4
        %v3569 = vadd.f32 %v3567, %v3568
        %v3570 = vrot.slane %v3569, 2
        %v3571 = vadd.f32 %v3569, %v3570
        %v3572 = vrot.slane %v3571, 1
        %v3573 = vadd.f32 %v3571, %v3572
        %v3574 = vpack.c.bf16 %v3377, %v3373
        %v3575 = vpack.c.bf16 %v3379, %v3375
        %v3576 = vpack.c.bf16 %v3385, %v3381
        %v3577 = vpack.c.bf16 %v3387, %v3383
        %v3578 = vpack.c.bf16 %v3393, %v3389
        %v3579 = vpack.c.bf16 %v3395, %v3391
        %v3580 = vpack.c.bf16 %v3401, %v3397
        %v3581 = vpack.c.bf16 %v3403, %v3399
        %v3582 = vpack.c.bf16 %v3409, %v3405
        %v3583 = vpack.c.bf16 %v3411, %v3407
        %v3584 = vpack.c.bf16 %v3417, %v3413
        %v3585 = vpack.c.bf16 %v3419, %v3415
        %v3586 = vpack.c.bf16 %v3425, %v3421
        %v3587 = vpack.c.bf16 %v3427, %v3423
        %v3588 = vpack.c.bf16 %v3433, %v3429
        %v3589 = vpack.c.bf16 %v3435, %v3431
        %v3590 = vpack.c.bf16 %v3441, %v3437
        %v3591 = vpack.c.bf16 %v3443, %v3439
        %v3592 = vpack.c.bf16 %v3449, %v3445
        %v3593 = vpack.c.bf16 %v3451, %v3447
        %v3594 = vpack.c.bf16 %v3457, %v3453
        %v3595 = vpack.c.bf16 %v3459, %v3455
        %v3596 = vpack.c.bf16 %v3465, %v3461
        %v3597 = vpack.c.bf16 %v3467, %v3463
        %v3598 = vpack.c.bf16 %v3473, %v3469
        %v3599 = vpack.c.bf16 %v3475, %v3471
        %v3600 = vpack.c.bf16 %v3481, %v3477
        %v3601 = vpack.c.bf16 %v3483, %v3479
        %v3602 = vpack.c.bf16 %v3489, %v3485
        %v3603 = vpack.c.bf16 %v3491, %v3487
        %v3604 = vpack.c.bf16 %v3497, %v3493
        %v3605 = vpack.c.bf16 %v3499, %v3495
        %3606 = vmatpush.bf16.msra.mxu0 %v3588
        %3607 = vmatpush.bf16.msra.mxu0 %v3586
        %3608 = vmatpush.bf16.msra.mxu0 %v3584
        %3609 = vmatpush.bf16.msra.mxu0 %v3582
        %3610 = vmatpush.bf16.msra.mxu0 %v3580
        %3611 = vmatpush.bf16.msra.mxu0 %v3578
        %3612 = vmatpush.bf16.msra.mxu0 %v3576
        %3613 = vmatpush.bf16.msra.mxu0 %v3574
        %3614 = vmatmul.bf16.gmra.mxu0 %v2912
        %v3615 = vpop.f32.mrf.mxu0
        %v3616 = vadd.f32 0.0, %v3615
        %v3617 = vpop.f32.mrf.mxu0
        %3618 = vdwg.mxu0
        %3619 = vmatpush.bf16.msra.mxu0 %v3604
        %3620 = vmatpush.bf16.msra.mxu0 %v3602
        %3621 = vmatpush.bf16.msra.mxu0 %v3600
        %3622 = vmatpush.bf16.msra.mxu0 %v3598
        %3623 = vmatpush.bf16.msra.mxu0 %v3596
        %3624 = vmatpush.bf16.msra.mxu0 %v3594
        %3625 = vmatpush.bf16.msra.mxu0 %v3592
        %3626 = vmatpush.bf16.msra.mxu0 %v3590
        %3627 = vmatmul.bf16.gmra.mxu0 %v2913
        %v3628 = vpop.f32.mrf.mxu0
        %v3629 = vadd.f32 %v3616, %v3628
        %v3630 = vpop.f32.mrf.mxu0
        %3631 = vdwg.mxu0
        %3632 = vmatpush.bf16.msra.mxu0 %v3589
        %3633 = vmatpush.bf16.msra.mxu0 %v3587
        %3634 = vmatpush.bf16.msra.mxu0 %v3585
        %3635 = vmatpush.bf16.msra.mxu0 %v3583
        %3636 = vmatpush.bf16.msra.mxu0 %v3581
        %3637 = vmatpush.bf16.msra.mxu0 %v3579
        %3638 = vmatpush.bf16.msra.mxu0 %v3577
        %3639 = vmatpush.bf16.msra.mxu0 %v3575
        %3640 = vmatmul.bf16.gmra.mxu0 %v2912
        %v3641 = vpop.f32.mrf.mxu0
        %v3642 = vadd.f32 0.0, %v3641
        %v3643 = vpop.f32.mrf.mxu0
        %3644 = vdwg.mxu0
        %3645 = vmatpush.bf16.msra.mxu0 %v3605
        %3646 = vmatpush.bf16.msra.mxu0 %v3603
        %3647 = vmatpush.bf16.msra.mxu0 %v3601
        %3648 = vmatpush.bf16.msra.mxu0 %v3599
        %3649 = vmatpush.bf16.msra.mxu0 %v3597
        %3650 = vmatpush.bf16.msra.mxu0 %v3595
        %3651 = vmatpush.bf16.msra.mxu0 %v3593
        %3652 = vmatpush.bf16.msra.mxu0 %v3591
        %3653 = vmatmul.bf16.gmra.mxu0 %v2913
        %v3654 = vpop.f32.mrf.mxu0
        %v3655 = vadd.f32 %v3642, %v3654
        %v3656 = vpop.f32.mrf.mxu0
        %3657 = vdwg.mxu0
        %v3658 = vrcp.pop %v3536
        %v3659 = vrcp.pop %v3573
        %v3660 = vmul.f32 %v3629, %v3658
        %v3661 = vmul.f32 %v3655, %v3659
        %3662 = vst [vmem:[#allocation2 + $0x30] sm:$0xff] %v3660
        %3663 = vst [vmem:[#allocation2 + $0x38] sm:$0xff] %v3661
        %v3664 = vld [vmem:[%s5] sm:$0xf]
        %v3665 = vld [vmem:[%s5 + $0x4] sm:$0xf]
        %v3666 = vld [vmem:[%s5 + $0x8] sm:$0xf]
        %v3667 = vld [vmem:[%s5 + $0xc] sm:$0xf]
        %v3668 = vld [vmem:[#allocation2] sm:$0xff]
        %v3669 = vld [vmem:[#allocation2 + $0x8] sm:$0xff]
        %v3670 = vld [vmem:[#allocation2 + $0x10] sm:$0xff]
        %v3671 = vld [vmem:[#allocation2 + $0x18] sm:$0xff]
        %v3672 = vld [vmem:[#allocation2 + $0x20] sm:$0xff]
        %v3673 = vld [vmem:[#allocation2 + $0x28] sm:$0xff]
        %v3674 = vld [vmem:[#allocation2 + $0x30] sm:$0xff]
        %v3675 = vld [vmem:[#allocation2 + $0x38] sm:$0xff]
        %v3676 = vpack.c.bf16 %v3670, %v3668
        %v3677 = vpack.c.bf16 %v3671, %v3669
        %v3678 = vpack.c.bf16 %v3674, %v3672
        %v3679 = vpack.c.bf16 %v3675, %v3673
        %v3684 = vunpack.c.l.b16 %v3664
        %v3685 = vunpack.c.l.b16 %v3665
        %v3686 = vunpack.c.l.b16 %v3666
        %v3687 = vunpack.c.l.b16 %v3667
        %v3688 = vpack.c.b16 %v3685, %v3684
        %v3689 = vpack.c.b16 %v3687, %v3686
        %v3691 = vsel %vm541, %v3688, 0
        %v3694 = vsel %vm541, %v3689, 0
        %3696 = vmatpush.bf16.msra.mxu0 0
        %3697 = vmatpush.bf16.msra.mxu0 0
        %3698 = vmatpush.bf16.msra.mxu0 0
        %3699 = vmatpush.bf16.msra.mxu0 0
        %3700 = vmatpush.bf16.msra.mxu0 0
        %3701 = vmatpush.bf16.msra.mxu0 0
        %3702 = vmatpush.bf16.msra.mxu0 %v3678
        %3703 = vmatpush.bf16.msra.mxu0 %v3676
        %3704 = vmatmul.bf16.gmra.mxu0 %v3691
        %v3705 = vpop.f32.mrf.mxu0
        %v3706 = vadd.f32 0.0, %v3705
        %v3707 = vpop.f32.mrf.mxu0
        %v3708 = vadd.f32 0.0, %v3707
        %3709 = vmatmul.bf16.gmra.mxu0 %v3694
        %v3710 = vpop.f32.mrf.mxu0
        %v3711 = vadd.f32 0.0, %v3710
        %v3712 = vpop.f32.mrf.mxu0
        %v3713 = vadd.f32 0.0, %v3712
        %3714 = vdwg.mxu0
        %3715 = vmatpush.bf16.msra.mxu0 0
        %3716 = vmatpush.bf16.msra.mxu0 0
        %3717 = vmatpush.bf16.msra.mxu0 0
        %3718 = vmatpush.bf16.msra.mxu0 0
        %3719 = vmatpush.bf16.msra.mxu0 0
        %3720 = vmatpush.bf16.msra.mxu0 0
        %3721 = vmatpush.bf16.msra.mxu0 %v3679
        %3722 = vmatpush.bf16.msra.mxu0 %v3677
        %3723 = vmatmul.bf16.gmra.mxu0 %v3691
        %v3724 = vpop.f32.mrf.mxu0
        %v3725 = vadd.f32 0.0, %v3724
        %v3726 = vpop.f32.mrf.mxu0
        %v3727 = vadd.f32 0.0, %v3726
        %3728 = vmatmul.bf16.gmra.mxu0 %v3694
        %v3729 = vpop.f32.mrf.mxu0
        %v3730 = vadd.f32 0.0, %v3729
        %v3731 = vpop.f32.mrf.mxu0
        %v3732 = vadd.f32 0.0, %v3731
        %3733 = vdwg.mxu0
        %v3734 = vadd.f32 %v278, %v3706
        %v3735 = vadd.f32 %v279, %v3725
        %v3736 = vadd.f32 %v280, %v3708
        %v3737 = vadd.f32 %v281, %v3727
        %v3738 = vadd.f32 %v282, %v3711
        %v3739 = vadd.f32 %v283, %v3730
        %v3740 = vadd.f32 %v284, %v3713
        %v3741 = vadd.f32 %v285, %v3732
        %v3742 = vld [vmem:[%s6] sm:$0xff]
        %v3743 = vld [vmem:[%s6 + $0x8] sm:$0xff]
        %v3744 = vld [vmem:[%s6 + $0x10] sm:$0xff]
        %v3745 = vld [vmem:[%s6 + $0x18] sm:$0xff]
        %3747 = vset.pattern.permute.xlu0 0
        %3748 = vperm.xlu0 %3747, %v3742
        %v3749 = vpop.permute.xlu0 %3748
        %3752 = vset.pattern.permute.xlu0 0
        %3753 = vperm.xlu0 %3752, %v3743
        %v3754 = vpop.permute.xlu0 %3753
        %3757 = vset.pattern.permute.xlu0 0
        %3758 = vperm.xlu0 %3757, %v3744
        %v3759 = vpop.permute.xlu0 %3758
        %3762 = vset.pattern.permute.xlu0 0
        %3763 = vperm.xlu0 %3762, %v3745
        %v3764 = vpop.permute.xlu0 %3763
        %v3766 = vadd.f32 %v3734, %v3749
        %v3767 = vadd.f32 %v3735, %v3749
        %v3768 = vadd.f32 %v3736, %v3754
        %v3769 = vadd.f32 %v3737, %v3754
        %v3770 = vadd.f32 %v3738, %v3759
        %v3771 = vadd.f32 %v3739, %v3759
        %v3772 = vadd.f32 %v3740, %v3764
        %v3773 = vadd.f32 %v3741, %v3764
        %3774 = vst [vmem:[%s271] sm:$0xff] %v3766
        %3775 = vst [vmem:[%s271 + $0x8] sm:$0xff] %v3767
        %3776 = vst [vmem:[%s271 + $0x10] sm:$0xff] %v3768
        %3777 = vst [vmem:[%s271 + $0x18] sm:$0xff] %v3769
        %3778 = vst [vmem:[%s271 + $0x20] sm:$0xff] %v3770
        %3779 = vst [vmem:[%s271 + $0x28] sm:$0xff] %v3771
        %3780 = vst [vmem:[%s271 + $0x30] sm:$0xff] %v3772
        %3781 = vst [vmem:[%s271 + $0x38] sm:$0xff] %v3773
        %s3782 = sand.u32 %s181, 1
        %s3783 = scalar_lea.sflag [#allocation4], %s3782
        %s3784 = sand.u32 %s181, 1
        %s3785 = smul.addr %s3784, 64
        %s3786 = scalar_lea.vmem [#allocation3], %s3785
        // Predicated region
        $region49: #{tpu_custom_call.1} parent=47 // pred_check
          %p3787 = pneg %p191
        $region50: #{tpu_custom_call.1} parent=47 // pred_check_branch
          %3789 = sbr.rel (%p3787) target = $region52
        $region51: #{tpu_custom_call.1} parent=47 // pred_region
          %3791 = vsyncadd %s3783, 0
          %s3792 = smul.addr %s21, 8
          %s3793 = smul.addr %s3792, 8
          %s3794 = scalar_lea.hbm %s7, %s3793
          %s3795 = sshll.u32 %s3786, 4
          %s3796 = int_to_ptr.vmem [resolvable:$true] %s3795
          %s3797 = sshll.u32 %s3794, 4
          %s3798 = int_to_ptr.hbm [resolvable:$true] %s3797
          %3803 = dma.vmem_to_hbm [thread:$0]  %s3796, 1024, %s3798, %s3783, 256, 256, 16
        $region52: #{tpu_custom_call.1} parent=47 // pred_fallthru
          _
      $region48: #{tpu_custom_call.1} parent=5 // pred_fallthru
        _
      %p3804 = scmp.le.s32.totalorder 2, %s16
      // Predicated region
      $region53: #{tpu_custom_call.1} parent=5 // pred_check
        %p3805 = pneg %p3804
      $region54: #{tpu_custom_call.1} parent=5 // pred_check_branch
        %3807 = sbr.rel (%p3805) target = $region56
      $region55: #{tpu_custom_call.1} parent=5 // pred_region
        %s3808 = ssub.s32 %s16, 2
        // Predicated region
        $region57: #{tpu_custom_call.1} parent=55 // pred_check
          %p3809 = pneg %p197
        $region58: #{tpu_custom_call.1} parent=55 // pred_check_branch
          %3811 = sbr.rel (%p3809) target = $region60
        $region59: #{tpu_custom_call.1} parent=55 // pred_region
          %s3812 = sand.u32 %s182, 1
          %s3813 = scalar_lea.sflag [#allocation4], %s3812
          %s3814 = sand.u32 %s182, 1
          %s3815 = smul.addr %s3814, 64
          %s3816 = scalar_lea.vmem [#allocation3], %s3815
          %3818 = dma.done %s3813, 1024
        $region60: #{tpu_custom_call.1} parent=55 // pred_fallthru
          _
      $region56: #{tpu_custom_call.1} parent=5 // pred_fallthru
        _
    $region6: #{tpu_custom_call.1} parent=1 // loop_footer
      %s20 = sadd.s32 1, %s16
    $region7: #{tpu_custom_call.1} parent=1 // loop_footer_branch
      %15 = sbr.rel target = $region3
    $region8: #{tpu_custom_call.1} parent=1 // loop_exit
      _
    %3819 = vsyncpa [#allocation4], 1
    %s3820 = scalar_lea.sflag [#allocation4], 1
    %3821 = vsyncpa %s3820, 1

</llo_original>
